<compile_context>
chip_gen: v7x
topology: tpu7x:2x2x1
jax: 0.10.0
libtpu: 0.0.40
codegen_flags: <defaults>
</compile_context>

<pallas_src>
import functools

import jax
import jax.numpy as jnp
import numpy as np
from jax.experimental import pallas as pl
from jax.experimental.pallas import tpu as pltpu

EPS = 1e-5


# --------------------------------------------------------------------------- #
# Per-generation VMEM budget + row-tile selection
# --------------------------------------------------------------------------- #
def _vmem_limit_bytes():
    cap = 128 * 1024 * 1024
    try:
        cap = int(getattr(pltpu.get_tpu_info(), "vmem_capacity_bytes", cap))
    except Exception:
        pass
    # target roughly 2/3 of physical VMEM (v5e/v6e: ~85 MiB, v7x: ~42 MiB)
    return max(16 * 1024 * 1024, (2 * cap) // 3)


def _auto_row_tile(h, w, c_in, c4, vmem_bytes):
    # deconv stage dominates: per row (bytes) ~ inputs (bf16, dbuf) + 4-wide bf16
    # shifted views + 4 parity f32 results + bf16 slab out (dbuf), plus conv1 input.
    per_row = w * (c_in * 4 + c4 * (4 + 16 + 16 + 16))
    th = max(1, min(h, int(vmem_bytes // (3 * max(per_row, 1)))))
    while h % th:           # keep tiles equal-sized (stats counts stay uniform)
        th -= 1
    return th


# --------------------------------------------------------------------------- #
# Stage 1: conv1 (1x1) + partial BN1 stats
# --------------------------------------------------------------------------- #
def _conv1_stage(x, w1, th, vmem_bytes):
    n, h, w, c_in = x.shape
    c4 = w1.shape[1]
    t_tiles = h // th
    l = th * w

    def kernel(x_ref, w_ref, y_ref, s_ref):
        xt = x_ref[...].reshape(l, c_in)                       # bf16
        y = jnp.dot(xt, w_ref[...], preferred_element_type=jnp.float32)
        yb = y.astype(jnp.bfloat16)
        y_ref[...] = yb.reshape(1, th, w, c4)
        yf = yb.astype(jnp.float32)                            # stats on stored values
        s = jnp.sum(yf, axis=0, keepdims=True)                 # (1, C4)
        mu = s * (1.0 / l)
        d = yf - mu
        m2 = jnp.sum(d * d, axis=0, keepdims=True)             # mean-centered per tile
        s_ref[...] = jnp.concatenate([s, m2], axis=0).reshape(1, 1, 2, c4)

    return pl.pallas_call(
        kernel,
        grid=(n, t_tiles),
        in_specs=[
            pl.BlockSpec((1, th, w, c_in), lambda i, t: (i, t, 0, 0)),
            pl.BlockSpec((c_in, c4), lambda i, t: (0, 0)),
        ],
        out_specs=(
            pl.BlockSpec((1, th, w, c4), lambda i, t: (i, t, 0, 0)),
            pl.BlockSpec((1, 1, 2, c4), lambda i, t: (i, t, 0, 0)),
        ),
        out_shape=(
            jax.ShapeDtypeStruct((n, h, w, c4), jnp.bfloat16),
            jax.ShapeDtypeStruct((n, t_tiles, 2, c4), jnp.float32),
        ),
        compiler_params=pltpu.CompilerParams(
            dimension_semantics=("parallel", "parallel"),
            vmem_limit_bytes=vmem_bytes),
    )(x, w1)


# --------------------------------------------------------------------------- #
# Stage 2: BN1-apply + ReLU + ConvTranspose2d(3x3, s=2, p=1, op=1) + BN2 stats
#   4 exact matmuls over lane-stacked sources [y_d | y | y_r | y_dr]
#   (z00: K=C4, z01/z10: K=2C4, z11: K=4C4) -> no zero-block padded FLOPs.
# --------------------------------------------------------------------------- #
def _deconv_stage(y, scale1, shift1, w00, w01, w10, w11, th, vmem_bytes):
    n, h, w, c4 = y.shape
    t_tiles = h // th
    l = th * w

    def kernel(sc_ref, sh_ref, ym_ref, yh_ref,
               w00_ref, w01_ref, w10_ref, w11_ref, z_ref, s_ref):
        sc = sc_ref[...]
        sh = sh_ref[...]
        ymf = ym_ref[...].reshape(th, w, c4).astype(jnp.float32)
        yhf = yh_ref[...].reshape(1, w, c4).astype(jnp.float32)
        act_m = jnp.maximum(ymf * sc + sh, 0.0)
        act_h = jnp.maximum(yhf * sc + sh, 0.0)
        # zero the halo row when it lies past the bottom of the image (last tile)
        halo_valid = ((pl.program_id(1) + 1) * th < h).astype(jnp.float32)
        act = jnp.concatenate([act_m, act_h * halo_valid],
                              axis=0).astype(jnp.bfloat16)     # (th+1, W, C4) bf16
        # one zero column on the right (bf16) -> padded tile
        zcol = jnp.zeros((th + 1, 1, c4), jnp.bfloat16)
        ap = jnp.concatenate([act, zcol], axis=1)              # (th+1, W+1, C4)
        y_d = ap[1:, :w]
        y_c = ap[:th, :w]
        y_r = ap[:th, 1:]
        y_dr = ap[1:, 1:]
        src4 = jnp.concatenate([y_d, y_c, y_r, y_dr],
                               axis=-1).reshape(l, 4 * c4)     # bf16, lane-stacked
        z00 = jnp.dot(src4[:, c4:2 * c4], w00_ref[...], preferred_element_type=jnp.float32)
        z01 = jnp.dot(src4[:, c4:3 * c4], w01_ref[...], preferred_element_type=jnp.float32)
        z10 = jnp.dot(src4[:, :2 * c4], w10_ref[...], preferred_element_type=jnp.float32)
        z11 = jnp.dot(src4, w11_ref[...], preferred_element_type=jnp.float32)
        # BN2 partial stats pooled over the 4 parity planes
        s = jnp.sum(z00 + z01 + z10 + z11, axis=0, keepdims=True)
        mu = s * (1.0 / (4 * l))
        m2 = (jnp.sum((z00 - mu) ** 2, axis=0, keepdims=True)
              + jnp.sum((z01 - mu) ** 2, axis=0, keepdims=True)
              + jnp.sum((z10 - mu) ** 2, axis=0, keepdims=True)
              + jnp.sum((z11 - mu) ** 2, axis=0, keepdims=True))
        s_ref[...] = jnp.concatenate([s, m2], axis=0).reshape(1, 1, 2, c4)
        # bf16, lane-stacked output slab [z00|z01|z10|z11]
        z = jnp.concatenate([z00, z01, z10, z11], axis=-1).astype(jnp.bfloat16)
        z_ref[...] = z.reshape(1, th, w, 4 * c4)

    return pl.pallas_call(
        kernel,
        grid=(n, t_tiles),
        in_specs=[
            pl.BlockSpec((1, c4), lambda i, t: (0, 0)),
            pl.BlockSpec((1, c4), lambda i, t: (0, 0)),
            pl.BlockSpec((1, th, w, c4), lambda i, t: (i, t, 0, 0)),
            # one-row halo: first row of the next tile (clamped; masked in-kernel)
            pl.BlockSpec((1, 1, w, c4),
                         lambda i, t: (i, jnp.minimum((t + 1) * th, h - 1), 0, 0)),
            pl.BlockSpec((c4, c4), lambda i, t: (0, 0)),
            pl.BlockSpec((2 * c4, c4), lambda i, t: (0, 0)),
            pl.BlockSpec((2 * c4, c4), lambda i, t: (0, 0)),
            pl.BlockSpec((4 * c4, c4), lambda i, t: (0, 0)),
        ],
        out_specs=(
            pl.BlockSpec((1, th, w, 4 * c4), lambda i, t: (i, t, 0, 0)),
            pl.BlockSpec((1, 1, 2, c4), lambda i, t: (i, t, 0, 0)),
        ),
        out_shape=(
            jax.ShapeDtypeStruct((n, h, w, 4 * c4), jnp.bfloat16),
            jax.ShapeDtypeStruct((n, t_tiles, 2, c4), jnp.float32),
        ),
        compiler_params=pltpu.CompilerParams(
            dimension_semantics=("parallel", "parallel"),
            vmem_limit_bytes=vmem_bytes),
    )(scale1, shift1, y, y, w00, w01, w10, w11)


# --------------------------------------------------------------------------- #
# Stage 3: BN2-apply + ReLU + conv3 (1x1, weight reused per parity plane) + BN3 stats
# --------------------------------------------------------------------------- #
def _conv3_stage(zslab, scale2_4, shift2_4, w3, th, vmem_bytes):
    n, h, w, c44 = zslab.shape
    c4 = c44 // 4
    nf = w3.shape[1]
    t_tiles = h // th
    l = th * w

    def kernel(sc_ref, sh_ref, z_ref, w3_ref, u_ref, s_ref):
        z = z_ref[...].reshape(l, c44).astype(jnp.float32)
        act = jnp.maximum(z * sc_ref[...] + sh_ref[...], 0.0).astype(jnp.bfloat16)
        w3v = w3_ref[...]
        u00 = jnp.dot(act[:, :c4], w3v, preferred_element_type=jnp.float32)
        u01 = jnp.dot(act[:, c4:2 * c4], w3v, preferred_element_type=jnp.float32)
        u10 = jnp.dot(act[:, 2 * c4:3 * c4], w3v, preferred_element_type=jnp.float32)
        u11 = jnp.dot(act[:, 3 * c4:], w3v, preferred_element_type=jnp.float32)
        s = jnp.sum(u00 + u01 + u10 + u11, axis=0, keepdims=True)
        mu = s * (1.0 / (4 * l))
        m2 = (jnp.sum((u00 - mu) ** 2, axis=0, keepdims=True)
              + jnp.sum((u01 - mu) ** 2, axis=0, keepdims=True)
              + jnp.sum((u10 - mu) ** 2, axis=0, keepdims=True)
              + jnp.sum((u11 - mu) ** 2, axis=0, keepdims=True))
        s_ref[...] = jnp.concatenate([s, m2], axis=0).reshape(1, 1, 2, nf)
        u = jnp.concatenate([u00, u01, u10, u11], axis=-1).astype(jnp.bfloat16)
        u_ref[...] = u.reshape(1, th, w, 4 * nf)

    return pl.pallas_call(
        kernel,
        grid=(n, t_tiles),
        in_specs=[
            pl.BlockSpec((1, c44), lambda i, t: (0, 0)),
            pl.BlockSpec((1, c44), lambda i, t: (0, 0)),
            pl.BlockSpec((1, th, w, c44), lambda i, t: (i, t, 0, 0)),
            pl.BlockSpec((c4, nf), lambda i, t: (0, 0)),
        ],
        out_specs=(
            pl.BlockSpec((1, th, w, 4 * nf), lambda i, t: (i, t, 0, 0)),
            pl.BlockSpec((1, 1, 2, nf), lambda i, t: (i, t, 0, 0)),
        ),
        out_shape=(
            jax.ShapeDtypeStruct((n, h, w, 4 * nf), jnp.bfloat16),
            jax.ShapeDtypeStruct((n, t_tiles, 2, nf), jnp.float32),
        ),
        compiler_params=pltpu.CompilerParams(
            dimension_semantics=("parallel", "parallel"),
            vmem_limit_bytes=vmem_bytes),
    )(scale2_4, shift2_4, zslab, w3)


# --------------------------------------------------------------------------- #
# Stats combine (Chan's parallel variance) -> train-mode BN scale/shift
# --------------------------------------------------------------------------- #
def _scale_shift(partial, count_per_tile, gamma, beta):
    c = partial.shape[-1]
    s = partial.reshape(-1, 2, c)
    sums, m2s = s[:, 0, :], s[:, 1, :]
    g = s.shape[0]
    n_tot = float(count_per_tile * g)
    mean = jnp.sum(sums, axis=0) / n_tot
    tile_mean = sums / float(count_per_tile)
    m2 = jnp.sum(m2s, axis=0) + float(count_per_tile) * jnp.sum(
        (tile_mean - mean) ** 2, axis=0)
    var = m2 / n_tot                                # biased variance (train-mode BN)
    scale = gamma * jax.lax.rsqrt(var + EPS)        # (1, C)
    shift = beta - mean * scale
    return scale, shift


# --------------------------------------------------------------------------- #
# Weight preparation (hoisted; run ONCE per parameter set, not per forward)
# --------------------------------------------------------------------------- #
def prepare_params(p):
    wd = p["wd"]                                    # (3, 3, C4, C4): [kh,kw] -> (Cin, Cout)
    bf = lambda a: jnp.asarray(a, jnp.bfloat16)
    f32 = lambda a: jnp.asarray(a, jnp.float32)
    return dict(
        w1=bf(p["w1"]),
        # deconv parity matmuls; source lane order is [y_d | y | y_r | y_dr]
        w_z00=bf(wd[1, 1]),
        w_z01=bf(jnp.concatenate([wd[1, 2], wd[1, 0]], axis=0)),
        w_z10=bf(jnp.concatenate([wd[0, 1], wd[2, 1]], axis=0)),
        w_z11=bf(jnp.concatenate([wd[0, 2], wd[2, 2], wd[2, 0], wd[0, 0]], axis=0)),
        w3=bf(p["w3"]),
        g1=f32(p["g1"]), be1=f32(p["be1"]),
        g2=f32(p["g2"]), be2=f32(p["be2"]),
        g3=f32(p["g3"]), be3=f32(p["be3"]),
    )


# --------------------------------------------------------------------------- #
# Wrapper: NCHW in -> NCHW out
# --------------------------------------------------------------------------- #
@functools.partial(jax.jit, static_argnames=("row_tile",))
def decoder_block(x_nchw, prep, row_tile=None):
    n, c_in, h, w = x_nchw.shape
    c4 = prep["w1"].shape[1]
    nf = prep["w3"].shape[1]

    vmem_bytes = _vmem_limit_bytes()
    th = row_tile if row_tile is not None else _auto_row_tile(h, w, c_in, c4, vmem_bytes)
    th = max(1, min(th, h))
    while h % th:
        th -= 1

    # cast to bf16 BEFORE the layout change (halves the transpose's HBM traffic)
    x = jnp.transpose(x_nchw.astype(jnp.bfloat16), (0, 2, 3, 1))        # NHWC bf16

    y, s1 = _conv1_stage(x, prep["w1"], th, vmem_bytes)
    scale1, shift1 = _scale_shift(s1, th * w, prep["g1"], prep["be1"])

    z, s2 = _deconv_stage(y, scale1, shift1, prep["w_z00"], prep["w_z01"],
                          prep["w_z10"], prep["w_z11"], th, vmem_bytes)
    scale2, shift2 = _scale_shift(s2, 4 * th * w, prep["g2"], prep["be2"])

    u, s3 = _conv3_stage(z, jnp.tile(scale2, (1, 4)), jnp.tile(shift2, (1, 4)),
                         prep["w3"], th, vmem_bytes)
    scale3, shift3 = _scale_shift(s3, 4 * th * w, prep["g3"], prep["be3"])

    # Epilogue: BN3-apply + ReLU fused (in XLA) with the parity de-interleave
    # and the NHWC->NCHW layout change (single pass over the output).
    uf = u.astype(jnp.float32)
    out = jnp.maximum(uf * jnp.tile(scale3, (1, 4)) + jnp.tile(shift3, (1, 4)), 0.0)
    out = out.reshape(n, h, w, 2, 2, nf)                                 # (n,h,w,ph,pw,c)
    out = jnp.transpose(out, (0, 1, 3, 2, 4, 5)).reshape(n, 2 * h, 2 * w, nf)
    return jnp.transpose(out, (0, 3, 1, 2))


# --------------------------------------------------------------------------- #
# Parameter init + independent numpy reference
# --------------------------------------------------------------------------- #
def init_params(key, in_channels, n_filters):
    c4 = in_channels // 4
    ks = jax.random.split(key, 12)

    def nrm(k, shape, scale=0.1):
        return scale * jax.random.normal(k, shape, jnp.float32)

    return dict(
        w1=nrm(ks[0], (in_channels, c4)),       # conv1 weight (1x1) as [Cin, C4]
        b1=nrm(ks[1], (1, c4)),                 # biases kept for the reference only
        g1=1.0 + nrm(ks[2], (1, c4)),
        be1=nrm(ks[3], (1, c4)),
        wd=nrm(ks[4], (3, 3, c4, c4)),          # deconv weight as [kh, kw, Cin, Cout]
        bd=nrm(ks[5], (1, c4)),
        g2=1.0 + nrm(ks[6], (1, c4)),
        be2=nrm(ks[7], (1, c4)),
        w3=nrm(ks[8], (c4, n_filters)),         # conv3 weight (1x1) as [C4, nf]
        b3=nrm(ks[9], (1, n_filters)),
        g3=1.0 + nrm(ks[10], (1, n_filters)),
        be3=nrm(ks[11], (1, n_filters)),
    )


def _round_bf16(a):
    return np.asarray(jnp.asarray(np.asarray(a), jnp.bfloat16).astype(jnp.float32))


def reference_forward(x_nchw, p, round_mm=None, round_act=None, use_biases=True):
    """Numpy reference (direct transposed-conv scatter).

    round_mm models bf16 rounding of matmul operands, round_act models bf16
    rounding of activation storage between the chained kernels.  use_biases=True
    gives the exact PyTorch-module semantics (train-mode BN cancels the biases,
    which is why the kernel drops them).
    """
    rm = (lambda a: a) if round_mm is None else round_mm
    ra = (lambda a: a) if round_act is None else round_act
    x = np.transpose(np.asarray(x_nchw, np.float32), (0, 2, 3, 1))  # NHWC

    def bn(v, g, b):
        c = v.shape[-1]
        flat = v.reshape(-1, c)
        m = flat.mean(0)
        var = ((flat - m) ** 2).mean(0)
        return (v - m) / np.sqrt(var + EPS) * g + b

    b1 = p['b1'] if use_biases else 0.0
    bd = p['bd'] if use_biases else 0.0
    b3 = p['b3'] if use_biases else 0.0

    y = np.einsum('nhwc,cd->nhwd', rm(x), rm(p['w1'])) + b1
    y = ra(y)
    y = np.maximum(bn(y, p['g1'], p['be1']), 0.0)

    n, h, w, _ = y.shape
    wd = p['wd']
    yr = rm(y)
    z = np.zeros((n, 2 * h, 2 * w, wd.shape[-1]), np.float32)
    for kh in range(3):
        for kw in range(3):
            contrib = np.einsum('nhwc,cd->nhwd', yr, rm(wd[kh, kw]))
            ohs = 2 * np.arange(h) + kh - 1
            ows = 2 * np.arange(w) + kw - 1
            hm = (ohs >= 0) & (ohs < 2 * h)
            wm = (ows >= 0) & (ows < 2 * w)
            z[:, ohs[hm][:, None], ows[wm][None, :], :] += contrib[:, hm][:, :, wm]
    z = z + bd
    z = ra(z)
    z = np.maximum(bn(z, p['g2'], p['be2']), 0.0)

    u = np.einsum('nhwc,cd->nhwd', rm(z), rm(p['w3'])) + b3
    u = ra(u)
    u = np.maximum(bn(u, p['g3'], p['be3']), 0.0)
    return np.transpose(u, (0, 3, 1, 2))


if __name__ == "__main__":
    key = jax.random.PRNGKey(0)
    kx, kp = jax.random.split(key)

    N, Cin, H, W = 2, 32, 8, 8
    n_filters = 16

    x = jax.random.normal(kx, (N, Cin, H, W), jnp.float32)
    params = init_params(kp, Cin, n_filters)
    prep = prepare_params(params)          # hoisted: built once, reused per forward

    # multi-tile path (exercises the row grid + deconv halo row)
    out = jax.block_until_ready(decoder_block(x, prep, row_tile=4))
    assert out.shape == (N, n_filters, 2 * H, 2 * W)

    np_p = {k: np.asarray(v) for k, v in params.items()}
    x_np = np.asarray(x)

    # tight check: reference models the kernel's bf16 matmul operands / bf16
    # activation storage and the bias-drop (everything else exact)
    ref_tight = reference_forward(x_np, np_p, round_mm=_round_bf16,
                                  round_act=_round_bf16, use_biases=False)
    np.testing.assert_allclose(np.asarray(out), ref_tight, rtol=2e-2, atol=2e-2)

    # loose check: exact f32 PyTorch-module semantics (incl. biases)
    ref_f32 = reference_forward(x_np, np_p)
    np.testing.assert_allclose(np.asarray(out), ref_f32, rtol=1e-1, atol=1e-1)

    # auto-tile path (per-generation VMEM-derived row tile)
    out2 = jax.block_until_ready(decoder_block(x, prep))
    np.testing.assert_allclose(np.asarray(out2), ref_tight, rtol=2e-2, atol=2e-2)

    print("KERNEL_OK")
</pallas_src>

<mosaic_0001>
module attributes {stable_mosaic.version = 11 : i64} {
  func.func @kernel(%arg0: i32, %arg1: i32, %arg2: memref<1x4x8x32xbf16, #tpu.memory_space<vmem>>, %arg3: memref<32x8xbf16, #tpu.memory_space<vmem>>, %arg4: memref<1x4x8x8xbf16, #tpu.memory_space<vmem>>, %arg5: memref<1x1x2x8xf32, #tpu.memory_space<vmem>>) attributes {dimension_semantics = [#tpu.dimension_semantics<parallel>, #tpu.dimension_semantics<parallel>], iteration_bounds = array<i64: 2, 2>, scalar_prefetch = 0 : i64, scratch_operands = 0 : i64, tpu.core_type = #tpu.core_type<tc>, window_params = [{transform_indices = @transform_0, window_bounds = array<i64: 1, 4, 8, 32>}, {pipeline_mode = #tpu.pipeline_mode<synchronous>, transform_indices = @transform_1, window_bounds = array<i64: 32, 8>}, {transform_indices = @transform_2, window_bounds = array<i64: 1, 4, 8, 8>}, {transform_indices = @transform_3, window_bounds = array<i64: 1, 1, 2, 8>}]} {
    %c0 = arith.constant 0 : index
    %c0_0 = arith.constant 0 : index
    %c0_1 = arith.constant 0 : index
    %c0_2 = arith.constant 0 : index
    %0 = vector.load %arg2[%c0, %c0_0, %c0_1, %c0_2] : memref<1x4x8x32xbf16, #tpu.memory_space<vmem>>, vector<1x4x8x32xbf16>
    %1 = vector.shape_cast %0 : vector<1x4x8x32xbf16> to vector<32x32xbf16>
    %c0_3 = arith.constant 0 : index
    %c0_4 = arith.constant 0 : index
    %2 = vector.load %arg3[%c0_3, %c0_4] : memref<32x8xbf16, #tpu.memory_space<vmem>>, vector<32x8xbf16>
    %cst = arith.constant dense<0.000000e+00> : vector<32x8xf32>
    %3 = tpu.matmul %1, %2, %cst {dimension_numbers = #tpu.dot_dimension_numbers<[1], [0], [0], [1], [0, 0, 1, 1], [], []>} : vector<32x32xbf16>, vector<32x8xbf16>, vector<32x8xf32> -> vector<32x8xf32>
    %4 = arith.truncf %3 : vector<32x8xf32> to vector<32x8xbf16>
    %5 = vector.shape_cast %4 : vector<32x8xbf16> to vector<1x4x8x8xbf16>
    %c0_5 = arith.constant 0 : index
    %c0_6 = arith.constant 0 : index
    %c0_7 = arith.constant 0 : index
    %c0_8 = arith.constant 0 : index
    %6 = vector.load %arg4[%c0_5, %c0_6, %c0_7, %c0_8] : memref<1x4x8x8xbf16, #tpu.memory_space<vmem>>, vector<1x4x8x8xbf16>
    tpu.vector_store %arg4[%c0_5, %c0_6, %c0_7, %c0_8], %5 {strides = array<i32>} : memref<1x4x8x8xbf16, #tpu.memory_space<vmem>>, vector<1x4x8x8xbf16>,
    %7 = arith.extf %4 : vector<32x8xbf16> to vector<32x8xf32>
    %cst_9 = arith.constant dense<0.000000e+00> : vector<8xf32>
    %8 = vector.multi_reduction <add>, %7, %cst_9 [0] : vector<32x8xf32> to vector<8xf32>
    %9 = vector.shape_cast %8 : vector<8xf32> to vector<1x8xf32>
    %cst_10 = arith.constant 3.125000e-02 : f32
    %10 = vector.broadcast %cst_10 : f32 to vector<1x8xf32>
    %11 = arith.mulf %9, %10 : vector<1x8xf32>
    %12 = vector.broadcast %11 : vector<1x8xf32> to vector<32x8xf32>
    %13 = arith.subf %7, %12 : vector<32x8xf32>
    %14 = arith.mulf %13, %13 : vector<32x8xf32>
    %cst_11 = arith.constant dense<0.000000e+00> : vector<8xf32>
    %15 = vector.multi_reduction <add>, %14, %cst_11 [0] : vector<32x8xf32> to vector<8xf32>
    %16 = vector.shape_cast %15 : vector<8xf32> to vector<1x8xf32>
    %17 = tpu.concatenate %9, %16 in 0 : vector<1x8xf32>, vector<1x8xf32> -> vector<2x8xf32>
    %18 = vector.shape_cast %17 : vector<2x8xf32> to vector<1x1x2x8xf32>
    %c0_12 = arith.constant 0 : index
    %c0_13 = arith.constant 0 : index
    %c0_14 = arith.constant 0 : index
    %c0_15 = arith.constant 0 : index
    %19 = vector.load %arg5[%c0_12, %c0_13, %c0_14, %c0_15] : memref<1x1x2x8xf32, #tpu.memory_space<vmem>>, vector<1x1x2x8xf32>
    tpu.vector_store %arg5[%c0_12, %c0_13, %c0_14, %c0_15], %18 {strides = array<i32>} : memref<1x1x2x8xf32, #tpu.memory_space<vmem>>, vector<1x1x2x8xf32>,
    return
  }
  func.func @transform_0(%arg0: i32, %arg1: i32) -> (i32, i32, i32, i32) {
    %c0_i32 = arith.constant 0 : i32
    %c0_i32_0 = arith.constant 0 : i32
    %c0_i32_1 = arith.constant 0 : i32
    return %arg0, %arg1, %c0_i32, %c0_i32_0 : i32, i32, i32, i32
  }
  func.func @transform_1(%arg0: i32, %arg1: i32) -> (i32, i32) {
    %c0_i32 = arith.constant 0 : i32
    %c0_i32_0 = arith.constant 0 : i32
    %c0_i32_1 = arith.constant 0 : i32
    return %c0_i32, %c0_i32_0 : i32, i32
  }
  func.func @transform_2(%arg0: i32, %arg1: i32) -> (i32, i32, i32, i32) {
    %c0_i32 = arith.constant 0 : i32
    %c0_i32_0 = arith.constant 0 : i32
    %c0_i32_1 = arith.constant 0 : i32
    return %arg0, %arg1, %c0_i32, %c0_i32_0 : i32, i32, i32, i32
  }
  func.func @transform_3(%arg0: i32, %arg1: i32) -> (i32, i32, i32, i32) {
    %c0_i32 = arith.constant 0 : i32
    %c0_i32_0 = arith.constant 0 : i32
    %c0_i32_1 = arith.constant 0 : i32
    return %arg0, %arg1, %c0_i32, %c0_i32_0 : i32, i32, i32, i32
  }
}

module attributes {stable_mosaic.version = 11 : i64} {
  func.func @kernel(%arg0: i32, %arg1: i32, %arg2: memref<1x8xf32, #tpu.memory_space<vmem>>, %arg3: memref<1x8xf32, #tpu.memory_space<vmem>>, %arg4: memref<1x4x8x8xbf16, #tpu.memory_space<vmem>>, %arg5: memref<1x1x8x8xbf16, #tpu.memory_space<vmem>>, %arg6: memref<8x8xbf16, #tpu.memory_space<vmem>>, %arg7: memref<16x8xbf16, #tpu.memory_space<vmem>>, %arg8: memref<16x8xbf16, #tpu.memory_space<vmem>>, %arg9: memref<32x8xbf16, #tpu.memory_space<vmem>>, %arg10: memref<1x4x8x32xbf16, #tpu.memory_space<vmem>>, %arg11: memref<1x1x2x8xf32, #tpu.memory_space<vmem>>) attributes {dimension_semantics = [#tpu.dimension_semantics<parallel>, #tpu.dimension_semantics<parallel>], iteration_bounds = array<i64: 2, 2>, scalar_prefetch = 0 : i64, scratch_operands = 0 : i64, tpu.core_type = #tpu.core_type<tc>, window_params = [{pipeline_mode = #tpu.pipeline_mode<synchronous>, transform_indices = @transform_0, window_bounds = array<i64: 1, 8>}, {pipeline_mode = #tpu.pipeline_mode<synchronous>, transform_indices = @transform_1, window_bounds = array<i64: 1, 8>}, {transform_indices = @transform_2, window_bounds = array<i64: 1, 4, 8, 8>}, {transform_indices = @transform_3, window_bounds = array<i64: 1, 1, 8, 8>}, {pipeline_mode = #tpu.pipeline_mode<synchronous>, transform_indices = @transform_4, window_bounds = array<i64: 8, 8>}, {pipeline_mode = #tpu.pipeline_mode<synchronous>, transform_indices = @transform_5, window_bounds = array<i64: 16, 8>}, {pipeline_mode = #tpu.pipeline_mode<synchronous>, transform_indices = @transform_6, window_bounds = array<i64: 16, 8>}, {pipeline_mode = #tpu.pipeline_mode<synchronous>, transform_indices = @transform_7, window_bounds = array<i64: 32, 8>}, {transform_indices = @transform_8, window_bounds = array<i64: 1, 4, 8, 32>}, {transform_indices = @transform_9, window_bounds = array<i64: 1, 1, 2, 8>}]} {
    %c0 = arith.constant 0 : index
    %c0_0 = arith.constant 0 : index
    %0 = vector.load %arg2[%c0, %c0_0] : memref<1x8xf32, #tpu.memory_space<vmem>>, vector<1x8xf32>
    %c0_1 = arith.constant 0 : index
    %c0_2 = arith.constant 0 : index
    %1 = vector.load %arg3[%c0_1, %c0_2] : memref<1x8xf32, #tpu.memory_space<vmem>>, vector<1x8xf32>
    %c0_3 = arith.constant 0 : index
    %c0_4 = arith.constant 0 : index
    %c0_5 = arith.constant 0 : index
    %c0_6 = arith.constant 0 : index
    %2 = vector.load %arg4[%c0_3, %c0_4, %c0_5, %c0_6] : memref<1x4x8x8xbf16, #tpu.memory_space<vmem>>, vector<1x4x8x8xbf16>
    %3 = vector.shape_cast %2 : vector<1x4x8x8xbf16> to vector<4x8x8xbf16>
    %4 = arith.extf %3 : vector<4x8x8xbf16> to vector<4x8x8xf32>
    %c0_7 = arith.constant 0 : index
    %c0_8 = arith.constant 0 : index
    %c0_9 = arith.constant 0 : index
    %c0_10 = arith.constant 0 : index
    %5 = vector.load %arg5[%c0_7, %c0_8, %c0_9, %c0_10] : memref<1x1x8x8xbf16, #tpu.memory_space<vmem>>, vector<1x1x8x8xbf16>
    %6 = vector.shape_cast %5 : vector<1x1x8x8xbf16> to vector<1x8x8xbf16>
    %7 = arith.extf %6 : vector<1x8x8xbf16> to vector<1x8x8xf32>
    %8 = vector.shape_cast %0 : vector<1x8xf32> to vector<1x1x8xf32>
    %9 = vector.broadcast %8 : vector<1x1x8xf32> to vector<4x8x8xf32>
    %10 = arith.mulf %4, %9 : vector<4x8x8xf32>
    %11 = vector.shape_cast %1 : vector<1x8xf32> to vector<1x1x8xf32>
    %12 = vector.broadcast %11 : vector<1x1x8xf32> to vector<4x8x8xf32>
    %13 = arith.addf %10, %12 : vector<4x8x8xf32>
    %cst = arith.constant 0.000000e+00 : f32
    %14 = vector.broadcast %cst : f32 to vector<4x8x8xf32>
    %15 = arith.maximumf %13, %14 : vector<4x8x8xf32>
    %16 = vector.shape_cast %0 : vector<1x8xf32> to vector<1x1x8xf32>
    %17 = vector.broadcast %16 : vector<1x1x8xf32> to vector<1x8x8xf32>
    %18 = arith.mulf %7, %17 : vector<1x8x8xf32>
    %19 = vector.shape_cast %1 : vector<1x8xf32> to vector<1x1x8xf32>
    %20 = vector.broadcast %19 : vector<1x1x8xf32> to vector<1x8x8xf32>
    %21 = arith.addf %18, %20 : vector<1x8x8xf32>
    %cst_11 = arith.constant 0.000000e+00 : f32
    %22 = vector.broadcast %cst_11 : f32 to vector<1x8x8xf32>
    %23 = arith.maximumf %21, %22 : vector<1x8x8xf32>
    %c1_i32 = arith.constant 1 : i32
    %24 = arith.addi %arg1, %c1_i32 : i32
    %c4_i32 = arith.constant 4 : i32
    %25 = arith.muli %24, %c4_i32 : i32
    %c8_i32 = arith.constant 8 : i32
    %26 = arith.cmpi slt, %25, %c8_i32 : i32
    %27 = arith.extui %26 : i1 to i32
    %28 = arith.sitofp %27 : i32 to f32
    %29 = vector.broadcast %28 : f32 to vector<1x8x8xf32>
    %30 = arith.mulf %23, %29 : vector<1x8x8xf32>
    %31 = tpu.concatenate %15, %30 in 0 : vector<4x8x8xf32>, vector<1x8x8xf32> -> vector<5x8x8xf32>
    %32 = arith.truncf %31 : vector<5x8x8xf32> to vector<5x8x8xbf16>
    %cst_12 = arith.constant 0.000000e+00 : bf16
    %33 = vector.broadcast %cst_12 : bf16 to vector<5x1x8xbf16>
    %34 = tpu.concatenate %32, %33 in 1 : vector<5x8x8xbf16>, vector<5x1x8xbf16> -> vector<5x9x8xbf16>
    %35 = vector.extract_strided_slice %34 {offsets = [1, 0, 0], sizes = [4, 8, 8], strides = [1, 1, 1]} : vector<5x9x8xbf16> to vector<4x8x8xbf16>
    %36 = vector.extract_strided_slice %34 {offsets = [0, 0, 0], sizes = [4, 8, 8], strides = [1, 1, 1]} : vector<5x9x8xbf16> to vector<4x8x8xbf16>
    %37 = vector.extract_strided_slice %34 {offsets = [0, 1, 0], sizes = [4, 8, 8], strides = [1, 1, 1]} : vector<5x9x8xbf16> to vector<4x8x8xbf16>
    %38 = vector.extract_strided_slice %34 {offsets = [1, 1, 0], sizes = [4, 8, 8], strides = [1, 1, 1]} : vector<5x9x8xbf16> to vector<4x8x8xbf16>
    %39 = tpu.concatenate %35, %36, %37, %38 in 2 : vector<4x8x8xbf16>, vector<4x8x8xbf16>, vector<4x8x8xbf16>, vector<4x8x8xbf16> -> vector<4x8x32xbf16>
    %40 = vector.shape_cast %39 : vector<4x8x32xbf16> to vector<32x32xbf16>
    %41 = vector.extract_strided_slice %40 {offsets = [0, 8], sizes = [32, 8], strides = [1, 1]} : vector<32x32xbf16> to vector<32x8xbf16>
    %c0_13 = arith.constant 0 : index
    %c0_14 = arith.constant 0 : index
    %42 = vector.load %arg6[%c0_13, %c0_14] : memref<8x8xbf16, #tpu.memory_space<vmem>>, vector<8x8xbf16>
    %cst_15 = arith.constant dense<0.000000e+00> : vector<32x8xf32>
    %43 = tpu.matmul %41, %42, %cst_15 {dimension_numbers = #tpu.dot_dimension_numbers<[1], [0], [0], [1], [0, 0, 1, 1], [], []>} : vector<32x8xbf16>, vector<8x8xbf16>, vector<32x8xf32> -> vector<32x8xf32>
    %44 = vector.extract_strided_slice %40 {offsets = [0, 8], sizes = [32, 16], strides = [1, 1]} : vector<32x32xbf16> to vector<32x16xbf16>
    %c0_16 = arith.constant 0 : index
    %c0_17 = arith.constant 0 : index
    %45 = vector.load %arg7[%c0_16, %c0_17] : memref<16x8xbf16, #tpu.memory_space<vmem>>, vector<16x8xbf16>
    %cst_18 = arith.constant dense<0.000000e+00> : vector<32x8xf32>
    %46 = tpu.matmul %44, %45, %cst_18 {dimension_numbers = #tpu.dot_dimension_numbers<[1], [0], [0], [1], [0, 0, 1, 1], [], []>} : vector<32x16xbf16>, vector<16x8xbf16>, vector<32x8xf32> -> vector<32x8xf32>
    %47 = vector.extract_strided_slice %40 {offsets = [0, 0], sizes = [32, 16], strides = [1, 1]} : vector<32x32xbf16> to vector<32x16xbf16>
    %c0_19 = arith.constant 0 : index
    %c0_20 = arith.constant 0 : index
    %48 = vector.load %arg8[%c0_19, %c0_20] : memref<16x8xbf16, #tpu.memory_space<vmem>>, vector<16x8xbf16>
    %cst_21 = arith.constant dense<0.000000e+00> : vector<32x8xf32>
    %49 = tpu.matmul %47, %48, %cst_21 {dimension_numbers = #tpu.dot_dimension_numbers<[1], [0], [0], [1], [0, 0, 1, 1], [], []>} : vector<32x16xbf16>, vector<16x8xbf16>, vector<32x8xf32> -> vector<32x8xf32>
    %c0_22 = arith.constant 0 : index
    %c0_23 = arith.constant 0 : index
    %50 = vector.load %arg9[%c0_22, %c0_23] : memref<32x8xbf16, #tpu.memory_space<vmem>>, vector<32x8xbf16>
    %cst_24 = arith.constant dense<0.000000e+00> : vector<32x8xf32>
    %51 = tpu.matmul %40, %50, %cst_24 {dimension_numbers = #tpu.dot_dimension_numbers<[1], [0], [0], [1], [0, 0, 1, 1], [], []>} : vector<32x32xbf16>, vector<32x8xbf16>, vector<32x8xf32> -> vector<32x8xf32>
    %52 = arith.addf %43, %46 : vector<32x8xf32>
    %53 = arith.addf %52, %49 : vector<32x8xf32>
    %54 = arith.addf %53, %51 : vector<32x8xf32>
    %cst_25 = arith.constant dense<0.000000e+00> : vector<8xf32>
    %55 = vector.multi_reduction <add>, %54, %cst_25 [0] : vector<32x8xf32> to vector<8xf32>
    %56 = vector.shape_cast %55 : vector<8xf32> to vector<1x8xf32>
    %cst_26 = arith.constant 7.812500e-03 : f32
    %57 = vector.broadcast %cst_26 : f32 to vector<1x8xf32>
    %58 = arith.mulf %56, %57 : vector<1x8xf32>
    %59 = vector.broadcast %58 : vector<1x8xf32> to vector<32x8xf32>
    %60 = arith.subf %43, %59 : vector<32x8xf32>
    %61 = arith.mulf %60, %60 : vector<32x8xf32>
    %cst_27 = arith.constant dense<0.000000e+00> : vector<8xf32>
    %62 = vector.multi_reduction <add>, %61, %cst_27 [0] : vector<32x8xf32> to vector<8xf32>
    %63 = vector.shape_cast %62 : vector<8xf32> to vector<1x8xf32>
    %64 = vector.broadcast %58 : vector<1x8xf32> to vector<32x8xf32>
    %65 = arith.subf %46, %64 : vector<32x8xf32>
    %66 = arith.mulf %65, %65 : vector<32x8xf32>
    %cst_28 = arith.constant dense<0.000000e+00> : vector<8xf32>
    %67 = vector.multi_reduction <add>, %66, %cst_28 [0] : vector<32x8xf32> to vector<8xf32>
    %68 = vector.shape_cast %67 : vector<8xf32> to vector<1x8xf32>
    %69 = arith.addf %63, %68 : vector<1x8xf32>
    %70 = vector.broadcast %58 : vector<1x8xf32> to vector<32x8xf32>
    %71 = arith.subf %49, %70 : vector<32x8xf32>
    %72 = arith.mulf %71, %71 : vector<32x8xf32>
    %cst_29 = arith.constant dense<0.000000e+00> : vector<8xf32>
    %73 = vector.multi_reduction <add>, %72, %cst_29 [0] : vector<32x8xf32> to vector<8xf32>
    %74 = vector.shape_cast %73 : vector<8xf32> to vector<1x8xf32>
    %75 = arith.addf %69, %74 : vector<1x8xf32>
    %76 = vector.broadcast %58 : vector<1x8xf32> to vector<32x8xf32>
    %77 = arith.subf %51, %76 : vector<32x8xf32>
    %78 = arith.mulf %77, %77 : vector<32x8xf32>
    %cst_30 = arith.constant dense<0.000000e+00> : vector<8xf32>
    %79 = vector.multi_reduction <add>, %78, %cst_30 [0] : vector<32x8xf32> to vector<8xf32>
    %80 = vector.shape_cast %79 : vector<8xf32> to vector<1x8xf32>
    %81 = arith.addf %75, %80 : vector<1x8xf32>
    %82 = tpu.concatenate %56, %81 in 0 : vector<1x8xf32>, vector<1x8xf32> -> vector<2x8xf32>
    %83 = vector.shape_cast %82 : vector<2x8xf32> to vector<1x1x2x8xf32>
    %c0_31 = arith.constant 0 : index
    %c0_32 = arith.constant 0 : index
    %c0_33 = arith.constant 0 : index
    %c0_34 = arith.constant 0 : index
    %84 = vector.load %arg11[%c0_31, %c0_32, %c0_33, %c0_34] : memref<1x1x2x8xf32, #tpu.memory_space<vmem>>, vector<1x1x2x8xf32>
    tpu.vector_store %arg11[%c0_31, %c0_32, %c0_33, %c0_34], %83 {strides = array<i32>} : memref<1x1x2x8xf32, #tpu.memory_space<vmem>>, vector<1x1x2x8xf32>,
    %85 = tpu.concatenate %43, %46, %49, %51 in 1 : vector<32x8xf32>, vector<32x8xf32>, vector<32x8xf32>, vector<32x8xf32> -> vector<32x32xf32>
    %86 = arith.truncf %85 : vector<32x32xf32> to vector<32x32xbf16>
    %87 = vector.shape_cast %86 : vector<32x32xbf16> to vector<1x4x8x32xbf16>
    %c0_35 = arith.constant 0 : index
    %c0_36 = arith.constant 0 : index
    %c0_37 = arith.constant 0 : index
    %c0_38 = arith.constant 0 : index
    %88 = vector.load %arg10[%c0_35, %c0_36, %c0_37, %c0_38] : memref<1x4x8x32xbf16, #tpu.memory_space<vmem>>, vector<1x4x8x32xbf16>
    tpu.vector_store %arg10[%c0_35, %c0_36, %c0_37, %c0_38], %87 {strides = array<i32>} : memref<1x4x8x32xbf16, #tpu.memory_space<vmem>>, vector<1x4x8x32xbf16>,
    return
  }
  func.func @transform_0(%arg0: i32, %arg1: i32) -> (i32, i32) {
    %c0_i32 = arith.constant 0 : i32
    %c0_i32_0 = arith.constant 0 : i32
    %c0_i32_1 = arith.constant 0 : i32
    return %c0_i32, %c0_i32_0 : i32, i32
  }
  func.func @transform_1(%arg0: i32, %arg1: i32) -> (i32, i32) {
    %c0_i32 = arith.constant 0 : i32
    %c0_i32_0 = arith.constant 0 : i32
    %c0_i32_1 = arith.constant 0 : i32
    return %c0_i32, %c0_i32_0 : i32, i32
  }
  func.func @transform_2(%arg0: i32, %arg1: i32) -> (i32, i32, i32, i32) {
    %c0_i32 = arith.constant 0 : i32
    %c0_i32_0 = arith.constant 0 : i32
    %c0_i32_1 = arith.constant 0 : i32
    return %arg0, %arg1, %c0_i32, %c0_i32_0 : i32, i32, i32, i32
  }
  func.func @transform_3(%arg0: i32, %arg1: i32) -> (i32, i32, i32, i32) {
    %c1_i32 = arith.constant 1 : i32
    %0 = arith.addi %arg1, %c1_i32 : i32
    %c4_i32 = arith.constant 4 : i32
    %1 = arith.muli %0, %c4_i32 : i32
    %c7_i32 = arith.constant 7 : i32
    %2 = arith.minsi %1, %c7_i32 : i32
    %c0_i32 = arith.constant 0 : i32
    %c0_i32_0 = arith.constant 0 : i32
    %c0_i32_1 = arith.constant 0 : i32
    return %arg0, %2, %c0_i32, %c0_i32_0 : i32, i32, i32, i32
  }
  func.func @transform_4(%arg0: i32, %arg1: i32) -> (i32, i32) {
    %c0_i32 = arith.constant 0 : i32
    %c0_i32_0 = arith.constant 0 : i32
    %c0_i32_1 = arith.constant 0 : i32
    return %c0_i32, %c0_i32_0 : i32, i32
  }
  func.func @transform_5(%arg0: i32, %arg1: i32) -> (i32, i32) {
    %c0_i32 = arith.constant 0 : i32
    %c0_i32_0 = arith.constant 0 : i32
    %c0_i32_1 = arith.constant 0 : i32
    return %c0_i32, %c0_i32_0 : i32, i32
  }
  func.func @transform_6(%arg0: i32, %arg1: i32) -> (i32, i32) {
    %c0_i32 = arith.constant 0 : i32
    %c0_i32_0 = arith.constant 0 : i32
    %c0_i32_1 = arith.constant 0 : i32
    return %c0_i32, %c0_i32_0 : i32, i32
  }
  func.func @transform_7(%arg0: i32, %arg1: i32) -> (i32, i32) {
    %c0_i32 = arith.constant 0 : i32
    %c0_i32_0 = arith.constant 0 : i32
    %c0_i32_1 = arith.constant 0 : i32
    return %c0_i32, %c0_i32_0 : i32, i32
  }
  func.func @transform_8(%arg0: i32, %arg1: i32) -> (i32, i32, i32, i32) {
    %c0_i32 = arith.constant 0 : i32
    %c0_i32_0 = arith.constant 0 : i32
    %c0_i32_1 = arith.constant 0 : i32
    return %arg0, %arg1, %c0_i32, %c0_i32_0 : i32, i32, i32, i32
  }
  func.func @transform_9(%arg0: i32, %arg1: i32) -> (i32, i32, i32, i32) {
    %c0_i32 = arith.constant 0 : i32
    %c0_i32_0 = arith.constant 0 : i32
    %c0_i32_1 = arith.constant 0 : i32
    return %arg0, %arg1, %c0_i32, %c0_i32_0 : i32, i32, i32, i32
  }
}

module attributes {stable_mosaic.version = 11 : i64} {
  func.func @kernel(%arg0: i32, %arg1: i32, %arg2: memref<1x32xf32, #tpu.memory_space<vmem>>, %arg3: memref<1x32xf32, #tpu.memory_space<vmem>>, %arg4: memref<1x4x8x32xbf16, #tpu.memory_space<vmem>>, %arg5: memref<8x16xbf16, #tpu.memory_space<vmem>>, %arg6: memref<1x4x8x64xbf16, #tpu.memory_space<vmem>>, %arg7: memref<1x1x2x16xf32, #tpu.memory_space<vmem>>) attributes {dimension_semantics = [#tpu.dimension_semantics<parallel>, #tpu.dimension_semantics<parallel>], iteration_bounds = array<i64: 2, 2>, scalar_prefetch = 0 : i64, scratch_operands = 0 : i64, tpu.core_type = #tpu.core_type<tc>, window_params = [{pipeline_mode = #tpu.pipeline_mode<synchronous>, transform_indices = @transform_0, window_bounds = array<i64: 1, 32>}, {pipeline_mode = #tpu.pipeline_mode<synchronous>, transform_indices = @transform_1, window_bounds = array<i64: 1, 32>}, {transform_indices = @transform_2, window_bounds = array<i64: 1, 4, 8, 32>}, {pipeline_mode = #tpu.pipeline_mode<synchronous>, transform_indices = @transform_3, window_bounds = array<i64: 8, 16>}, {transform_indices = @transform_4, window_bounds = array<i64: 1, 4, 8, 64>}, {transform_indices = @transform_5, window_bounds = array<i64: 1, 1, 2, 16>}]} {
    %c0 = arith.constant 0 : index
    %c0_0 = arith.constant 0 : index
    %c0_1 = arith.constant 0 : index
    %c0_2 = arith.constant 0 : index
    %0 = vector.load %arg4[%c0, %c0_0, %c0_1, %c0_2] : memref<1x4x8x32xbf16, #tpu.memory_space<vmem>>, vector<1x4x8x32xbf16>
    %1 = vector.shape_cast %0 : vector<1x4x8x32xbf16> to vector<32x32xbf16>
    %2 = arith.extf %1 : vector<32x32xbf16> to vector<32x32xf32>
    %c0_3 = arith.constant 0 : index
    %c0_4 = arith.constant 0 : index
    %3 = vector.load %arg2[%c0_3, %c0_4] : memref<1x32xf32, #tpu.memory_space<vmem>>, vector<1x32xf32>
    %4 = vector.broadcast %3 : vector<1x32xf32> to vector<32x32xf32>
    %5 = arith.mulf %2, %4 : vector<32x32xf32>
    %c0_5 = arith.constant 0 : index
    %c0_6 = arith.constant 0 : index
    %6 = vector.load %arg3[%c0_5, %c0_6] : memref<1x32xf32, #tpu.memory_space<vmem>>, vector<1x32xf32>
    %7 = vector.broadcast %6 : vector<1x32xf32> to vector<32x32xf32>
    %8 = arith.addf %5, %7 : vector<32x32xf32>
    %cst = arith.constant 0.000000e+00 : f32
    %9 = vector.broadcast %cst : f32 to vector<32x32xf32>
    %10 = arith.maximumf %8, %9 : vector<32x32xf32>
    %11 = arith.truncf %10 : vector<32x32xf32> to vector<32x32xbf16>
    %c0_7 = arith.constant 0 : index
    %c0_8 = arith.constant 0 : index
    %12 = vector.load %arg5[%c0_7, %c0_8] : memref<8x16xbf16, #tpu.memory_space<vmem>>, vector<8x16xbf16>
    %13 = vector.extract_strided_slice %11 {offsets = [0, 0], sizes = [32, 8], strides = [1, 1]} : vector<32x32xbf16> to vector<32x8xbf16>
    %cst_9 = arith.constant dense<0.000000e+00> : vector<32x16xf32>
    %14 = tpu.matmul %13, %12, %cst_9 {dimension_numbers = #tpu.dot_dimension_numbers<[1], [0], [0], [1], [0, 0, 1, 1], [], []>} : vector<32x8xbf16>, vector<8x16xbf16>, vector<32x16xf32> -> vector<32x16xf32>
    %15 = vector.extract_strided_slice %11 {offsets = [0, 8], sizes = [32, 8], strides = [1, 1]} : vector<32x32xbf16> to vector<32x8xbf16>
    %cst_10 = arith.constant dense<0.000000e+00> : vector<32x16xf32>
    %16 = tpu.matmul %15, %12, %cst_10 {dimension_numbers = #tpu.dot_dimension_numbers<[1], [0], [0], [1], [0, 0, 1, 1], [], []>} : vector<32x8xbf16>, vector<8x16xbf16>, vector<32x16xf32> -> vector<32x16xf32>
    %17 = vector.extract_strided_slice %11 {offsets = [0, 16], sizes = [32, 8], strides = [1, 1]} : vector<32x32xbf16> to vector<32x8xbf16>
    %cst_11 = arith.constant dense<0.000000e+00> : vector<32x16xf32>
    %18 = tpu.matmul %17, %12, %cst_11 {dimension_numbers = #tpu.dot_dimension_numbers<[1], [0], [0], [1], [0, 0, 1, 1], [], []>} : vector<32x8xbf16>, vector<8x16xbf16>, vector<32x16xf32> -> vector<32x16xf32>
    %19 = vector.extract_strided_slice %11 {offsets = [0, 24], sizes = [32, 8], strides = [1, 1]} : vector<32x32xbf16> to vector<32x8xbf16>
    %cst_12 = arith.constant dense<0.000000e+00> : vector<32x16xf32>
    %20 = tpu.matmul %19, %12, %cst_12 {dimension_numbers = #tpu.dot_dimension_numbers<[1], [0], [0], [1], [0, 0, 1, 1], [], []>} : vector<32x8xbf16>, vector<8x16xbf16>, vector<32x16xf32> -> vector<32x16xf32>
    %21 = arith.addf %14, %16 : vector<32x16xf32>
    %22 = arith.addf %21, %18 : vector<32x16xf32>
    %23 = arith.addf %22, %20 : vector<32x16xf32>
    %cst_13 = arith.constant dense<0.000000e+00> : vector<16xf32>
    %24 = vector.multi_reduction <add>, %23, %cst_13 [0] : vector<32x16xf32> to vector<16xf32>
    %25 = vector.shape_cast %24 : vector<16xf32> to vector<1x16xf32>
    %cst_14 = arith.constant 7.812500e-03 : f32
    %26 = vector.broadcast %cst_14 : f32 to vector<1x16xf32>
    %27 = arith.mulf %25, %26 : vector<1x16xf32>
    %28 = vector.broadcast %27 : vector<1x16xf32> to vector<32x16xf32>
    %29 = arith.subf %14, %28 : vector<32x16xf32>
    %30 = arith.mulf %29, %29 : vector<32x16xf32>
    %cst_15 = arith.constant dense<0.000000e+00> : vector<16xf32>
    %31 = vector.multi_reduction <add>, %30, %cst_15 [0] : vector<32x16xf32> to vector<16xf32>
    %32 = vector.shape_cast %31 : vector<16xf32> to vector<1x16xf32>
    %33 = vector.broadcast %27 : vector<1x16xf32> to vector<32x16xf32>
    %34 = arith.subf %16, %33 : vector<32x16xf32>
    %35 = arith.mulf %34, %34 : vector<32x16xf32>
    %cst_16 = arith.constant dense<0.000000e+00> : vector<16xf32>
    %36 = vector.multi_reduction <add>, %35, %cst_16 [0] : vector<32x16xf32> to vector<16xf32>
    %37 = vector.shape_cast %36 : vector<16xf32> to vector<1x16xf32>
    %38 = arith.addf %32, %37 : vector<1x16xf32>
    %39 = vector.broadcast %27 : vector<1x16xf32> to vector<32x16xf32>
    %40 = arith.subf %18, %39 : vector<32x16xf32>
    %41 = arith.mulf %40, %40 : vector<32x16xf32>
    %cst_17 = arith.constant dense<0.000000e+00> : vector<16xf32>
    %42 = vector.multi_reduction <add>, %41, %cst_17 [0] : vector<32x16xf32> to vector<16xf32>
    %43 = vector.shape_cast %42 : vector<16xf32> to vector<1x16xf32>
    %44 = arith.addf %38, %43 : vector<1x16xf32>
    %45 = vector.broadcast %27 : vector<1x16xf32> to vector<32x16xf32>
    %46 = arith.subf %20, %45 : vector<32x16xf32>
    %47 = arith.mulf %46, %46 : vector<32x16xf32>
    %cst_18 = arith.constant dense<0.000000e+00> : vector<16xf32>
    %48 = vector.multi_reduction <add>, %47, %cst_18 [0] : vector<32x16xf32> to vector<16xf32>
    %49 = vector.shape_cast %48 : vector<16xf32> to vector<1x16xf32>
    %50 = arith.addf %44, %49 : vector<1x16xf32>
    %51 = tpu.concatenate %25, %50 in 0 : vector<1x16xf32>, vector<1x16xf32> -> vector<2x16xf32>
    %52 = vector.shape_cast %51 : vector<2x16xf32> to vector<1x1x2x16xf32>
    %c0_19 = arith.constant 0 : index
    %c0_20 = arith.constant 0 : index
    %c0_21 = arith.constant 0 : index
    %c0_22 = arith.constant 0 : index
    %53 = vector.load %arg7[%c0_19, %c0_20, %c0_21, %c0_22] : memref<1x1x2x16xf32, #tpu.memory_space<vmem>>, vector<1x1x2x16xf32>
    tpu.vector_store %arg7[%c0_19, %c0_20, %c0_21, %c0_22], %52 {strides = array<i32>} : memref<1x1x2x16xf32, #tpu.memory_space<vmem>>, vector<1x1x2x16xf32>,
    %54 = tpu.concatenate %14, %16, %18, %20 in 1 : vector<32x16xf32>, vector<32x16xf32>, vector<32x16xf32>, vector<32x16xf32> -> vector<32x64xf32>
    %55 = arith.truncf %54 : vector<32x64xf32> to vector<32x64xbf16>
    %56 = vector.shape_cast %55 : vector<32x64xbf16> to vector<1x4x8x64xbf16>
    %c0_23 = arith.constant 0 : index
    %c0_24 = arith.constant 0 : index
    %c0_25 = arith.constant 0 : index
    %c0_26 = arith.constant 0 : index
    %57 = vector.load %arg6[%c0_23, %c0_24, %c0_25, %c0_26] : memref<1x4x8x64xbf16, #tpu.memory_space<vmem>>, vector<1x4x8x64xbf16>
    tpu.vector_store %arg6[%c0_23, %c0_24, %c0_25, %c0_26], %56 {strides = array<i32>} : memref<1x4x8x64xbf16, #tpu.memory_space<vmem>>, vector<1x4x8x64xbf16>,
    return
  }
  func.func @transform_0(%arg0: i32, %arg1: i32) -> (i32, i32) {
    %c0_i32 = arith.constant 0 : i32
    %c0_i32_0 = arith.constant 0 : i32
    %c0_i32_1 = arith.constant 0 : i32
    return %c0_i32, %c0_i32_0 : i32, i32
  }
  func.func @transform_1(%arg0: i32, %arg1: i32) -> (i32, i32) {
    %c0_i32 = arith.constant 0 : i32
    %c0_i32_0 = arith.constant 0 : i32
    %c0_i32_1 = arith.constant 0 : i32
    return %c0_i32, %c0_i32_0 : i32, i32
  }
  func.func @transform_2(%arg0: i32, %arg1: i32) -> (i32, i32, i32, i32) {
    %c0_i32 = arith.constant 0 : i32
    %c0_i32_0 = arith.constant 0 : i32
    %c0_i32_1 = arith.constant 0 : i32
    return %arg0, %arg1, %c0_i32, %c0_i32_0 : i32, i32, i32, i32
  }
  func.func @transform_3(%arg0: i32, %arg1: i32) -> (i32, i32) {
    %c0_i32 = arith.constant 0 : i32
    %c0_i32_0 = arith.constant 0 : i32
    %c0_i32_1 = arith.constant 0 : i32
    return %c0_i32, %c0_i32_0 : i32, i32
  }
  func.func @transform_4(%arg0: i32, %arg1: i32) -> (i32, i32, i32, i32) {
    %c0_i32 = arith.constant 0 : i32
    %c0_i32_0 = arith.constant 0 : i32
    %c0_i32_1 = arith.constant 0 : i32
    return %arg0, %arg1, %c0_i32, %c0_i32_0 : i32, i32, i32, i32
  }
  func.func @transform_5(%arg0: i32, %arg1: i32) -> (i32, i32, i32, i32) {
    %c0_i32 = arith.constant 0 : i32
    %c0_i32_0 = arith.constant 0 : i32
    %c0_i32_1 = arith.constant 0 : i32
    return %arg0, %arg1, %c0_i32, %c0_i32_0 : i32, i32, i32, i32
  }
}

</mosaic_0001>

<llo_original>
// kernel: decoder_block.3
$region0: #{decoder_block.3}
  #allocation0 [shape = 'u32[]', space=smem, size = 0x4, offset = 0x4, fixed_abs, tag = 'smem constant byte address 0x4 - core index']
  #allocation1 [shape = 'u32[144,128]{1,0:T(1,128)}', space=vmem, size = 0x12000, scoped, tag = 'internal scratch']
  %s0 = inlined_call_operand.hbm [shape: bf16[2,8,8,32], index: 0, kind: input, shape index: {}]
  %s1 = inlined_call_operand.hbm [shape: bf16[32,8], index: 1, kind: input, shape index: {}]
  %s2 = inlined_call_operand.hbm [shape: bf16[2,8,8,8], index: 2, kind: output, shape index: {0}]
  %s3 = inlined_call_operand.hbm [shape: f32[2,2,2,8], index: 3, kind: output, shape index: {1}]
  %4 = xla_tuple %s2, %s3
  %s5 = sld [smem:[#allocation0]]
  $region57: #{decoder_block.3} parent=0
    _
  %s7 = ssub.s32 1, %s5
  %s8 = scalar_select 0, %s7, %s5
  $region1: #{decoder_block.3} parent=0
    #allocation2 [shape = 'u8[16384]{0}', space=vmem, size = 0x4000, scoped, tag = 'input window, operand 0']
    #allocation3 [shape = 's32[2]{0}', space=sflag, size = 0x8, scoped, tag = 'scoped memory for decoder_block.3']
    #allocation4 [shape = 's32[2]{0}', space=sflag, size = 0x8, scoped, tag = 'scoped memory for decoder_block.3']
    #allocation5 [shape = 'u8[8192]{0}', space=vmem, size = 0x2000, scoped, tag = 'input window, operand 1, single buffered']
    #allocation6 [shape = 's32[1]{0}', space=sflag, size = 0x4, scoped, tag = 'scoped memory for decoder_block.3']
    #allocation7 [shape = 'u8[16384]{0}', space=vmem, size = 0x4000, scoped, tag = 'output window, operand 0']
    #allocation8 [shape = 'u8[2048]{0}', space=vmem, size = 0x800, scoped, tag = 'output window, operand 1']
    #allocation9 [shape = 's32[2]{0}', space=sflag, size = 0x8, scoped, tag = 'scoped memory for decoder_block.3']
    %9 = vsyncpa [#allocation3], 0
    %s10 = scalar_lea.sflag [#allocation3], 1
    %11 = vsyncpa %s10, 0
    %12 = vsyncpa [#allocation6], 0
    %13 = vsyncpa [#allocation4], 0
    %s14 = scalar_lea.sflag [#allocation4], 1
    %15 = vsyncpa %s14, 0
    %16 = vsyncpa [#allocation9], 0
    %s17 = scalar_lea.sflag [#allocation9], 1
    %18 = vsyncpa %s17, 0
    loop: start=0, step=1, limit=6
    $region2: #{decoder_block.3} parent=1 // loop_pre_header
      _
    $region3: #{decoder_block.3} parent=1 // loop_header
      %s20 = sphi 0, %s24
      %p21 = scmp.ge.s32.totalorder %s20, 6
      %s27 = sphi 0, %s39
      %s28 = sphi 0, %s35
      %s29 = sphi 0, %s27
      %s30 = sphi 0, %s28
      %s31 = sphi 0, %s29
      %s32 = sphi 0, %s30
      %s44 = sphi 0, %s46
      %s47 = sphi 0, %s44
      %s48 = sphi 0, %s47
      %s64 = sphi 0, %s48
      %s68 = sphi 0, %s68
      %s70 = sphi 0, %s68
      %s71 = sphi 0, %s70
      %s85 = sphi 0, %s71
      %s93 = sphi 0, %s95
      %s96 = sphi 0, %s93
      %s97 = sphi 0, %s96
      %s113 = sphi 0, %s97
      %s121 = sphi 0, %s123
      %s124 = sphi 0, %s121
      %s125 = sphi 0, %s124
      %s141 = sphi 0, %s125
    $region4: #{decoder_block.3} parent=1 // loop_header_branch
      %23 = sbr.rel (%p21) target = $region8
    $region5: #{decoder_block.3} parent=1 // loop_body
      %s25 = ssub.s32 %s20, 1
      %s26 = ssub.s32 %s20, 2
      %s33 = sadd.s32 1, %s28
      %p34 = scmp.ge.s32.totalorder %s33, 2
      %s35 = scalar_select %p34, 0, %s33
      %s36 = sadd.s32 1, %s27
      %s37 = scalar_select %p34, %s36, %s27
      %p38 = scmp.ge.s32.totalorder %s37, 2
      %s39 = scalar_select %p38, 0, %s37
      %s40 = ssub.s32 %s27, %s39
      %s41 = ssub.s32 %s28, %s35
      %s42 = sor.u32 %s40, %s41
      %p43 = scmp.eq.s32.totalorder %s42, 0
      %s45 = sadd.s32 %s44, 1
      %s46 = scalar_select %p43, %s44, %s45
      %p49 = pneg %p43
      %p50 = scmp.eq.s32.totalorder %s20, 3
      %p51 = por %p49, %p50
      %p52 = scmp.ne.s32.totalorder %s44, %s47
      %p53 = scmp.eq.s32.totalorder %s20, 0
      %p54 = por %p52, %p53
      %p55 = scmp.ne.s32.totalorder %s44, %s47
      %p56 = scmp.eq.s32.totalorder %s25, 3
      %p57 = por %p55, %p56
      %p58 = scmp.ne.s32.totalorder %s47, %s48
      %p59 = scmp.eq.s32.totalorder %s25, 0
      %p60 = por %p58, %p59
      %p61 = scmp.ne.s32.totalorder %s47, %s48
      %p62 = scmp.eq.s32.totalorder %s26, 3
      %p63 = por %p61, %p62
      %p65 = scmp.ne.s32.totalorder %s48, %s64
      %p66 = scmp.eq.s32.totalorder %s26, 0
      %p67 = por %p65, %p66
      %s69 = sadd.s32 %s68, 1
      %p72 = scmp.eq.s32.totalorder %s20, 3
      %p73 = scmp.ne.s32.totalorder %s68, %s70
      %p74 = scmp.eq.s32.totalorder %s20, 0
      %p75 = por %p73, %p74
      %p76 = scmp.ne.s32.totalorder %s68, %s70
      %p77 = scmp.eq.s32.totalorder %s25, 3
      %p78 = por %p76, %p77
      %p79 = scmp.ne.s32.totalorder %s70, %s71
      %p80 = scmp.eq.s32.totalorder %s25, 0
      %p81 = por %p79, %p80
      %p82 = scmp.ne.s32.totalorder %s70, %s71
      %p83 = scmp.eq.s32.totalorder %s26, 3
      %p84 = por %p82, %p83
      %p86 = scmp.ne.s32.totalorder %s71, %s85
      %p87 = scmp.eq.s32.totalorder %s26, 0
      %p88 = por %p86, %p87
      %s89 = ssub.s32 %s27, %s39
      %s90 = ssub.s32 %s28, %s35
      %s91 = sor.u32 %s89, %s90
      %p92 = scmp.eq.s32.totalorder %s91, 0
      %s94 = sadd.s32 %s93, 1
      %s95 = scalar_select %p92, %s93, %s94
      %p98 = pneg %p92
      %p99 = scmp.eq.s32.totalorder %s20, 3
      %p100 = por %p98, %p99
      %p101 = scmp.ne.s32.totalorder %s93, %s96
      %p102 = scmp.eq.s32.totalorder %s20, 0
      %p103 = por %p101, %p102
      %p104 = scmp.ne.s32.totalorder %s93, %s96
      %p105 = scmp.eq.s32.totalorder %s25, 3
      %p106 = por %p104, %p105
      %p107 = scmp.ne.s32.totalorder %s96, %s97
      %p108 = scmp.eq.s32.totalorder %s25, 0
      %p109 = por %p107, %p108
      %p110 = scmp.ne.s32.totalorder %s96, %s97
      %p111 = scmp.eq.s32.totalorder %s26, 3
      %p112 = por %p110, %p111
      %p114 = scmp.ne.s32.totalorder %s97, %s113
      %p115 = scmp.eq.s32.totalorder %s26, 0
      %p116 = por %p114, %p115
      %s117 = ssub.s32 %s27, %s39
      %s118 = ssub.s32 %s28, %s35
      %s119 = sor.u32 %s117, %s118
      %p120 = scmp.eq.s32.totalorder %s119, 0
      %s122 = sadd.s32 %s121, 1
      %s123 = scalar_select %p120, %s121, %s122
      %p126 = pneg %p120
      %p127 = scmp.eq.s32.totalorder %s20, 3
      %p128 = por %p126, %p127
      %p129 = scmp.ne.s32.totalorder %s121, %s124
      %p130 = scmp.eq.s32.totalorder %s20, 0
      %p131 = por %p129, %p130
      %p132 = scmp.ne.s32.totalorder %s121, %s124
      %p133 = scmp.eq.s32.totalorder %s25, 3
      %p134 = por %p132, %p133
      %p135 = scmp.ne.s32.totalorder %s124, %s125
      %p136 = scmp.eq.s32.totalorder %s25, 0
      %p137 = por %p135, %p136
      %p138 = scmp.ne.s32.totalorder %s124, %s125
      %p139 = scmp.eq.s32.totalorder %s26, 3
      %p140 = por %p138, %p139
      %p142 = scmp.ne.s32.totalorder %s125, %s141
      %p143 = scmp.eq.s32.totalorder %s26, 0
      %p144 = por %p142, %p143
      %p145 = scmp.le.s32.totalorder 1, %s20
      %p146 = scmp.lt.s32.totalorder %s20, 5
      %p147 = pnand %p145, %p146
      %p148 = pneg %p147
      // Predicated region
      $region9: #{decoder_block.3} parent=5 // pred_check
        _
      $region10: #{decoder_block.3} parent=5 // pred_check_branch
        %150 = sbr.rel (%p147) target = $region12
      $region11: #{decoder_block.3} parent=5 // pred_region
        %s151 = ssub.s32 %s20, 1
        // Predicated region
        $region13: #{decoder_block.3} parent=11 // pred_check
          %p152 = pneg %p81
        $region14: #{decoder_block.3} parent=11 // pred_check_branch
          %154 = sbr.rel (%p152) target = $region16
        $region15: #{decoder_block.3} parent=11 // pred_region
          %s156 = ssub.s32 256, 256
          %157 = vsyncadd [#allocation6], %s156
          %s158 = sshll.u32 [#allocation5], 4
          %s159 = int_to_ptr.vmem [resolvable:$true] %s158
          %164 = dma.hbm_to_vmem [thread:$0]  %s1, 256, %s159, [#allocation6], 64, 64, 4
        $region16: #{decoder_block.3} parent=11 // pred_fallthru
          _
      $region12: #{decoder_block.3} parent=5 // pred_fallthru
        _
      %p165 = scmp.lt.s32.totalorder %s20, 4
      // Predicated region
      $region17: #{decoder_block.3} parent=5 // pred_check
        %p166 = pneg %p165
      $region18: #{decoder_block.3} parent=5 // pred_check_branch
        %168 = sbr.rel (%p166) target = $region20
      $region19: #{decoder_block.3} parent=5 // pred_region
        // Predicated region
        $region21: #{decoder_block.3} parent=19 // pred_check
          %p169 = pneg %p54
        $region22: #{decoder_block.3} parent=19 // pred_check_branch
          %171 = sbr.rel (%p169) target = $region24
        $region23: #{decoder_block.3} parent=19 // pred_region
          %s172 = sand.u32 %s44, 1
          %s173 = scalar_lea.sflag [#allocation3], %s172
          %s174 = sand.u32 %s44, 1
          %s175 = smul.addr %s174, 16
          %s176 = scalar_lea.vmem [#allocation2], %s175
          %s177 = smul.u32 4, %s28
          %s179 = ssub.s32 256, 256
          %180 = vsyncadd %s173, %s179
          %s181 = smul.addr %s27, 8
          %s182 = sadd.s32 %s177, %s181
          %s183 = smul.addr %s182, 64
          %s184 = scalar_lea.hbm %s0, %s183
          %s185 = sshll.u32 %s176, 4
          %s186 = int_to_ptr.vmem [resolvable:$true] %s185
          %191 = dma.hbm_to_vmem [thread:$0]  %s184, 256, %s186, %s173, 64, 64, 4
        $region24: #{decoder_block.3} parent=19 // pred_fallthru
          _
      $region20: #{decoder_block.3} parent=5 // pred_fallthru
        _
      %p192 = scmp.le.s32.totalorder 1, %s20
      %p193 = scmp.lt.s32.totalorder %s20, 5
      %p194 = pnand %p192, %p193
      %p195 = pneg %p194
      // Predicated region
      $region25: #{decoder_block.3} parent=5 // pred_check
        _
      $region26: #{decoder_block.3} parent=5 // pred_check_branch
        %197 = sbr.rel (%p194) target = $region28
      $region27: #{decoder_block.3} parent=5 // pred_region
        %s198 = ssub.s32 %s20, 1
        %s199 = sand.u32 %s47, 1
        %s200 = scalar_lea.sflag [#allocation3], %s199
        %s201 = sand.u32 %s47, 1
        %s202 = smul.addr %s201, 16
        %s203 = scalar_lea.vmem [#allocation2], %s202
        // Predicated region
        $region29: #{decoder_block.3} parent=27 // pred_check
          %p204 = pneg %p60
        $region30: #{decoder_block.3} parent=27 // pred_check_branch
          %206 = sbr.rel (%p204) target = $region32
        $region31: #{decoder_block.3} parent=27 // pred_region
          %207 = dma.done %s200, 256
        $region32: #{decoder_block.3} parent=27 // pred_fallthru
          _
        // Predicated region
        $region33: #{decoder_block.3} parent=27 // pred_check
          %p208 = pneg %p81
        $region34: #{decoder_block.3} parent=27 // pred_check_branch
          %210 = sbr.rel (%p208) target = $region36
        $region35: #{decoder_block.3} parent=27 // pred_region
          %211 = dma.done [#allocation6], 256
        $region36: #{decoder_block.3} parent=27 // pred_fallthru
          _
        %s212 = sand.u32 %s47, 1
        %s213 = scalar_lea.sflag [#allocation3], %s212
        %s214 = sand.u32 %s47, 1
        %s215 = smul.addr %s214, 16
        %s216 = scalar_lea.vmem [#allocation2], %s215
        %p217 = pneg %p60
        %p218 = pneg %p57
        %p219 = pneg %p81
        %p220 = pneg %p78
        %p221 = pneg %p109
        %p222 = pneg %p106
        %s223 = sand.u32 %s96, 1
        %s224 = scalar_lea.sflag [#allocation4], %s223
        %s225 = sand.u32 %s96, 1
        %s226 = smul.addr %s225, 16
        %s227 = scalar_lea.vmem [#allocation7], %s226
        %p228 = pneg %p137
        %p229 = pneg %p134
        %s230 = sand.u32 %s124, 1
        %s231 = scalar_lea.sflag [#allocation9], %s230
        %s232 = sand.u32 %s124, 1
        %s233 = smul.addr %s232, 2
        %s234 = scalar_lea.vmem [#allocation8], %s233
        %s235 = smul.u32 4, %s30
        %s236 = smul.u32 4, %s30
        %v238 = vld [vmem:[%s203] sm:$0xf]
        %v239 = vld [vmem:[%s203 + $0x4] sm:$0xf]
        %v240 = vld [vmem:[%s203 + $0x8] sm:$0xf]
        %v241 = vld [vmem:[%s203 + $0xc] sm:$0xf]
        %v242 = vld [vmem:[#allocation5] sm:$0xf]
        %v243 = vld [vmem:[#allocation5 + $0x4] sm:$0xf]
        %v244 = vld [vmem:[#allocation5 + $0x8] sm:$0xf]
        %v245 = vld [vmem:[#allocation5 + $0xc] sm:$0xf]
        %v250 = vunpack.c.l.b16 %v238
        %v251 = vunpack.c.l.b16 %v239
        %v252 = vunpack.c.l.b16 %v240
        %v253 = vunpack.c.l.b16 %v241
        %v254 = vpack.c.b16 %v251, %v250
        %v255 = vpack.c.b16 %v253, %v252
        %v260 = vunpack.c.l.b16 %v242
        %v261 = vunpack.c.l.b16 %v243
        %v262 = vunpack.c.l.b16 %v244
        %v263 = vunpack.c.l.b16 %v245
        %v264 = vpack.c.b16 %v261, %v260
        %v265 = vpack.c.b16 %v263, %v262
        %vm268 = vcmask 261120
        %v270 = vsel %vm268, %v254, 0
        %v273 = vsel %vm268, %v255, 0
        %275 = vmatprep.subr.bf16.mxu0 0
        %276 = vmatpush1.bf16.msra.mxu0 %v264
        %277 = vmatprep.subr.bf16.mxu0 0
        %278 = vmatpush1.bf16.msra.mxu0 %v265
        %279 = vmatprep.subr.bf16.mxu0 0
        %280 = vmatpush1.bf16.msra.mxu0 0
        %281 = vmatprep.subr.bf16.mxu0 0
        %282 = vmatpush1.bf16.msra.mxu0 0
        %283 = vmatprep.subr.bf16.mxu0 0
        %284 = vmatpush1.bf16.msra.mxu0 0
        %285 = vmatprep.subr.bf16.mxu0 0
        %286 = vmatpush1.bf16.msra.mxu0 0
        %287 = vmatprep.subr.bf16.mxu0 0
        %288 = vmatpush1.bf16.msra.mxu0 0
        %289 = vmatprep.subr.bf16.mxu0 0
        %290 = vmatpush1.bf16.msra.mxu0 0
        %291 = vmatprep.subr.bf16.mxu0 0
        %292 = vmatpush1.bf16.msra.mxu0 0
        %293 = vmatprep.subr.bf16.mxu0 0
        %294 = vmatpush1.bf16.msra.mxu0 0
        %295 = vmatprep.subr.bf16.mxu0 0
        %296 = vmatpush1.bf16.msra.mxu0 0
        %297 = vmatprep.subr.bf16.mxu0 0
        %298 = vmatpush1.bf16.msra.mxu0 0
        %299 = vmatprep.subr.bf16.mxu0 0
        %300 = vmatpush1.bf16.msra.mxu0 0
        %301 = vmatprep.subr.bf16.mxu0 0
        %302 = vmatpush1.bf16.msra.mxu0 0
        %303 = vmatprep.subr.bf16.mxu0 0
        %304 = vmatpush1.bf16.msra.mxu0 0
        %305 = vmatprep.subr.bf16.mxu0 0
        %306 = vmatpush1.bf16.msra.mxu0 0
        %307 = vmatprep.mubr.bf16.mxu0 0
        %308 = vmatmul.mubr.bf16.gmra.mrb[0].mxu0 %v270
        %v309 = vpop.f32.mrb[0].mxu0
        %v310 = vadd.f32 0.0, %v309
        %v311 = vpop.f32.mrb[0].mxu0
        %v312 = vpop.f32.mrb[0].mxu0
        %v313 = vadd.f32 0.0, %v312
        %v314 = vpop.f32.mrb[0].mxu0
        %315 = vmatprep.mubr.bf16.mxu0 0
        %316 = vmatmul.mubr.bf16.gmra.mrb[0].mxu0 %v273
        %v317 = vpop.f32.mrb[0].mxu0
        %v318 = vadd.f32 0.0, %v317
        %v319 = vpop.f32.mrb[0].mxu0
        %v320 = vpop.f32.mrb[0].mxu0
        %v321 = vadd.f32 0.0, %v320
        %v322 = vpop.f32.mrb[0].mxu0
        %323 = vdwg.mxu0
        %v324 = vpack.c.bf16 %v313, %v310
        %v325 = vpack.c.bf16 %v321, %v318
        %v328 = vunpack.c.l.b16 %v324
        %v329 = vunpack.c.h.b16 %v324
        %v330 = vunpack.c.l.b16 %v325
        %v331 = vunpack.c.h.b16 %v325
        %v332 = vpack.c.b16 %v328, %v328
        %v333 = vpack.c.b16 %v329, %v329
        %v334 = vpack.c.b16 %v330, %v330
        %v335 = vpack.c.b16 %v331, %v331
        %vm340 = vcmask 60416
        %341 = vst.msk [vmem:[%s227] sm:$0xf] %vm340, %v332
        %342 = vst.msk [vmem:[%s227 + $0x4] sm:$0xf] %vm340, %v333
        %343 = vst.msk [vmem:[%s227 + $0x8] sm:$0xf] %vm340, %v334
        %344 = vst.msk [vmem:[%s227 + $0xc] sm:$0xf] %vm340, %v335
        %v345 = vunpack.c.l.bf16 %v324
        %v346 = vunpack.c.h.bf16 %v324
        %v347 = vunpack.c.l.bf16 %v325
        %v348 = vunpack.c.h.bf16 %v325
        %vm349 = vcmask 64512
        %v350 = vsel %vm349, %v345, 0.0
        %v351 = vsel %vm349, %v346, 0.0
        %v352 = vadd.f32 %v350, %v351
        %v353 = vsel %vm349, %v347, 0.0
        %v354 = vadd.f32 %v352, %v353
        %v355 = vsel %vm349, %v348, 0.0
        %v356 = vadd.f32 %v354, %v355
        %v357 = vrot.slane %v356, 4
        %v358 = vadd.f32 %v356, %v357
        %v359 = vrot.slane %v358, 2
        %v360 = vadd.f32 %v358, %v359
        %v361 = vrot.slane %v360, 1
        %v362 = vadd.f32 %v360, %v361
        %v363 = vmul.f32 %v362, 0.03125
        %v364 = vsub.f32 %v345, %v363
        %v365 = vsub.f32 %v346, %v363
        %v366 = vsub.f32 %v347, %v363
        %v367 = vsub.f32 %v348, %v363
        %v368 = vmul.f32 %v364, %v364
        %v369 = vmul.f32 %v365, %v365
        %v370 = vmul.f32 %v366, %v366
        %v371 = vmul.f32 %v367, %v367
        %v372 = vsel %vm349, %v368, 0.0
        %v373 = vsel %vm349, %v369, 0.0
        %v374 = vadd.f32 %v372, %v373
        %v375 = vsel %vm349, %v370, 0.0
        %v376 = vadd.f32 %v374, %v375
        %v377 = vsel %vm349, %v371, 0.0
        %v378 = vadd.f32 %v376, %v377
        %v379 = vrot.slane %v378, 4
        %v380 = vadd.f32 %v378, %v379
        %v381 = vrot.slane %v380, 2
        %v382 = vadd.f32 %v380, %v381
        %v383 = vrot.slane %v382, 1
        %v384 = vadd.f32 %v382, %v383
        %vm385 = vcmask 1040384
        %v386 = vsel %vm385, %v362, %v384
        %vm387 = vcmask 58368
        %388 = vst.msk [vmem:[%s234] sm:$0x3] %vm387, %v386
        %s389 = sand.u32 %s96, 1
        %s390 = scalar_lea.sflag [#allocation4], %s389
        %s391 = sand.u32 %s96, 1
        %s392 = smul.addr %s391, 16
        %s393 = scalar_lea.vmem [#allocation7], %s392
        %s394 = sand.u32 %s124, 1
        %s395 = scalar_lea.sflag [#allocation9], %s394
        %s396 = sand.u32 %s124, 1
        %s397 = smul.addr %s396, 2
        %s398 = scalar_lea.vmem [#allocation8], %s397
        // Predicated region
        $region37: #{decoder_block.3} parent=27 // pred_check
          %p399 = pneg %p106
        $region38: #{decoder_block.3} parent=27 // pred_check_branch
          %401 = sbr.rel (%p399) target = $region40
        $region39: #{decoder_block.3} parent=27 // pred_region
          %s402 = smul.u32 4, %s30
          %s404 = ssub.s32 256, 256
          %405 = vsyncadd %s390, %s404
          %s406 = smul.addr %s29, 8
          %s407 = sadd.s32 %s402, %s406
          %s408 = smul.addr %s407, 64
          %s409 = scalar_lea.hbm %s2, %s408
          %s410 = sshll.u32 %s393, 4
          %s411 = int_to_ptr.vmem [resolvable:$true] %s410
          %416 = dma.vmem_to_hbm [thread:$0]  %s411, 256, %s409, %s390, 64, 64, 4
        $region40: #{decoder_block.3} parent=27 // pred_fallthru
          _
        // Predicated region
        $region41: #{decoder_block.3} parent=27 // pred_check
          %p417 = pneg %p134
        $region42: #{decoder_block.3} parent=27 // pred_check_branch
          %419 = sbr.rel (%p417) target = $region44
        $region43: #{decoder_block.3} parent=27 // pred_region
          %s421 = ssub.s32 32, 32
          %422 = vsyncadd %s395, %s421
          %s423 = smul.addr %s29, 2
          %s424 = sadd.s32 %s30, %s423
          %s425 = smul.addr %s424, 32
          %s426 = scalar_lea.hbm %s3, %s425
          %s428 = sshll.u32 %s398, 4
          %s429 = int_to_ptr.vmem [resolvable:$true] %s428
          %431 = dma.vmem_to_hbm [thread:$0]  %s429, 32, %s426, %s395
        $region44: #{decoder_block.3} parent=27 // pred_fallthru
          _
      $region28: #{decoder_block.3} parent=5 // pred_fallthru
        _
      %p432 = scmp.le.s32.totalorder 2, %s20
      // Predicated region
      $region45: #{decoder_block.3} parent=5 // pred_check
        %p433 = pneg %p432
      $region46: #{decoder_block.3} parent=5 // pred_check_branch
        %435 = sbr.rel (%p433) target = $region48
      $region47: #{decoder_block.3} parent=5 // pred_region
        %s436 = ssub.s32 %s20, 2
        // Predicated region
        $region49: #{decoder_block.3} parent=47 // pred_check
          %p437 = pneg %p112
        $region50: #{decoder_block.3} parent=47 // pred_check_branch
          %439 = sbr.rel (%p437) target = $region52
        $region51: #{decoder_block.3} parent=47 // pred_region
          %s440 = sand.u32 %s97, 1
          %s441 = scalar_lea.sflag [#allocation4], %s440
          %s442 = sand.u32 %s97, 1
          %s443 = smul.addr %s442, 16
          %s444 = scalar_lea.vmem [#allocation7], %s443
          %445 = dma.done %s441, 256
        $region52: #{decoder_block.3} parent=47 // pred_fallthru
          _
        // Predicated region
        $region53: #{decoder_block.3} parent=47 // pred_check
          %p446 = pneg %p140
        $region54: #{decoder_block.3} parent=47 // pred_check_branch
          %448 = sbr.rel (%p446) target = $region56
        $region55: #{decoder_block.3} parent=47 // pred_region
          %s449 = sand.u32 %s125, 1
          %s450 = scalar_lea.sflag [#allocation9], %s449
          %s451 = sand.u32 %s125, 1
          %s452 = smul.addr %s451, 2
          %s453 = scalar_lea.vmem [#allocation8], %s452
          %454 = dma.done %s450, 32
        $region56: #{decoder_block.3} parent=47 // pred_fallthru
          _
      $region48: #{decoder_block.3} parent=5 // pred_fallthru
        _
    $region6: #{decoder_block.3} parent=1 // loop_footer
      %s24 = sadd.s32 1, %s20
    $region7: #{decoder_block.3} parent=1 // loop_footer_branch
      %19 = sbr.rel target = $region3
    $region8: #{decoder_block.3} parent=1 // loop_exit
      _
    %455 = vsyncpa [#allocation3], 1
    %s456 = scalar_lea.sflag [#allocation3], 1
    %457 = vsyncpa %s456, 1
    %458 = vsyncpa [#allocation6], 1
    %459 = vsyncpa [#allocation4], 1
    %s460 = scalar_lea.sflag [#allocation4], 1
    %461 = vsyncpa %s460, 1
    %462 = vsyncpa [#allocation9], 1
    %s463 = scalar_lea.sflag [#allocation9], 1
    %464 = vsyncpa %s463, 1

// kernel: decoder_block.5
$region0: #{decoder_block.5}
  #allocation0 [shape = 'u32[]', space=smem, size = 0x4, offset = 0x4, fixed_abs, tag = 'smem constant byte address 0x4 - core index']
  #allocation1 [shape = 'u32[144,128]{1,0:T(1,128)}', space=vmem, size = 0x12000, scoped, tag = 'internal scratch']
  %s0 = inlined_call_operand.hbm [shape: f32[1,32], index: 0, kind: input, shape index: {}]
  %s1 = inlined_call_operand.hbm [shape: f32[1,32], index: 1, kind: input, shape index: {}]
  %s2 = inlined_call_operand.hbm [shape: bf16[2,8,8,32], index: 2, kind: input, shape index: {}]
  %s3 = inlined_call_operand.hbm [shape: bf16[8,16], index: 3, kind: input, shape index: {}]
  %s4 = inlined_call_operand.hbm [shape: bf16[2,8,8,64], index: 4, kind: output, shape index: {0}]
  %s5 = inlined_call_operand.hbm [shape: f32[2,2,2,16], index: 5, kind: output, shape index: {1}]
  %6 = xla_tuple %s4, %s5
  %s7 = sld [smem:[#allocation0]]
  $region73: #{decoder_block.5} parent=0
    _
  %s9 = ssub.s32 1, %s7
  %s10 = scalar_select 0, %s9, %s7
  $region1: #{decoder_block.5} parent=0
    #allocation2 [shape = 'u8[512]{0}', space=vmem, size = 0x400, scoped, tag = 'input window, operand 0, single buffered']
    #allocation3 [shape = 's32[2]{0}', space=sflag, size = 0x8, scoped, tag = 'scoped memory for decoder_block.5']
    #allocation4 [shape = 's32[2]{0}', space=sflag, size = 0x8, scoped, tag = 'scoped memory for decoder_block.5']
    #allocation5 [shape = 'u8[512]{0}', space=vmem, size = 0x400, scoped, tag = 'input window, operand 1, single buffered']
    #allocation6 [shape = 's32[1]{0}', space=sflag, size = 0x4, scoped, tag = 'scoped memory for decoder_block.5']
    #allocation7 [shape = 'u8[16384]{0}', space=vmem, size = 0x4000, scoped, tag = 'input window, operand 2']
    #allocation8 [shape = 'u8[2048]{0}', space=vmem, size = 0x800, scoped, tag = 'input window, operand 3, single buffered']
    #allocation9 [shape = 'u8[16384]{0}', space=vmem, size = 0x4000, scoped, tag = 'output window, operand 0']
    #allocation10 [shape = 'u8[2048]{0}', space=vmem, size = 0x800, scoped, tag = 'output window, operand 1']
    #allocation11 [shape = 's32[2]{0}', space=sflag, size = 0x8, scoped, tag = 'scoped memory for decoder_block.5']
    %11 = vsyncpa [#allocation3], 0
    %12 = vsyncpa [#allocation6], 0
    %13 = vsyncpa [#allocation4], 0
    %s14 = scalar_lea.sflag [#allocation4], 1
    %15 = vsyncpa %s14, 0
    %16 = vsyncpa [#allocation11], 0
    %s17 = scalar_lea.sflag [#allocation11], 1
    %18 = vsyncpa %s17, 0
    loop: start=0, step=1, limit=6
    $region2: #{decoder_block.5} parent=1 // loop_pre_header
      _
    $region3: #{decoder_block.5} parent=1 // loop_header
      %s20 = sphi 0, %s24
      %p21 = scmp.ge.s32.totalorder %s20, 6
      %s27 = sphi 0, %s39
      %s28 = sphi 0, %s35
      %s29 = sphi 0, %s27
      %s30 = sphi 0, %s28
      %s31 = sphi 0, %s29
      %s32 = sphi 0, %s30
      %s40 = sphi 0, %s40
      %s42 = sphi 0, %s40
      %s43 = sphi 0, %s42
      %s57 = sphi 0, %s43
      %s61 = sphi 0, %s61
      %s63 = sphi 0, %s61
      %s64 = sphi 0, %s63
      %s78 = sphi 0, %s64
      %s86 = sphi 0, %s88
      %s89 = sphi 0, %s86
      %s90 = sphi 0, %s89
      %s106 = sphi 0, %s90
      %s110 = sphi 0, %s110
      %s112 = sphi 0, %s110
      %s113 = sphi 0, %s112
      %s127 = sphi 0, %s113
      %s135 = sphi 0, %s137
      %s138 = sphi 0, %s135
      %s139 = sphi 0, %s138
      %s155 = sphi 0, %s139
      %s163 = sphi 0, %s165
      %s166 = sphi 0, %s163
      %s167 = sphi 0, %s166
      %s183 = sphi 0, %s167
    $region4: #{decoder_block.5} parent=1 // loop_header_branch
      %23 = sbr.rel (%p21) target = $region8
    $region5: #{decoder_block.5} parent=1 // loop_body
      %s25 = ssub.s32 %s20, 1
      %s26 = ssub.s32 %s20, 2
      %s33 = sadd.s32 1, %s28
      %p34 = scmp.ge.s32.totalorder %s33, 2
      %s35 = scalar_select %p34, 0, %s33
      %s36 = sadd.s32 1, %s27
      %s37 = scalar_select %p34, %s36, %s27
      %p38 = scmp.ge.s32.totalorder %s37, 2
      %s39 = scalar_select %p38, 0, %s37
      %s41 = sadd.s32 %s40, 1
      %p44 = scmp.eq.s32.totalorder %s20, 3
      %p45 = scmp.ne.s32.totalorder %s40, %s42
      %p46 = scmp.eq.s32.totalorder %s20, 0
      %p47 = por %p45, %p46
      %p48 = scmp.ne.s32.totalorder %s40, %s42
      %p49 = scmp.eq.s32.totalorder %s25, 3
      %p50 = por %p48, %p49
      %p51 = scmp.ne.s32.totalorder %s42, %s43
      %p52 = scmp.eq.s32.totalorder %s25, 0
      %p53 = por %p51, %p52
      %p54 = scmp.ne.s32.totalorder %s42, %s43
      %p55 = scmp.eq.s32.totalorder %s26, 3
      %p56 = por %p54, %p55
      %p58 = scmp.ne.s32.totalorder %s43, %s57
      %p59 = scmp.eq.s32.totalorder %s26, 0
      %p60 = por %p58, %p59
      %s62 = sadd.s32 %s61, 1
      %p65 = scmp.eq.s32.totalorder %s20, 3
      %p66 = scmp.ne.s32.totalorder %s61, %s63
      %p67 = scmp.eq.s32.totalorder %s20, 0
      %p68 = por %p66, %p67
      %p69 = scmp.ne.s32.totalorder %s61, %s63
      %p70 = scmp.eq.s32.totalorder %s25, 3
      %p71 = por %p69, %p70
      %p72 = scmp.ne.s32.totalorder %s63, %s64
      %p73 = scmp.eq.s32.totalorder %s25, 0
      %p74 = por %p72, %p73
      %p75 = scmp.ne.s32.totalorder %s63, %s64
      %p76 = scmp.eq.s32.totalorder %s26, 3
      %p77 = por %p75, %p76
      %p79 = scmp.ne.s32.totalorder %s64, %s78
      %p80 = scmp.eq.s32.totalorder %s26, 0
      %p81 = por %p79, %p80
      %s82 = ssub.s32 %s27, %s39
      %s83 = ssub.s32 %s28, %s35
      %s84 = sor.u32 %s82, %s83
      %p85 = scmp.eq.s32.totalorder %s84, 0
      %s87 = sadd.s32 %s86, 1
      %s88 = scalar_select %p85, %s86, %s87
      %p91 = pneg %p85
      %p92 = scmp.eq.s32.totalorder %s20, 3
      %p93 = por %p91, %p92
      %p94 = scmp.ne.s32.totalorder %s86, %s89
      %p95 = scmp.eq.s32.totalorder %s20, 0
      %p96 = por %p94, %p95
      %p97 = scmp.ne.s32.totalorder %s86, %s89
      %p98 = scmp.eq.s32.totalorder %s25, 3
      %p99 = por %p97, %p98
      %p100 = scmp.ne.s32.totalorder %s89, %s90
      %p101 = scmp.eq.s32.totalorder %s25, 0
      %p102 = por %p100, %p101
      %p103 = scmp.ne.s32.totalorder %s89, %s90
      %p104 = scmp.eq.s32.totalorder %s26, 3
      %p105 = por %p103, %p104
      %p107 = scmp.ne.s32.totalorder %s90, %s106
      %p108 = scmp.eq.s32.totalorder %s26, 0
      %p109 = por %p107, %p108
      %s111 = sadd.s32 %s110, 1
      %p114 = scmp.eq.s32.totalorder %s20, 3
      %p115 = scmp.ne.s32.totalorder %s110, %s112
      %p116 = scmp.eq.s32.totalorder %s20, 0
      %p117 = por %p115, %p116
      %p118 = scmp.ne.s32.totalorder %s110, %s112
      %p119 = scmp.eq.s32.totalorder %s25, 3
      %p120 = por %p118, %p119
      %p121 = scmp.ne.s32.totalorder %s112, %s113
      %p122 = scmp.eq.s32.totalorder %s25, 0
      %p123 = por %p121, %p122
      %p124 = scmp.ne.s32.totalorder %s112, %s113
      %p125 = scmp.eq.s32.totalorder %s26, 3
      %p126 = por %p124, %p125
      %p128 = scmp.ne.s32.totalorder %s113, %s127
      %p129 = scmp.eq.s32.totalorder %s26, 0
      %p130 = por %p128, %p129
      %s131 = ssub.s32 %s27, %s39
      %s132 = ssub.s32 %s28, %s35
      %s133 = sor.u32 %s131, %s132
      %p134 = scmp.eq.s32.totalorder %s133, 0
      %s136 = sadd.s32 %s135, 1
      %s137 = scalar_select %p134, %s135, %s136
      %p140 = pneg %p134
      %p141 = scmp.eq.s32.totalorder %s20, 3
      %p142 = por %p140, %p141
      %p143 = scmp.ne.s32.totalorder %s135, %s138
      %p144 = scmp.eq.s32.totalorder %s20, 0
      %p145 = por %p143, %p144
      %p146 = scmp.ne.s32.totalorder %s135, %s138
      %p147 = scmp.eq.s32.totalorder %s25, 3
      %p148 = por %p146, %p147
      %p149 = scmp.ne.s32.totalorder %s138, %s139
      %p150 = scmp.eq.s32.totalorder %s25, 0
      %p151 = por %p149, %p150
      %p152 = scmp.ne.s32.totalorder %s138, %s139
      %p153 = scmp.eq.s32.totalorder %s26, 3
      %p154 = por %p152, %p153
      %p156 = scmp.ne.s32.totalorder %s139, %s155
      %p157 = scmp.eq.s32.totalorder %s26, 0
      %p158 = por %p156, %p157
      %s159 = ssub.s32 %s27, %s39
      %s160 = ssub.s32 %s28, %s35
      %s161 = sor.u32 %s159, %s160
      %p162 = scmp.eq.s32.totalorder %s161, 0
      %s164 = sadd.s32 %s163, 1
      %s165 = scalar_select %p162, %s163, %s164
      %p168 = pneg %p162
      %p169 = scmp.eq.s32.totalorder %s20, 3
      %p170 = por %p168, %p169
      %p171 = scmp.ne.s32.totalorder %s163, %s166
      %p172 = scmp.eq.s32.totalorder %s20, 0
      %p173 = por %p171, %p172
      %p174 = scmp.ne.s32.totalorder %s163, %s166
      %p175 = scmp.eq.s32.totalorder %s25, 3
      %p176 = por %p174, %p175
      %p177 = scmp.ne.s32.totalorder %s166, %s167
      %p178 = scmp.eq.s32.totalorder %s25, 0
      %p179 = por %p177, %p178
      %p180 = scmp.ne.s32.totalorder %s166, %s167
      %p181 = scmp.eq.s32.totalorder %s26, 3
      %p182 = por %p180, %p181
      %p184 = scmp.ne.s32.totalorder %s167, %s183
      %p185 = scmp.eq.s32.totalorder %s26, 0
      %p186 = por %p184, %p185
      %p187 = scmp.le.s32.totalorder 1, %s20
      %p188 = scmp.lt.s32.totalorder %s20, 5
      %p189 = pnand %p187, %p188
      %p190 = pneg %p189
      // Predicated region
      $region9: #{decoder_block.5} parent=5 // pred_check
        _
      $region10: #{decoder_block.5} parent=5 // pred_check_branch
        %192 = sbr.rel (%p189) target = $region12
      $region11: #{decoder_block.5} parent=5 // pred_region
        %s193 = ssub.s32 %s20, 1
        // Predicated region
        $region13: #{decoder_block.5} parent=11 // pred_check
          %p194 = pneg %p53
        $region14: #{decoder_block.5} parent=11 // pred_check_branch
          %196 = sbr.rel (%p194) target = $region16
        $region15: #{decoder_block.5} parent=11 // pred_region
          %s198 = ssub.s32 16, 16
          %199 = vsyncadd [#allocation3], %s198
          %s201 = sshll.u32 [#allocation2], 4
          %s202 = int_to_ptr.vmem [resolvable:$true] %s201
          %204 = dma.hbm_to_vmem [thread:$0]  %s0, 16, %s202, [#allocation3]
        $region16: #{decoder_block.5} parent=11 // pred_fallthru
          _
        // Predicated region
        $region17: #{decoder_block.5} parent=11 // pred_check
          %p205 = pneg %p74
        $region18: #{decoder_block.5} parent=11 // pred_check_branch
          %207 = sbr.rel (%p205) target = $region20
        $region19: #{decoder_block.5} parent=11 // pred_region
          %s209 = ssub.s32 16, 16
          %210 = vsyncadd [#allocation6], %s209
          %s212 = sshll.u32 [#allocation5], 4
          %s213 = int_to_ptr.vmem [resolvable:$true] %s212
          %215 = dma.hbm_to_vmem [thread:$0]  %s1, 16, %s213, [#allocation6]
        $region20: #{decoder_block.5} parent=11 // pred_fallthru
          _
        // Predicated region
        $region21: #{decoder_block.5} parent=11 // pred_check
          %p216 = pneg %p123
        $region22: #{decoder_block.5} parent=11 // pred_check_branch
          %218 = sbr.rel (%p216) target = $region24
        $region23: #{decoder_block.5} parent=11 // pred_region
          %s220 = ssub.s32 64, 64
          %221 = vsyncadd [#allocation6], %s220
          %s223 = sshll.u32 [#allocation8], 4
          %s224 = int_to_ptr.vmem [resolvable:$true] %s223
          %226 = dma.hbm_to_vmem [thread:$0]  %s3, 64, %s224, [#allocation6]
        $region24: #{decoder_block.5} parent=11 // pred_fallthru
          _
      $region12: #{decoder_block.5} parent=5 // pred_fallthru
        _
      %p227 = scmp.lt.s32.totalorder %s20, 4
      // Predicated region
      $region25: #{decoder_block.5} parent=5 // pred_check
        %p228 = pneg %p227
      $region26: #{decoder_block.5} parent=5 // pred_check_branch
        %230 = sbr.rel (%p228) target = $region28
      $region27: #{decoder_block.5} parent=5 // pred_region
        // Predicated region
        $region29: #{decoder_block.5} parent=27 // pred_check
          %p231 = pneg %p96
        $region30: #{decoder_block.5} parent=27 // pred_check_branch
          %233 = sbr.rel (%p231) target = $region32
        $region31: #{decoder_block.5} parent=27 // pred_region
          %s234 = sand.u32 %s20, 1
          %s235 = scalar_lea.sflag [#allocation3], %s234
          %s236 = sand.u32 %s86, 1
          %s237 = smul.addr %s236, 16
          %s238 = scalar_lea.vmem [#allocation7], %s237
          %s239 = smul.u32 4, %s28
          %s241 = ssub.s32 256, 256
          %242 = vsyncadd %s235, %s241
          %s243 = smul.addr %s27, 8
          %s244 = sadd.s32 %s239, %s243
          %s245 = smul.addr %s244, 64
          %s246 = scalar_lea.hbm %s2, %s245
          %s247 = sshll.u32 %s238, 4
          %s248 = int_to_ptr.vmem [resolvable:$true] %s247
          %253 = dma.hbm_to_vmem [thread:$0]  %s246, 256, %s248, %s235, 64, 64, 4
        $region32: #{decoder_block.5} parent=27 // pred_fallthru
          _
      $region28: #{decoder_block.5} parent=5 // pred_fallthru
        _
      %p254 = scmp.le.s32.totalorder 1, %s20
      %p255 = scmp.lt.s32.totalorder %s20, 5
      %p256 = pnand %p254, %p255
      %p257 = pneg %p256
      // Predicated region
      $region33: #{decoder_block.5} parent=5 // pred_check
        _
      $region34: #{decoder_block.5} parent=5 // pred_check_branch
        %259 = sbr.rel (%p256) target = $region36
      $region35: #{decoder_block.5} parent=5 // pred_region
        %s260 = ssub.s32 %s20, 1
        // Predicated region
        $region37: #{decoder_block.5} parent=35 // pred_check
          %p261 = pneg %p53
        $region38: #{decoder_block.5} parent=35 // pred_check_branch
          %263 = sbr.rel (%p261) target = $region40
        $region39: #{decoder_block.5} parent=35 // pred_region
          %264 = dma.done [#allocation3], 16
        $region40: #{decoder_block.5} parent=35 // pred_fallthru
          _
        // Predicated region
        $region41: #{decoder_block.5} parent=35 // pred_check
          %p265 = pneg %p74
        $region42: #{decoder_block.5} parent=35 // pred_check_branch
          %267 = sbr.rel (%p265) target = $region44
        $region43: #{decoder_block.5} parent=35 // pred_region
          %268 = dma.done [#allocation6], 16
        $region44: #{decoder_block.5} parent=35 // pred_fallthru
          _
        %s269 = sand.u32 %s25, 1
        %s270 = scalar_lea.sflag [#allocation3], %s269
        %s271 = sand.u32 %s89, 1
        %s272 = smul.addr %s271, 16
        %s273 = scalar_lea.vmem [#allocation7], %s272
        // Predicated region
        $region45: #{decoder_block.5} parent=35 // pred_check
          %p274 = pneg %p102
        $region46: #{decoder_block.5} parent=35 // pred_check_branch
          %276 = sbr.rel (%p274) target = $region48
        $region47: #{decoder_block.5} parent=35 // pred_region
          %277 = dma.done %s270, 256
        $region48: #{decoder_block.5} parent=35 // pred_fallthru
          _
        // Predicated region
        $region49: #{decoder_block.5} parent=35 // pred_check
          %p278 = pneg %p123
        $region50: #{decoder_block.5} parent=35 // pred_check_branch
          %280 = sbr.rel (%p278) target = $region52
        $region51: #{decoder_block.5} parent=35 // pred_region
          %281 = dma.done [#allocation6], 64
        $region52: #{decoder_block.5} parent=35 // pred_fallthru
          _
        %p282 = pneg %p53
        %p283 = pneg %p50
        %p284 = pneg %p74
        %p285 = pneg %p71
        %s286 = sand.u32 %s25, 1
        %s287 = scalar_lea.sflag [#allocation3], %s286
        %s288 = sand.u32 %s89, 1
        %s289 = smul.addr %s288, 16
        %s290 = scalar_lea.vmem [#allocation7], %s289
        %p291 = pneg %p102
        %p292 = pneg %p99
        %p293 = pneg %p123
        %p294 = pneg %p120
        %p295 = pneg %p151
        %p296 = pneg %p148
        %s297 = sand.u32 %s138, 1
        %s298 = scalar_lea.sflag [#allocation4], %s297
        %s299 = sand.u32 %s138, 1
        %s300 = smul.addr %s299, 16
        %s301 = scalar_lea.vmem [#allocation9], %s300
        %p302 = pneg %p179
        %p303 = pneg %p176
        %s304 = sand.u32 %s166, 1
        %s305 = scalar_lea.sflag [#allocation11], %s304
        %s306 = sand.u32 %s166, 1
        %s307 = smul.addr %s306, 2
        %s308 = scalar_lea.vmem [#allocation10], %s307
        %s309 = smul.u32 4, %s30
        %s310 = smul.u32 4, %s30
        %v312 = vld [vmem:[%s273] sm:$0xf]
        %v313 = vld [vmem:[%s273 + $0x4] sm:$0xf]
        %v314 = vld [vmem:[%s273 + $0x8] sm:$0xf]
        %v315 = vld [vmem:[%s273 + $0xc] sm:$0xf]
        %v316 = vunpack.c.l.bf16 %v312
        %v317 = vunpack.c.l.bf16 %v313
        %v318 = vunpack.c.l.bf16 %v314
        %v319 = vunpack.c.l.bf16 %v315
        %v320 = vld [vmem:[#allocation2] sm:$0x1]
        %v322 = vlaneseq
        %v323 = vshrl.u32 %v322, 7
        %v324 = vsub.s32 0, %v323
        %v325 = vrot.slane %v320, %v324
        %v327 = vmul.f32 %v316, %v325
        %v328 = vmul.f32 %v317, %v325
        %v329 = vmul.f32 %v318, %v325
        %v330 = vmul.f32 %v319, %v325
        %v331 = vld [vmem:[#allocation5] sm:$0x1]
        %v333 = vlaneseq
        %v334 = vshrl.u32 %v333, 7
        %v335 = vsub.s32 0, %v334
        %v336 = vrot.slane %v331, %v335
        %v338 = vadd.f32 %v327, %v336
        %v339 = vadd.f32 %v328, %v336
        %v340 = vadd.f32 %v329, %v336
        %v341 = vadd.f32 %v330, %v336
        %v342 = vmax.f32 %v338, 0.0
        %v343 = vmax.f32 %v339, 0.0
        %v344 = vmax.f32 %v340, 0.0
        %v345 = vmax.f32 %v341, 0.0
        %v346 = vpack.c.bf16 %v343, %v342
        %v347 = vpack.c.bf16 %v345, %v344
        %v348 = vld [vmem:[#allocation8] sm:$0xf]
        %vm349 = vcmask 64512
        %v351 = vsel %vm349, %v346, 0
        %v354 = vsel %vm349, %v347, 0
        %vm356 = vcmask 1043456
        %v358 = vsel %vm356, %v348, 0
        %360 = vmatprep.subr.bf16.mxu0 0
        %361 = vmatpush1.bf16.msra.mxu0 %v358
        %362 = vmatprep.subr.bf16.mxu0 0
        %363 = vmatpush1.bf16.msra.mxu0 0
        %364 = vmatprep.subr.bf16.mxu0 0
        %365 = vmatpush1.bf16.msra.mxu0 0
        %366 = vmatprep.subr.bf16.mxu0 0
        %367 = vmatpush1.bf16.msra.mxu0 0
        %368 = vmatprep.subr.bf16.mxu0 0
        %369 = vmatpush1.bf16.msra.mxu0 0
        %370 = vmatprep.subr.bf16.mxu0 0
        %371 = vmatpush1.bf16.msra.mxu0 0
        %372 = vmatprep.subr.bf16.mxu0 0
        %373 = vmatpush1.bf16.msra.mxu0 0
        %374 = vmatprep.subr.bf16.mxu0 0
        %375 = vmatpush1.bf16.msra.mxu0 0
        %376 = vmatprep.subr.bf16.mxu0 0
        %377 = vmatpush1.bf16.msra.mxu0 0
        %378 = vmatprep.subr.bf16.mxu0 0
        %379 = vmatpush1.bf16.msra.mxu0 0
        %380 = vmatprep.subr.bf16.mxu0 0
        %381 = vmatpush1.bf16.msra.mxu0 0
        %382 = vmatprep.subr.bf16.mxu0 0
        %383 = vmatpush1.bf16.msra.mxu0 0
        %384 = vmatprep.subr.bf16.mxu0 0
        %385 = vmatpush1.bf16.msra.mxu0 0
        %386 = vmatprep.subr.bf16.mxu0 0
        %387 = vmatpush1.bf16.msra.mxu0 0
        %388 = vmatprep.subr.bf16.mxu0 0
        %389 = vmatpush1.bf16.msra.mxu0 0
        %390 = vmatprep.subr.bf16.mxu0 0
        %391 = vmatpush1.bf16.msra.mxu0 0
        %392 = vmatprep.mubr.bf16.mxu0 0
        %393 = vmatmul.mubr.bf16.gmra.mrb[0].mxu0 %v351
        %v394 = vpop.f32.mrb[0].mxu0
        %v395 = vadd.f32 0.0, %v394
        %v396 = vpop.f32.mrb[0].mxu0
        %v397 = vpop.f32.mrb[0].mxu0
        %v398 = vadd.f32 0.0, %v397
        %v399 = vpop.f32.mrb[0].mxu0
        %400 = vmatprep.mubr.bf16.mxu0 0
        %401 = vmatmul.mubr.bf16.gmra.mrb[0].mxu0 %v354
        %v402 = vpop.f32.mrb[0].mxu0
        %v403 = vadd.f32 0.0, %v402
        %v404 = vpop.f32.mrb[0].mxu0
        %v405 = vpop.f32.mrb[0].mxu0
        %v406 = vadd.f32 0.0, %v405
        %v407 = vpop.f32.mrb[0].mxu0
        %408 = vdwg.mxu0
        %411 = vrot.lane.b32.xlu0 %v346, 120
        %v412 = vpop.permute.xlu0 %411
        %413 = vrot.lane.b32.xlu0 %v347, 120
        %v414 = vpop.permute.xlu0 %413
        %v416 = vsel %vm349, %v412, 0
        %v419 = vsel %vm349, %v414, 0
        %421 = vmatprep.subr.bf16.mxu0 0
        %422 = vmatpush1.bf16.msra.mxu0 %v358
        %423 = vmatprep.subr.bf16.mxu0 0
        %424 = vmatpush1.bf16.msra.mxu0 0
        %425 = vmatprep.subr.bf16.mxu0 0
        %426 = vmatpush1.bf16.msra.mxu0 0
        %427 = vmatprep.subr.bf16.mxu0 0
        %428 = vmatpush1.bf16.msra.mxu0 0
        %429 = vmatprep.subr.bf16.mxu0 0
        %430 = vmatpush1.bf16.msra.mxu0 0
        %431 = vmatprep.subr.bf16.mxu0 0
        %432 = vmatpush1.bf16.msra.mxu0 0
        %433 = vmatprep.subr.bf16.mxu0 0
        %434 = vmatpush1.bf16.msra.mxu0 0
        %435 = vmatprep.subr.bf16.mxu0 0
        %436 = vmatpush1.bf16.msra.mxu0 0
        %437 = vmatprep.subr.bf16.mxu0 0
        %438 = vmatpush1.bf16.msra.mxu0 0
        %439 = vmatprep.subr.bf16.mxu0 0
        %440 = vmatpush1.bf16.msra.mxu0 0
        %441 = vmatprep.subr.bf16.mxu0 0
        %442 = vmatpush1.bf16.msra.mxu0 0
        %443 = vmatprep.subr.bf16.mxu0 0
        %444 = vmatpush1.bf16.msra.mxu0 0
        %445 = vmatprep.subr.bf16.mxu0 0
        %446 = vmatpush1.bf16.msra.mxu0 0
        %447 = vmatprep.subr.bf16.mxu0 0
        %448 = vmatpush1.bf16.msra.mxu0 0
        %449 = vmatprep.subr.bf16.mxu0 0
        %450 = vmatpush1.bf16.msra.mxu0 0
        %451 = vmatprep.subr.bf16.mxu0 0
        %452 = vmatpush1.bf16.msra.mxu0 0
        %453 = vmatprep.mubr.bf16.mxu0 0
        %454 = vmatmul.mubr.bf16.gmra.mrb[0].mxu0 %v416
        %v455 = vpop.f32.mrb[0].mxu0
        %v456 = vadd.f32 0.0, %v455
        %v457 = vpop.f32.mrb[0].mxu0
        %v458 = vpop.f32.mrb[0].mxu0
        %v459 = vadd.f32 0.0, %v458
        %v460 = vpop.f32.mrb[0].mxu0
        %461 = vmatprep.mubr.bf16.mxu0 0
        %462 = vmatmul.mubr.bf16.gmra.mrb[0].mxu0 %v419
        %v463 = vpop.f32.mrb[0].mxu0
        %v464 = vadd.f32 0.0, %v463
        %v465 = vpop.f32.mrb[0].mxu0
        %v466 = vpop.f32.mrb[0].mxu0
        %v467 = vadd.f32 0.0, %v466
        %v468 = vpop.f32.mrb[0].mxu0
        %469 = vdwg.mxu0
        %470 = vrot.lane.b32.xlu0 %v346, 112
        %v471 = vpop.permute.xlu0 %470
        %472 = vrot.lane.b32.xlu0 %v347, 112
        %v473 = vpop.permute.xlu0 %472
        %v475 = vsel %vm349, %v471, 0
        %v478 = vsel %vm349, %v473, 0
        %480 = vmatprep.subr.bf16.mxu0 0
        %481 = vmatpush1.bf16.msra.mxu0 %v358
        %482 = vmatprep.subr.bf16.mxu0 0
        %483 = vmatpush1.bf16.msra.mxu0 0
        %484 = vmatprep.subr.bf16.mxu0 0
        %485 = vmatpush1.bf16.msra.mxu0 0
        %486 = vmatprep.subr.bf16.mxu0 0
        %487 = vmatpush1.bf16.msra.mxu0 0
        %488 = vmatprep.subr.bf16.mxu0 0
        %489 = vmatpush1.bf16.msra.mxu0 0
        %490 = vmatprep.subr.bf16.mxu0 0
        %491 = vmatpush1.bf16.msra.mxu0 0
        %492 = vmatprep.subr.bf16.mxu0 0
        %493 = vmatpush1.bf16.msra.mxu0 0
        %494 = vmatprep.subr.bf16.mxu0 0
        %495 = vmatpush1.bf16.msra.mxu0 0
        %496 = vmatprep.subr.bf16.mxu0 0
        %497 = vmatpush1.bf16.msra.mxu0 0
        %498 = vmatprep.subr.bf16.mxu0 0
        %499 = vmatpush1.bf16.msra.mxu0 0
        %500 = vmatprep.subr.bf16.mxu0 0
        %501 = vmatpush1.bf16.msra.mxu0 0
        %502 = vmatprep.subr.bf16.mxu0 0
        %503 = vmatpush1.bf16.msra.mxu0 0
        %504 = vmatprep.subr.bf16.mxu0 0
        %505 = vmatpush1.bf16.msra.mxu0 0
        %506 = vmatprep.subr.bf16.mxu0 0
        %507 = vmatpush1.bf16.msra.mxu0 0
        %508 = vmatprep.subr.bf16.mxu0 0
        %509 = vmatpush1.bf16.msra.mxu0 0
        %510 = vmatprep.subr.bf16.mxu0 0
        %511 = vmatpush1.bf16.msra.mxu0 0
        %512 = vmatprep.mubr.bf16.mxu0 0
        %513 = vmatmul.mubr.bf16.gmra.mrb[0].mxu0 %v475
        %v514 = vpop.f32.mrb[0].mxu0
        %v515 = vadd.f32 0.0, %v514
        %v516 = vpop.f32.mrb[0].mxu0
        %v517 = vpop.f32.mrb[0].mxu0
        %v518 = vadd.f32 0.0, %v517
        %v519 = vpop.f32.mrb[0].mxu0
        %520 = vmatprep.mubr.bf16.mxu0 0
        %521 = vmatmul.mubr.bf16.gmra.mrb[0].mxu0 %v478
        %v522 = vpop.f32.mrb[0].mxu0
        %v523 = vadd.f32 0.0, %v522
        %v524 = vpop.f32.mrb[0].mxu0
        %v525 = vpop.f32.mrb[0].mxu0
        %v526 = vadd.f32 0.0, %v525
        %v527 = vpop.f32.mrb[0].mxu0
        %528 = vdwg.mxu0
        %529 = vrot.lane.b32.xlu0 %v346, 104
        %v530 = vpop.permute.xlu0 %529
        %531 = vrot.lane.b32.xlu0 %v347, 104
        %v532 = vpop.permute.xlu0 %531
        %v534 = vsel %vm349, %v530, 0
        %v537 = vsel %vm349, %v532, 0
        %539 = vmatprep.subr.bf16.mxu0 0
        %540 = vmatpush1.bf16.msra.mxu0 %v358
        %541 = vmatprep.subr.bf16.mxu0 0
        %542 = vmatpush1.bf16.msra.mxu0 0
        %543 = vmatprep.subr.bf16.mxu0 0
        %544 = vmatpush1.bf16.msra.mxu0 0
        %545 = vmatprep.subr.bf16.mxu0 0
        %546 = vmatpush1.bf16.msra.mxu0 0
        %547 = vmatprep.subr.bf16.mxu0 0
        %548 = vmatpush1.bf16.msra.mxu0 0
        %549 = vmatprep.subr.bf16.mxu0 0
        %550 = vmatpush1.bf16.msra.mxu0 0
        %551 = vmatprep.subr.bf16.mxu0 0
        %552 = vmatpush1.bf16.msra.mxu0 0
        %553 = vmatprep.subr.bf16.mxu0 0
        %554 = vmatpush1.bf16.msra.mxu0 0
        %555 = vmatprep.subr.bf16.mxu0 0
        %556 = vmatpush1.bf16.msra.mxu0 0
        %557 = vmatprep.subr.bf16.mxu0 0
        %558 = vmatpush1.bf16.msra.mxu0 0
        %559 = vmatprep.subr.bf16.mxu0 0
        %560 = vmatpush1.bf16.msra.mxu0 0
        %561 = vmatprep.subr.bf16.mxu0 0
        %562 = vmatpush1.bf16.msra.mxu0 0
        %563 = vmatprep.subr.bf16.mxu0 0
        %564 = vmatpush1.bf16.msra.mxu0 0
        %565 = vmatprep.subr.bf16.mxu0 0
        %566 = vmatpush1.bf16.msra.mxu0 0
        %567 = vmatprep.subr.bf16.mxu0 0
        %568 = vmatpush1.bf16.msra.mxu0 0
        %569 = vmatprep.subr.bf16.mxu0 0
        %570 = vmatpush1.bf16.msra.mxu0 0
        %571 = vmatprep.mubr.bf16.mxu0 0
        %572 = vmatmul.mubr.bf16.gmra.mrb[0].mxu0 %v534
        %v573 = vpop.f32.mrb[0].mxu0
        %v574 = vadd.f32 0.0, %v573
        %v575 = vpop.f32.mrb[0].mxu0
        %v576 = vpop.f32.mrb[0].mxu0
        %v577 = vadd.f32 0.0, %v576
        %v578 = vpop.f32.mrb[0].mxu0
        %579 = vmatprep.mubr.bf16.mxu0 0
        %580 = vmatmul.mubr.bf16.gmra.mrb[0].mxu0 %v537
        %v581 = vpop.f32.mrb[0].mxu0
        %v582 = vadd.f32 0.0, %v581
        %v583 = vpop.f32.mrb[0].mxu0
        %v584 = vpop.f32.mrb[0].mxu0
        %v585 = vadd.f32 0.0, %v584
        %v586 = vpop.f32.mrb[0].mxu0
        %587 = vdwg.mxu0
        %v588 = vadd.f32 %v395, %v456
        %v589 = vadd.f32 %v398, %v459
        %v590 = vadd.f32 %v403, %v464
        %v591 = vadd.f32 %v406, %v467
        %v592 = vadd.f32 %v588, %v515
        %v593 = vadd.f32 %v589, %v518
        %v594 = vadd.f32 %v590, %v523
        %v595 = vadd.f32 %v591, %v526
        %v596 = vadd.f32 %v592, %v574
        %v597 = vadd.f32 %v593, %v577
        %v598 = vadd.f32 %v594, %v582
        %v599 = vadd.f32 %v595, %v585
        %vm600 = vcmask 130048
        %v601 = vsel %vm600, %v596, 0.0
        %v602 = vsel %vm600, %v597, 0.0
        %v603 = vadd.f32 %v601, %v602
        %v604 = vsel %vm600, %v598, 0.0
        %v605 = vadd.f32 %v603, %v604
        %v606 = vsel %vm600, %v599, 0.0
        %v607 = vadd.f32 %v605, %v606
        %v608 = vrot.slane %v607, 4
        %v609 = vadd.f32 %v607, %v608
        %v610 = vrot.slane %v609, 2
        %v611 = vadd.f32 %v609, %v610
        %v612 = vrot.slane %v611, 1
        %v613 = vadd.f32 %v611, %v612
        %v614 = vmul.f32 %v613, 0.0078125
        %v615 = vsub.f32 %v395, %v614
        %v616 = vsub.f32 %v398, %v614
        %v617 = vsub.f32 %v403, %v614
        %v618 = vsub.f32 %v406, %v614
        %v619 = vmul.f32 %v615, %v615
        %v620 = vmul.f32 %v616, %v616
        %v621 = vmul.f32 %v617, %v617
        %v622 = vmul.f32 %v618, %v618
        %v623 = vsel %vm600, %v619, 0.0
        %v624 = vsel %vm600, %v620, 0.0
        %v625 = vadd.f32 %v623, %v624
        %v626 = vsel %vm600, %v621, 0.0
        %v627 = vadd.f32 %v625, %v626
        %v628 = vsel %vm600, %v622, 0.0
        %v629 = vadd.f32 %v627, %v628
        %v630 = vrot.slane %v629, 4
        %v631 = vadd.f32 %v629, %v630
        %v632 = vrot.slane %v631, 2
        %v633 = vadd.f32 %v631, %v632
        %v634 = vrot.slane %v633, 1
        %v635 = vadd.f32 %v633, %v634
        %v636 = vsub.f32 %v456, %v614
        %v637 = vsub.f32 %v459, %v614
        %v638 = vsub.f32 %v464, %v614
        %v639 = vsub.f32 %v467, %v614
        %v640 = vmul.f32 %v636, %v636
        %v641 = vmul.f32 %v637, %v637
        %v642 = vmul.f32 %v638, %v638
        %v643 = vmul.f32 %v639, %v639
        %v644 = vsel %vm600, %v640, 0.0
        %v645 = vsel %vm600, %v641, 0.0
        %v646 = vadd.f32 %v644, %v645
        %v647 = vsel %vm600, %v642, 0.0
        %v648 = vadd.f32 %v646, %v647
        %v649 = vsel %vm600, %v643, 0.0
        %v650 = vadd.f32 %v648, %v649
        %v651 = vrot.slane %v650, 4
        %v652 = vadd.f32 %v650, %v651
        %v653 = vrot.slane %v652, 2
        %v654 = vadd.f32 %v652, %v653
        %v655 = vrot.slane %v654, 1
        %v656 = vadd.f32 %v654, %v655
        %v657 = vadd.f32 %v635, %v656
        %v658 = vsub.f32 %v515, %v614
        %v659 = vsub.f32 %v518, %v614
        %v660 = vsub.f32 %v523, %v614
        %v661 = vsub.f32 %v526, %v614
        %v662 = vmul.f32 %v658, %v658
        %v663 = vmul.f32 %v659, %v659
        %v664 = vmul.f32 %v660, %v660
        %v665 = vmul.f32 %v661, %v661
        %v666 = vsel %vm600, %v662, 0.0
        %v667 = vsel %vm600, %v663, 0.0
        %v668 = vadd.f32 %v666, %v667
        %v669 = vsel %vm600, %v664, 0.0
        %v670 = vadd.f32 %v668, %v669
        %v671 = vsel %vm600, %v665, 0.0
        %v672 = vadd.f32 %v670, %v671
        %v673 = vrot.slane %v672, 4
        %v674 = vadd.f32 %v672, %v673
        %v675 = vrot.slane %v674, 2
        %v676 = vadd.f32 %v674, %v675
        %v677 = vrot.slane %v676, 1
        %v678 = vadd.f32 %v676, %v677
        %v679 = vadd.f32 %v657, %v678
        %v680 = vsub.f32 %v574, %v614
        %v681 = vsub.f32 %v577, %v614
        %v682 = vsub.f32 %v582, %v614
        %v683 = vsub.f32 %v585, %v614
        %v684 = vmul.f32 %v680, %v680
        %v685 = vmul.f32 %v681, %v681
        %v686 = vmul.f32 %v682, %v682
        %v687 = vmul.f32 %v683, %v683
        %v688 = vsel %vm600, %v684, 0.0
        %v689 = vsel %vm600, %v685, 0.0
        %v690 = vadd.f32 %v688, %v689
        %v691 = vsel %vm600, %v686, 0.0
        %v692 = vadd.f32 %v690, %v691
        %v693 = vsel %vm600, %v687, 0.0
        %v694 = vadd.f32 %v692, %v693
        %v695 = vrot.slane %v694, 4
        %v696 = vadd.f32 %v694, %v695
        %v697 = vrot.slane %v696, 2
        %v698 = vadd.f32 %v696, %v697
        %v699 = vrot.slane %v698, 1
        %v700 = vadd.f32 %v698, %v699
        %v701 = vadd.f32 %v679, %v700
        %vm702 = vcmask 1040384
        %v703 = vsel %vm702, %v613, %v701
        %vm704 = vcmask 123904
        %705 = vst.msk [vmem:[%s308] sm:$0x3] %vm704, %v703
        %710 = vrot.lane.b32.xlu0 %v456, 16
        %v711 = vpop.permute.xlu0 %710
        %712 = vrot.lane.b32.xlu0 %v459, 16
        %v713 = vpop.permute.xlu0 %712
        %714 = vrot.lane.b32.xlu0 %v464, 16
        %v715 = vpop.permute.xlu0 %714
        %716 = vrot.lane.b32.xlu0 %v467, 16
        %v717 = vpop.permute.xlu0 %716
        %726 = vrot.lane.b32.xlu0 %v515, 32
        %v727 = vpop.permute.xlu0 %726
        %728 = vrot.lane.b32.xlu0 %v518, 32
        %v729 = vpop.permute.xlu0 %728
        %730 = vrot.lane.b32.xlu0 %v523, 32
        %v731 = vpop.permute.xlu0 %730
        %732 = vrot.lane.b32.xlu0 %v526, 32
        %v733 = vpop.permute.xlu0 %732
        %742 = vrot.lane.b32.xlu0 %v574, 48
        %v743 = vpop.permute.xlu0 %742
        %744 = vrot.lane.b32.xlu0 %v577, 48
        %v745 = vpop.permute.xlu0 %744
        %746 = vrot.lane.b32.xlu0 %v582, 48
        %v747 = vpop.permute.xlu0 %746
        %748 = vrot.lane.b32.xlu0 %v585, 48
        %v749 = vpop.permute.xlu0 %748
        %v754 = vsel %vm600, %v395, %v711
        %v755 = vsel %vm600, %v398, %v713
        %v756 = vsel %vm600, %v403, %v715
        %v757 = vsel %vm600, %v406, %v717
        %vm758 = vcmask 261120
        %v759 = vsel %vm758, %v754, %v727
        %v760 = vsel %vm758, %v755, %v729
        %v761 = vsel %vm758, %v756, %v731
        %v762 = vsel %vm758, %v757, %v733
        %vm763 = vcmask 392192
        %v764 = vsel %vm763, %v759, %v743
        %v765 = vsel %vm763, %v760, %v745
        %v766 = vsel %vm763, %v761, %v747
        %v767 = vsel %vm763, %v762, %v749
        %v768 = vpack.c.bf16 %v765, %v764
        %v769 = vpack.c.bf16 %v767, %v766
        %v772 = vunpack.c.l.b16 %v768
        %v773 = vunpack.c.h.b16 %v768
        %v774 = vunpack.c.l.b16 %v769
        %v775 = vunpack.c.h.b16 %v769
        %v776 = vpack.c.b16 %v772, %v772
        %v777 = vpack.c.b16 %v773, %v773
        %v778 = vpack.c.b16 %v774, %v774
        %v779 = vpack.c.b16 %v775, %v775
        %vm784 = vcmask 519168
        %785 = vst.msk [vmem:[%s301] sm:$0xf] %vm784, %v776
        %786 = vst.msk [vmem:[%s301 + $0x4] sm:$0xf] %vm784, %v777
        %787 = vst.msk [vmem:[%s301 + $0x8] sm:$0xf] %vm784, %v778
        %788 = vst.msk [vmem:[%s301 + $0xc] sm:$0xf] %vm784, %v779
        %s789 = sand.u32 %s138, 1
        %s790 = scalar_lea.sflag [#allocation4], %s789
        %s791 = sand.u32 %s138, 1
        %s792 = smul.addr %s791, 16
        %s793 = scalar_lea.vmem [#allocation9], %s792
        %s794 = sand.u32 %s166, 1
        %s795 = scalar_lea.sflag [#allocation11], %s794
        %s796 = sand.u32 %s166, 1
        %s797 = smul.addr %s796, 2
        %s798 = scalar_lea.vmem [#allocation10], %s797
        // Predicated region
        $region53: #{decoder_block.5} parent=35 // pred_check
          %p799 = pneg %p148
        $region54: #{decoder_block.5} parent=35 // pred_check_branch
          %801 = sbr.rel (%p799) target = $region56
        $region55: #{decoder_block.5} parent=35 // pred_region
          %s802 = smul.u32 4, %s30
          %s804 = ssub.s32 256, 256
          %805 = vsyncadd %s790, %s804
          %s806 = smul.addr %s29, 8
          %s807 = sadd.s32 %s802, %s806
          %s808 = smul.addr %s807, 64
          %s809 = scalar_lea.hbm %s4, %s808
          %s810 = sshll.u32 %s793, 4
          %s811 = int_to_ptr.vmem [resolvable:$true] %s810
          %816 = dma.vmem_to_hbm [thread:$0]  %s811, 256, %s809, %s790, 64, 64, 4
        $region56: #{decoder_block.5} parent=35 // pred_fallthru
          _
        // Predicated region
        $region57: #{decoder_block.5} parent=35 // pred_check
          %p817 = pneg %p176
        $region58: #{decoder_block.5} parent=35 // pred_check_branch
          %819 = sbr.rel (%p817) target = $region60
        $region59: #{decoder_block.5} parent=35 // pred_region
          %s821 = ssub.s32 32, 32
          %822 = vsyncadd %s795, %s821
          %s823 = smul.addr %s29, 2
          %s824 = sadd.s32 %s30, %s823
          %s825 = smul.addr %s824, 32
          %s826 = scalar_lea.hbm %s5, %s825
          %s828 = sshll.u32 %s798, 4
          %s829 = int_to_ptr.vmem [resolvable:$true] %s828
          %831 = dma.vmem_to_hbm [thread:$0]  %s829, 32, %s826, %s795
        $region60: #{decoder_block.5} parent=35 // pred_fallthru
          _
      $region36: #{decoder_block.5} parent=5 // pred_fallthru
        _
      %p832 = scmp.le.s32.totalorder 2, %s20
      // Predicated region
      $region61: #{decoder_block.5} parent=5 // pred_check
        %p833 = pneg %p832
      $region62: #{decoder_block.5} parent=5 // pred_check_branch
        %835 = sbr.rel (%p833) target = $region64
      $region63: #{decoder_block.5} parent=5 // pred_region
        %s836 = ssub.s32 %s20, 2
        // Predicated region
        $region65: #{decoder_block.5} parent=63 // pred_check
          %p837 = pneg %p154
        $region66: #{decoder_block.5} parent=63 // pred_check_branch
          %839 = sbr.rel (%p837) target = $region68
        $region67: #{decoder_block.5} parent=63 // pred_region
          %s840 = sand.u32 %s139, 1
          %s841 = scalar_lea.sflag [#allocation4], %s840
          %s842 = sand.u32 %s139, 1
          %s843 = smul.addr %s842, 16
          %s844 = scalar_lea.vmem [#allocation9], %s843
          %845 = dma.done %s841, 256
        $region68: #{decoder_block.5} parent=63 // pred_fallthru
          _
        // Predicated region
        $region69: #{decoder_block.5} parent=63 // pred_check
          %p846 = pneg %p182
        $region70: #{decoder_block.5} parent=63 // pred_check_branch
          %848 = sbr.rel (%p846) target = $region72
        $region71: #{decoder_block.5} parent=63 // pred_region
          %s849 = sand.u32 %s167, 1
          %s850 = scalar_lea.sflag [#allocation11], %s849
          %s851 = sand.u32 %s167, 1
          %s852 = smul.addr %s851, 2
          %s853 = scalar_lea.vmem [#allocation10], %s852
          %854 = dma.done %s850, 32
        $region72: #{decoder_block.5} parent=63 // pred_fallthru
          _
      $region64: #{decoder_block.5} parent=5 // pred_fallthru
        _
    $region6: #{decoder_block.5} parent=1 // loop_footer
      %s24 = sadd.s32 1, %s20
    $region7: #{decoder_block.5} parent=1 // loop_footer_branch
      %19 = sbr.rel target = $region3
    $region8: #{decoder_block.5} parent=1 // loop_exit
      _
    %855 = vsyncpa [#allocation3], 1
    %s856 = scalar_lea.sflag [#allocation3], 1
    %857 = vsyncpa %s856, 1
    %858 = vsyncpa [#allocation6], 1
    %859 = vsyncpa [#allocation4], 1
    %s860 = scalar_lea.sflag [#allocation4], 1
    %861 = vsyncpa %s860, 1
    %862 = vsyncpa [#allocation11], 1
    %s863 = scalar_lea.sflag [#allocation11], 1
    %864 = vsyncpa %s863, 1

// kernel: decoder_block.4
$region0: #{decoder_block.4}
  #allocation0 [shape = 'u32[]', space=smem, size = 0x4, offset = 0x4, fixed_abs, tag = 'smem constant byte address 0x4 - core index']
  #allocation1 [shape = 'u32[144,128]{1,0:T(1,128)}', space=vmem, size = 0x12000, scoped, tag = 'internal scratch']
  %s0 = inlined_call_operand.hbm [shape: f32[1,8], index: 0, kind: input, shape index: {}]
  %s1 = inlined_call_operand.hbm [shape: f32[1,8], index: 1, kind: input, shape index: {}]
  %s2 = inlined_call_operand.hbm [shape: bf16[2,8,8,8], index: 2, kind: input, shape index: {}, may-alias: {2,3}]
  %s3 = inlined_call_operand.hbm [shape: bf16[2,8,8,8], index: 3, kind: input, shape index: {}, may-alias: {2,3}]
  %s4 = inlined_call_operand.hbm [shape: bf16[8,8], index: 4, kind: input, shape index: {}]
  %s5 = inlined_call_operand.hbm [shape: bf16[16,8], index: 5, kind: input, shape index: {}]
  %s6 = inlined_call_operand.hbm [shape: bf16[16,8], index: 6, kind: input, shape index: {}]
  %s7 = inlined_call_operand.hbm [shape: bf16[32,8], index: 7, kind: input, shape index: {}]
  %s8 = inlined_call_operand.hbm [shape: bf16[2,8,8,32], index: 8, kind: output, shape index: {0}]
  %s9 = inlined_call_operand.hbm [shape: f32[2,2,2,8], index: 9, kind: output, shape index: {1}]
  %10 = xla_tuple %s8, %s9
  %s11 = sld [smem:[#allocation0]]
  $region105: #{decoder_block.4} parent=0
    _
  %s13 = ssub.s32 1, %s11
  %s14 = scalar_select 0, %s13, %s11
  $region1: #{decoder_block.4} parent=0
    #allocation2 [shape = 'u8[512]{0}', space=vmem, size = 0x400, scoped, tag = 'input window, operand 0, single buffered']
    #allocation3 [shape = 's32[2]{0}', space=sflag, size = 0x8, scoped, tag = 'scoped memory for decoder_block.4']
    #allocation4 [shape = 's32[2]{0}', space=sflag, size = 0x8, scoped, tag = 'scoped memory for decoder_block.4']
    #allocation5 [shape = 'u8[512]{0}', space=vmem, size = 0x400, scoped, tag = 'input window, operand 1, single buffered']
    #allocation6 [shape = 's32[1]{0}', space=sflag, size = 0x4, scoped, tag = 'scoped memory for decoder_block.4']
    #allocation7 [shape = 'u8[16384]{0}', space=vmem, size = 0x4000, scoped, tag = 'input window, operand 2']
    #allocation8 [shape = 'u8[4096]{0}', space=vmem, size = 0x1000, scoped, tag = 'input window, operand 3']
    #allocation9 [shape = 'u8[2048]{0}', space=vmem, size = 0x800, scoped, tag = 'input window, operand 4, single buffered']
    #allocation10 [shape = 'u8[4096]{0}', space=vmem, size = 0x1000, scoped, tag = 'input window, operand 5, single buffered']
    #allocation11 [shape = 's32[1]{0}', space=sflag, size = 0x4, scoped, tag = 'scoped memory for decoder_block.4']
    #allocation12 [shape = 'u8[4096]{0}', space=vmem, size = 0x1000, scoped, tag = 'input window, operand 6, single buffered']
    #allocation13 [shape = 'u8[8192]{0}', space=vmem, size = 0x2000, scoped, tag = 'input window, operand 7, single buffered']
    #allocation14 [shape = 's32[1]{0}', space=sflag, size = 0x4, scoped, tag = 'scoped memory for decoder_block.4']
    #allocation15 [shape = 'u8[16384]{0}', space=vmem, size = 0x4000, scoped, tag = 'output window, operand 0']
    #allocation16 [shape = 'u8[2048]{0}', space=vmem, size = 0x800, scoped, tag = 'output window, operand 1']
    #allocation17 [shape = 's32[2]{0}', space=sflag, size = 0x8, scoped, tag = 'scoped memory for decoder_block.4']
    %15 = vsyncpa [#allocation3], 0
    %16 = vsyncpa [#allocation6], 0
    %17 = vsyncpa [#allocation11], 0
    %18 = vsyncpa [#allocation14], 0
    %19 = vsyncpa [#allocation4], 0
    %s20 = scalar_lea.sflag [#allocation4], 1
    %21 = vsyncpa %s20, 0
    %22 = vsyncpa [#allocation17], 0
    %s23 = scalar_lea.sflag [#allocation17], 1
    %24 = vsyncpa %s23, 0
    loop: start=0, step=1, limit=6
    $region2: #{decoder_block.4} parent=1 // loop_pre_header
      _
    $region3: #{decoder_block.4} parent=1 // loop_header
      %s26 = sphi 0, %s30
      %p27 = scmp.ge.s32.totalorder %s26, 6
      %s33 = sphi 0, %s45
      %s34 = sphi 0, %s41
      %s35 = sphi 0, %s33
      %s36 = sphi 0, %s34
      %s37 = sphi 0, %s35
      %s38 = sphi 0, %s36
      %s46 = sphi 0, %s46
      %s48 = sphi 0, %s46
      %s49 = sphi 0, %s48
      %s63 = sphi 0, %s49
      %s67 = sphi 0, %s67
      %s69 = sphi 0, %s67
      %s70 = sphi 0, %s69
      %s84 = sphi 0, %s70
      %s92 = sphi 0, %s94
      %s95 = sphi 0, %s92
      %s96 = sphi 0, %s95
      %s112 = sphi 0, %s96
      %s128 = sphi 0, %s130
      %s131 = sphi 0, %s128
      %s132 = sphi 0, %s131
      %s148 = sphi 0, %s132
      %s152 = sphi 0, %s152
      %s154 = sphi 0, %s152
      %s155 = sphi 0, %s154
      %s169 = sphi 0, %s155
      %s173 = sphi 0, %s173
      %s175 = sphi 0, %s173
      %s176 = sphi 0, %s175
      %s190 = sphi 0, %s176
      %s194 = sphi 0, %s194
      %s196 = sphi 0, %s194
      %s197 = sphi 0, %s196
      %s211 = sphi 0, %s197
      %s215 = sphi 0, %s215
      %s217 = sphi 0, %s215
      %s218 = sphi 0, %s217
      %s232 = sphi 0, %s218
      %s240 = sphi 0, %s242
      %s243 = sphi 0, %s240
      %s244 = sphi 0, %s243
      %s260 = sphi 0, %s244
      %s268 = sphi 0, %s270
      %s271 = sphi 0, %s268
      %s272 = sphi 0, %s271
      %s288 = sphi 0, %s272
    $region4: #{decoder_block.4} parent=1 // loop_header_branch
      %29 = sbr.rel (%p27) target = $region8
    $region5: #{decoder_block.4} parent=1 // loop_body
      %s31 = ssub.s32 %s26, 1
      %s32 = ssub.s32 %s26, 2
      %s39 = sadd.s32 1, %s34
      %p40 = scmp.ge.s32.totalorder %s39, 2
      %s41 = scalar_select %p40, 0, %s39
      %s42 = sadd.s32 1, %s33
      %s43 = scalar_select %p40, %s42, %s33
      %p44 = scmp.ge.s32.totalorder %s43, 2
      %s45 = scalar_select %p44, 0, %s43
      %s47 = sadd.s32 %s46, 1
      %p50 = scmp.eq.s32.totalorder %s26, 3
      %p51 = scmp.ne.s32.totalorder %s46, %s48
      %p52 = scmp.eq.s32.totalorder %s26, 0
      %p53 = por %p51, %p52
      %p54 = scmp.ne.s32.totalorder %s46, %s48
      %p55 = scmp.eq.s32.totalorder %s31, 3
      %p56 = por %p54, %p55
      %p57 = scmp.ne.s32.totalorder %s48, %s49
      %p58 = scmp.eq.s32.totalorder %s31, 0
      %p59 = por %p57, %p58
      %p60 = scmp.ne.s32.totalorder %s48, %s49
      %p61 = scmp.eq.s32.totalorder %s32, 3
      %p62 = por %p60, %p61
      %p64 = scmp.ne.s32.totalorder %s49, %s63
      %p65 = scmp.eq.s32.totalorder %s32, 0
      %p66 = por %p64, %p65
      %s68 = sadd.s32 %s67, 1
      %p71 = scmp.eq.s32.totalorder %s26, 3
      %p72 = scmp.ne.s32.totalorder %s67, %s69
      %p73 = scmp.eq.s32.totalorder %s26, 0
      %p74 = por %p72, %p73
      %p75 = scmp.ne.s32.totalorder %s67, %s69
      %p76 = scmp.eq.s32.totalorder %s31, 3
      %p77 = por %p75, %p76
      %p78 = scmp.ne.s32.totalorder %s69, %s70
      %p79 = scmp.eq.s32.totalorder %s31, 0
      %p80 = por %p78, %p79
      %p81 = scmp.ne.s32.totalorder %s69, %s70
      %p82 = scmp.eq.s32.totalorder %s32, 3
      %p83 = por %p81, %p82
      %p85 = scmp.ne.s32.totalorder %s70, %s84
      %p86 = scmp.eq.s32.totalorder %s32, 0
      %p87 = por %p85, %p86
      %s88 = ssub.s32 %s33, %s45
      %s89 = ssub.s32 %s34, %s41
      %s90 = sor.u32 %s88, %s89
      %p91 = scmp.eq.s32.totalorder %s90, 0
      %s93 = sadd.s32 %s92, 1
      %s94 = scalar_select %p91, %s92, %s93
      %p97 = pneg %p91
      %p98 = scmp.eq.s32.totalorder %s26, 3
      %p99 = por %p97, %p98
      %p100 = scmp.ne.s32.totalorder %s92, %s95
      %p101 = scmp.eq.s32.totalorder %s26, 0
      %p102 = por %p100, %p101
      %p103 = scmp.ne.s32.totalorder %s92, %s95
      %p104 = scmp.eq.s32.totalorder %s31, 3
      %p105 = por %p103, %p104
      %p106 = scmp.ne.s32.totalorder %s95, %s96
      %p107 = scmp.eq.s32.totalorder %s31, 0
      %p108 = por %p106, %p107
      %p109 = scmp.ne.s32.totalorder %s95, %s96
      %p110 = scmp.eq.s32.totalorder %s32, 3
      %p111 = por %p109, %p110
      %p113 = scmp.ne.s32.totalorder %s96, %s112
      %p114 = scmp.eq.s32.totalorder %s32, 0
      %p115 = por %p113, %p114
      %s116 = sadd.s32 %s34, 1
      %s117 = smul.u32 %s116, 4
      %p118 = scmp.lt.s32.totalorder %s117, 7
      %s119 = scalar_select %p118, %s117, 7
      %s120 = sadd.s32 %s41, 1
      %s121 = smul.u32 %s120, 4
      %p122 = scmp.lt.s32.totalorder %s121, 7
      %s123 = scalar_select %p122, %s121, 7
      %s124 = ssub.s32 %s33, %s45
      %s125 = ssub.s32 %s119, %s123
      %s126 = sor.u32 %s124, %s125
      %p127 = scmp.eq.s32.totalorder %s126, 0
      %s129 = sadd.s32 %s128, 1
      %s130 = scalar_select %p127, %s128, %s129
      %p133 = pneg %p127
      %p134 = scmp.eq.s32.totalorder %s26, 3
      %p135 = por %p133, %p134
      %p136 = scmp.ne.s32.totalorder %s128, %s131
      %p137 = scmp.eq.s32.totalorder %s26, 0
      %p138 = por %p136, %p137
      %p139 = scmp.ne.s32.totalorder %s128, %s131
      %p140 = scmp.eq.s32.totalorder %s31, 3
      %p141 = por %p139, %p140
      %p142 = scmp.ne.s32.totalorder %s131, %s132
      %p143 = scmp.eq.s32.totalorder %s31, 0
      %p144 = por %p142, %p143
      %p145 = scmp.ne.s32.totalorder %s131, %s132
      %p146 = scmp.eq.s32.totalorder %s32, 3
      %p147 = por %p145, %p146
      %p149 = scmp.ne.s32.totalorder %s132, %s148
      %p150 = scmp.eq.s32.totalorder %s32, 0
      %p151 = por %p149, %p150
      %s153 = sadd.s32 %s152, 1
      %p156 = scmp.eq.s32.totalorder %s26, 3
      %p157 = scmp.ne.s32.totalorder %s152, %s154
      %p158 = scmp.eq.s32.totalorder %s26, 0
      %p159 = por %p157, %p158
      %p160 = scmp.ne.s32.totalorder %s152, %s154
      %p161 = scmp.eq.s32.totalorder %s31, 3
      %p162 = por %p160, %p161
      %p163 = scmp.ne.s32.totalorder %s154, %s155
      %p164 = scmp.eq.s32.totalorder %s31, 0
      %p165 = por %p163, %p164
      %p166 = scmp.ne.s32.totalorder %s154, %s155
      %p167 = scmp.eq.s32.totalorder %s32, 3
      %p168 = por %p166, %p167
      %p170 = scmp.ne.s32.totalorder %s155, %s169
      %p171 = scmp.eq.s32.totalorder %s32, 0
      %p172 = por %p170, %p171
      %s174 = sadd.s32 %s173, 1
      %p177 = scmp.eq.s32.totalorder %s26, 3
      %p178 = scmp.ne.s32.totalorder %s173, %s175
      %p179 = scmp.eq.s32.totalorder %s26, 0
      %p180 = por %p178, %p179
      %p181 = scmp.ne.s32.totalorder %s173, %s175
      %p182 = scmp.eq.s32.totalorder %s31, 3
      %p183 = por %p181, %p182
      %p184 = scmp.ne.s32.totalorder %s175, %s176
      %p185 = scmp.eq.s32.totalorder %s31, 0
      %p186 = por %p184, %p185
      %p187 = scmp.ne.s32.totalorder %s175, %s176
      %p188 = scmp.eq.s32.totalorder %s32, 3
      %p189 = por %p187, %p188
      %p191 = scmp.ne.s32.totalorder %s176, %s190
      %p192 = scmp.eq.s32.totalorder %s32, 0
      %p193 = por %p191, %p192
      %s195 = sadd.s32 %s194, 1
      %p198 = scmp.eq.s32.totalorder %s26, 3
      %p199 = scmp.ne.s32.totalorder %s194, %s196
      %p200 = scmp.eq.s32.totalorder %s26, 0
      %p201 = por %p199, %p200
      %p202 = scmp.ne.s32.totalorder %s194, %s196
      %p203 = scmp.eq.s32.totalorder %s31, 3
      %p204 = por %p202, %p203
      %p205 = scmp.ne.s32.totalorder %s196, %s197
      %p206 = scmp.eq.s32.totalorder %s31, 0
      %p207 = por %p205, %p206
      %p208 = scmp.ne.s32.totalorder %s196, %s197
      %p209 = scmp.eq.s32.totalorder %s32, 3
      %p210 = por %p208, %p209
      %p212 = scmp.ne.s32.totalorder %s197, %s211
      %p213 = scmp.eq.s32.totalorder %s32, 0
      %p214 = por %p212, %p213
      %s216 = sadd.s32 %s215, 1
      %p219 = scmp.eq.s32.totalorder %s26, 3
      %p220 = scmp.ne.s32.totalorder %s215, %s217
      %p221 = scmp.eq.s32.totalorder %s26, 0
      %p222 = por %p220, %p221
      %p223 = scmp.ne.s32.totalorder %s215, %s217
      %p224 = scmp.eq.s32.totalorder %s31, 3
      %p225 = por %p223, %p224
      %p226 = scmp.ne.s32.totalorder %s217, %s218
      %p227 = scmp.eq.s32.totalorder %s31, 0
      %p228 = por %p226, %p227
      %p229 = scmp.ne.s32.totalorder %s217, %s218
      %p230 = scmp.eq.s32.totalorder %s32, 3
      %p231 = por %p229, %p230
      %p233 = scmp.ne.s32.totalorder %s218, %s232
      %p234 = scmp.eq.s32.totalorder %s32, 0
      %p235 = por %p233, %p234
      %s236 = ssub.s32 %s33, %s45
      %s237 = ssub.s32 %s34, %s41
      %s238 = sor.u32 %s236, %s237
      %p239 = scmp.eq.s32.totalorder %s238, 0
      %s241 = sadd.s32 %s240, 1
      %s242 = scalar_select %p239, %s240, %s241
      %p245 = pneg %p239
      %p246 = scmp.eq.s32.totalorder %s26, 3
      %p247 = por %p245, %p246
      %p248 = scmp.ne.s32.totalorder %s240, %s243
      %p249 = scmp.eq.s32.totalorder %s26, 0
      %p250 = por %p248, %p249
      %p251 = scmp.ne.s32.totalorder %s240, %s243
      %p252 = scmp.eq.s32.totalorder %s31, 3
      %p253 = por %p251, %p252
      %p254 = scmp.ne.s32.totalorder %s243, %s244
      %p255 = scmp.eq.s32.totalorder %s31, 0
      %p256 = por %p254, %p255
      %p257 = scmp.ne.s32.totalorder %s243, %s244
      %p258 = scmp.eq.s32.totalorder %s32, 3
      %p259 = por %p257, %p258
      %p261 = scmp.ne.s32.totalorder %s244, %s260
      %p262 = scmp.eq.s32.totalorder %s32, 0
      %p263 = por %p261, %p262
      %s264 = ssub.s32 %s33, %s45
      %s265 = ssub.s32 %s34, %s41
      %s266 = sor.u32 %s264, %s265
      %p267 = scmp.eq.s32.totalorder %s266, 0
      %s269 = sadd.s32 %s268, 1
      %s270 = scalar_select %p267, %s268, %s269
      %p273 = pneg %p267
      %p274 = scmp.eq.s32.totalorder %s26, 3
      %p275 = por %p273, %p274
      %p276 = scmp.ne.s32.totalorder %s268, %s271
      %p277 = scmp.eq.s32.totalorder %s26, 0
      %p278 = por %p276, %p277
      %p279 = scmp.ne.s32.totalorder %s268, %s271
      %p280 = scmp.eq.s32.totalorder %s31, 3
      %p281 = por %p279, %p280
      %p282 = scmp.ne.s32.totalorder %s271, %s272
      %p283 = scmp.eq.s32.totalorder %s31, 0
      %p284 = por %p282, %p283
      %p285 = scmp.ne.s32.totalorder %s271, %s272
      %p286 = scmp.eq.s32.totalorder %s32, 3
      %p287 = por %p285, %p286
      %p289 = scmp.ne.s32.totalorder %s272, %s288
      %p290 = scmp.eq.s32.totalorder %s32, 0
      %p291 = por %p289, %p290
      %p292 = scmp.le.s32.totalorder 1, %s26
      %p293 = scmp.lt.s32.totalorder %s26, 5
      %p294 = pnand %p292, %p293
      %p295 = pneg %p294
      // Predicated region
      $region9: #{decoder_block.4} parent=5 // pred_check
        _
      $region10: #{decoder_block.4} parent=5 // pred_check_branch
        %297 = sbr.rel (%p294) target = $region12
      $region11: #{decoder_block.4} parent=5 // pred_region
        %s298 = ssub.s32 %s26, 1
        // Predicated region
        $region13: #{decoder_block.4} parent=11 // pred_check
          %p299 = pneg %p59
        $region14: #{decoder_block.4} parent=11 // pred_check_branch
          %301 = sbr.rel (%p299) target = $region16
        $region15: #{decoder_block.4} parent=11 // pred_region
          %s303 = ssub.s32 16, 16
          %304 = vsyncadd [#allocation3], %s303
          %s306 = sshll.u32 [#allocation2], 4
          %s307 = int_to_ptr.vmem [resolvable:$true] %s306
          %309 = dma.hbm_to_vmem [thread:$0]  %s0, 16, %s307, [#allocation3]
        $region16: #{decoder_block.4} parent=11 // pred_fallthru
          _
        // Predicated region
        $region17: #{decoder_block.4} parent=11 // pred_check
          %p310 = pneg %p80
        $region18: #{decoder_block.4} parent=11 // pred_check_branch
          %312 = sbr.rel (%p310) target = $region20
        $region19: #{decoder_block.4} parent=11 // pred_region
          %s314 = ssub.s32 16, 16
          %315 = vsyncadd [#allocation6], %s314
          %s317 = sshll.u32 [#allocation5], 4
          %s318 = int_to_ptr.vmem [resolvable:$true] %s317
          %320 = dma.hbm_to_vmem [thread:$0]  %s1, 16, %s318, [#allocation6]
        $region20: #{decoder_block.4} parent=11 // pred_fallthru
          _
        // Predicated region
        $region21: #{decoder_block.4} parent=11 // pred_check
          %p321 = pneg %p165
        $region22: #{decoder_block.4} parent=11 // pred_check_branch
          %323 = sbr.rel (%p321) target = $region24
        $region23: #{decoder_block.4} parent=11 // pred_region
          %s325 = ssub.s32 64, 64
          %326 = vsyncadd [#allocation6], %s325
          %s328 = sshll.u32 [#allocation9], 4
          %s329 = int_to_ptr.vmem [resolvable:$true] %s328
          %331 = dma.hbm_to_vmem [thread:$0]  %s4, 64, %s329, [#allocation6]
        $region24: #{decoder_block.4} parent=11 // pred_fallthru
          _
        // Predicated region
        $region25: #{decoder_block.4} parent=11 // pred_check
          %p332 = pneg %p186
        $region26: #{decoder_block.4} parent=11 // pred_check_branch
          %334 = sbr.rel (%p332) target = $region28
        $region27: #{decoder_block.4} parent=11 // pred_region
          %s336 = ssub.s32 128, 128
          %337 = vsyncadd [#allocation11], %s336
          %s338 = sshll.u32 [#allocation10], 4
          %s339 = int_to_ptr.vmem [resolvable:$true] %s338
          %344 = dma.hbm_to_vmem [thread:$0]  %s5, 128, %s339, [#allocation11], 64, 64, 4
        $region28: #{decoder_block.4} parent=11 // pred_fallthru
          _
        // Predicated region
        $region29: #{decoder_block.4} parent=11 // pred_check
          %p345 = pneg %p207
        $region30: #{decoder_block.4} parent=11 // pred_check_branch
          %347 = sbr.rel (%p345) target = $region32
        $region31: #{decoder_block.4} parent=11 // pred_region
          %s349 = ssub.s32 128, 128
          %350 = vsyncadd [#allocation11], %s349
          %s351 = sshll.u32 [#allocation12], 4
          %s352 = int_to_ptr.vmem [resolvable:$true] %s351
          %357 = dma.hbm_to_vmem [thread:$0]  %s6, 128, %s352, [#allocation11], 64, 64, 4
        $region32: #{decoder_block.4} parent=11 // pred_fallthru
          _
        // Predicated region
        $region33: #{decoder_block.4} parent=11 // pred_check
          %p358 = pneg %p228
        $region34: #{decoder_block.4} parent=11 // pred_check_branch
          %360 = sbr.rel (%p358) target = $region36
        $region35: #{decoder_block.4} parent=11 // pred_region
          %s362 = ssub.s32 256, 256
          %363 = vsyncadd [#allocation14], %s362
          %s364 = sshll.u32 [#allocation13], 4
          %s365 = int_to_ptr.vmem [resolvable:$true] %s364
          %370 = dma.hbm_to_vmem [thread:$0]  %s7, 256, %s365, [#allocation14], 64, 64, 4
        $region36: #{decoder_block.4} parent=11 // pred_fallthru
          _
      $region12: #{decoder_block.4} parent=5 // pred_fallthru
        _
      %p371 = scmp.lt.s32.totalorder %s26, 4
      // Predicated region
      $region37: #{decoder_block.4} parent=5 // pred_check
        %p372 = pneg %p371
      $region38: #{decoder_block.4} parent=5 // pred_check_branch
        %374 = sbr.rel (%p372) target = $region40
      $region39: #{decoder_block.4} parent=5 // pred_region
        // Predicated region
        $region41: #{decoder_block.4} parent=39 // pred_check
          %p375 = pneg %p102
        $region42: #{decoder_block.4} parent=39 // pred_check_branch
          %377 = sbr.rel (%p375) target = $region44
        $region43: #{decoder_block.4} parent=39 // pred_region
          %s378 = sand.u32 %s26, 1
          %s379 = scalar_lea.sflag [#allocation3], %s378
          %s380 = sand.u32 %s92, 1
          %s381 = smul.addr %s380, 16
          %s382 = scalar_lea.vmem [#allocation7], %s381
          %s383 = smul.u32 4, %s34
          %s385 = ssub.s32 256, 256
          %386 = vsyncadd %s379, %s385
          %s387 = smul.addr %s33, 8
          %s388 = sadd.s32 %s383, %s387
          %s389 = smul.addr %s388, 64
          %s390 = scalar_lea.hbm %s2, %s389
          %s391 = sshll.u32 %s382, 4
          %s392 = int_to_ptr.vmem [resolvable:$true] %s391
          %397 = dma.hbm_to_vmem [thread:$0]  %s390, 256, %s392, %s379, 64, 64, 4
        $region44: #{decoder_block.4} parent=39 // pred_fallthru
          _
        // Predicated region
        $region45: #{decoder_block.4} parent=39 // pred_check
          %p398 = pneg %p138
        $region46: #{decoder_block.4} parent=39 // pred_check_branch
          %400 = sbr.rel (%p398) target = $region48
        $region47: #{decoder_block.4} parent=39 // pred_region
          %s401 = sand.u32 %s26, 1
          %s402 = scalar_lea.sflag [#allocation3], %s401
          %s403 = sand.u32 %s128, 1
          %s404 = smul.addr %s403, 4
          %s405 = scalar_lea.vmem [#allocation8], %s404
          %s406 = sadd.s32 %s34, 1
          %s407 = smul.u32 %s406, 4
          %p408 = scmp.lt.s32.totalorder %s407, 7
          %s409 = scalar_select %p408, %s407, 7
          %s411 = ssub.s32 64, 64
          %412 = vsyncadd %s402, %s411
          %s413 = smul.addr %s33, 8
          %s414 = sadd.s32 %s409, %s413
          %s415 = smul.addr %s414, 64
          %s416 = scalar_lea.hbm %s3, %s415
          %s418 = sshll.u32 %s405, 4
          %s419 = int_to_ptr.vmem [resolvable:$true] %s418
          %421 = dma.hbm_to_vmem [thread:$0]  %s416, 64, %s419, %s402
        $region48: #{decoder_block.4} parent=39 // pred_fallthru
          _
      $region40: #{decoder_block.4} parent=5 // pred_fallthru
        _
      %p422 = scmp.le.s32.totalorder 1, %s26
      %p423 = scmp.lt.s32.totalorder %s26, 5
      %p424 = pnand %p422, %p423
      %p425 = pneg %p424
      // Predicated region
      $region49: #{decoder_block.4} parent=5 // pred_check
        _
      $region50: #{decoder_block.4} parent=5 // pred_check_branch
        %427 = sbr.rel (%p424) target = $region52
      $region51: #{decoder_block.4} parent=5 // pred_region
        %s428 = ssub.s32 %s26, 1
        // Predicated region
        $region53: #{decoder_block.4} parent=51 // pred_check
          %p429 = pneg %p59
        $region54: #{decoder_block.4} parent=51 // pred_check_branch
          %431 = sbr.rel (%p429) target = $region56
        $region55: #{decoder_block.4} parent=51 // pred_region
          %432 = dma.done [#allocation3], 16
        $region56: #{decoder_block.4} parent=51 // pred_fallthru
          _
        // Predicated region
        $region57: #{decoder_block.4} parent=51 // pred_check
          %p433 = pneg %p80
        $region58: #{decoder_block.4} parent=51 // pred_check_branch
          %435 = sbr.rel (%p433) target = $region60
        $region59: #{decoder_block.4} parent=51 // pred_region
          %436 = dma.done [#allocation6], 16
        $region60: #{decoder_block.4} parent=51 // pred_fallthru
          _
        %s437 = sand.u32 %s31, 1
        %s438 = scalar_lea.sflag [#allocation3], %s437
        %s439 = sand.u32 %s95, 1
        %s440 = smul.addr %s439, 16
        %s441 = scalar_lea.vmem [#allocation7], %s440
        // Predicated region
        $region61: #{decoder_block.4} parent=51 // pred_check
          %p442 = pneg %p108
        $region62: #{decoder_block.4} parent=51 // pred_check_branch
          %444 = sbr.rel (%p442) target = $region64
        $region63: #{decoder_block.4} parent=51 // pred_region
          %445 = dma.done %s438, 256
        $region64: #{decoder_block.4} parent=51 // pred_fallthru
          _
        %s446 = sand.u32 %s31, 1
        %s447 = scalar_lea.sflag [#allocation3], %s446
        %s448 = sand.u32 %s131, 1
        %s449 = smul.addr %s448, 4
        %s450 = scalar_lea.vmem [#allocation8], %s449
        // Predicated region
        $region65: #{decoder_block.4} parent=51 // pred_check
          %p451 = pneg %p144
        $region66: #{decoder_block.4} parent=51 // pred_check_branch
          %453 = sbr.rel (%p451) target = $region68
        $region67: #{decoder_block.4} parent=51 // pred_region
          %454 = dma.done %s447, 64
        $region68: #{decoder_block.4} parent=51 // pred_fallthru
          _
        // Predicated region
        $region69: #{decoder_block.4} parent=51 // pred_check
          %p455 = pneg %p165
        $region70: #{decoder_block.4} parent=51 // pred_check_branch
          %457 = sbr.rel (%p455) target = $region72
        $region71: #{decoder_block.4} parent=51 // pred_region
          %458 = dma.done [#allocation6], 64
        $region72: #{decoder_block.4} parent=51 // pred_fallthru
          _
        // Predicated region
        $region73: #{decoder_block.4} parent=51 // pred_check
          %p459 = pneg %p186
        $region74: #{decoder_block.4} parent=51 // pred_check_branch
          %461 = sbr.rel (%p459) target = $region76
        $region75: #{decoder_block.4} parent=51 // pred_region
          %462 = dma.done [#allocation11], 128
        $region76: #{decoder_block.4} parent=51 // pred_fallthru
          _
        // Predicated region
        $region77: #{decoder_block.4} parent=51 // pred_check
          %p463 = pneg %p207
        $region78: #{decoder_block.4} parent=51 // pred_check_branch
          %465 = sbr.rel (%p463) target = $region80
        $region79: #{decoder_block.4} parent=51 // pred_region
          %466 = dma.done [#allocation11], 128
        $region80: #{decoder_block.4} parent=51 // pred_fallthru
          _
        // Predicated region
        $region81: #{decoder_block.4} parent=51 // pred_check
          %p467 = pneg %p228
        $region82: #{decoder_block.4} parent=51 // pred_check_branch
          %469 = sbr.rel (%p467) target = $region84
        $region83: #{decoder_block.4} parent=51 // pred_region
          %470 = dma.done [#allocation14], 256
        $region84: #{decoder_block.4} parent=51 // pred_fallthru
          _
        %p471 = pneg %p59
        %p472 = pneg %p56
        %p473 = pneg %p80
        %p474 = pneg %p77
        %s475 = sand.u32 %s31, 1
        %s476 = scalar_lea.sflag [#allocation3], %s475
        %s477 = sand.u32 %s95, 1
        %s478 = smul.addr %s477, 16
        %s479 = scalar_lea.vmem [#allocation7], %s478
        %p480 = pneg %p108
        %p481 = pneg %p105
        %s482 = sand.u32 %s31, 1
        %s483 = scalar_lea.sflag [#allocation3], %s482
        %s484 = sand.u32 %s131, 1
        %s485 = smul.addr %s484, 4
        %s486 = scalar_lea.vmem [#allocation8], %s485
        %p487 = pneg %p144
        %p488 = pneg %p141
        %p489 = pneg %p165
        %p490 = pneg %p162
        %p491 = pneg %p186
        %p492 = pneg %p183
        %p493 = pneg %p207
        %p494 = pneg %p204
        %p495 = pneg %p228
        %p496 = pneg %p225
        %p497 = pneg %p256
        %p498 = pneg %p253
        %s499 = sand.u32 %s243, 1
        %s500 = scalar_lea.sflag [#allocation4], %s499
        %s501 = sand.u32 %s243, 1
        %s502 = smul.addr %s501, 16
        %s503 = scalar_lea.vmem [#allocation15], %s502
        %p504 = pneg %p284
        %p505 = pneg %p281
        %s506 = sand.u32 %s271, 1
        %s507 = scalar_lea.sflag [#allocation17], %s506
        %s508 = sand.u32 %s271, 1
        %s509 = smul.addr %s508, 2
        %s510 = scalar_lea.vmem [#allocation16], %s509
        %s511 = smul.u32 4, %s36
        %s512 = sadd.s32 %s36, 1
        %s513 = smul.u32 %s512, 4
        %p514 = scmp.lt.s32.totalorder %s513, 7
        %s515 = scalar_select %p514, %s513, 7
        %s516 = smul.u32 4, %s36
        %v518 = vld [vmem:[#allocation2] sm:$0x1]
        %v519 = vld [vmem:[#allocation5] sm:$0x1]
        %v520 = vld [vmem:[%s441] sm:$0xf]
        %v521 = vld [vmem:[%s441 + $0x4] sm:$0xf]
        %v522 = vld [vmem:[%s441 + $0x8] sm:$0xf]
        %v523 = vld [vmem:[%s441 + $0xc] sm:$0xf]
        %v524 = vunpack.c.l.bf16 %v520
        %v525 = vunpack.c.l.bf16 %v521
        %v526 = vunpack.c.l.bf16 %v522
        %v527 = vunpack.c.l.bf16 %v523
        %v528 = vld [vmem:[%s450] sm:$0xf]
        %v529 = vunpack.c.l.bf16 %v528
        %v531 = vlaneseq
        %v532 = vshrl.u32 %v531, 7
        %v533 = vsub.s32 0, %v532
        %v534 = vrot.slane %v518, %v533
        %v536 = vmul.f32 %v524, %v534
        %v537 = vmul.f32 %v525, %v534
        %v538 = vmul.f32 %v526, %v534
        %v539 = vmul.f32 %v527, %v534
        %v541 = vlaneseq
        %v542 = vshrl.u32 %v541, 7
        %v543 = vsub.s32 0, %v542
        %v544 = vrot.slane %v519, %v543
        %v546 = vadd.f32 %v536, %v544
        %v547 = vadd.f32 %v537, %v544
        %v548 = vadd.f32 %v538, %v544
        %v549 = vadd.f32 %v539, %v544
        %v550 = vmax.f32 %v546, 0.0
        %v551 = vmax.f32 %v547, 0.0
        %v552 = vmax.f32 %v548, 0.0
        %v553 = vmax.f32 %v549, 0.0
        %v554 = vmul.f32 %v529, %v534
        %v555 = vadd.f32 %v554, %v544
        %v556 = vmax.f32 %v555, 0.0
        %s557 = sadd.s32 %s36, 1
        %s558 = smul.u32 %s557, 4
        %p559 = scmp.lt.s32.totalorder %s558, 8
        %s560 = scalar_select %p559, 1, 0
        %s561 = scvt.s32.f32 %s560
        %v562 = vstv %s561
        %v563 = vmul.f32 %v556, %v562
        %v564 = vpack.c.bf16 %v550, %v550
        %v565 = vpack.c.bf16 %v551, %v551
        %v566 = vpack.c.bf16 %v552, %v552
        %v567 = vpack.c.bf16 %v553, %v553
        %v568 = vpack.c.bf16 %v563, %v563
        %vm569 = vcmask 1043456
        %v572 = vsel %vm569, %v564, 0
        %v574 = vsel %vm569, %v565, 0
        %v576 = vsel %vm569, %v566, 0
        %v578 = vsel %vm569, %v567, 0
        %v580 = vsel %vm569, %v568, 0
        %585 = vrot.lane.b32.xlu0 %v572, 8
        %v586 = vpop.permute.xlu0 %585
        %587 = vrot.lane.b32.xlu0 %v574, 8
        %v588 = vpop.permute.xlu0 %587
        %589 = vrot.lane.b32.xlu0 %v576, 8
        %v590 = vpop.permute.xlu0 %589
        %591 = vrot.lane.b32.xlu0 %v578, 8
        %v592 = vpop.permute.xlu0 %591
        %v593 = vshrl.u32 %v572, 16
        %v595 = vshll.u32 %v572, 16
        %v597 = vrot.slane %v595, 1
        %v598 = vor.u32 %v593, %v597
        %v599 = vshrl.u32 %v574, 16
        %v601 = vshll.u32 %v574, 16
        %v603 = vrot.slane %v601, 1
        %v604 = vor.u32 %v599, %v603
        %v605 = vshrl.u32 %v576, 16
        %v607 = vshll.u32 %v576, 16
        %v609 = vrot.slane %v607, 1
        %v610 = vor.u32 %v605, %v609
        %v611 = vshrl.u32 %v578, 16
        %v613 = vshll.u32 %v578, 16
        %v615 = vrot.slane %v613, 1
        %v616 = vor.u32 %v611, %v615
        %617 = vrot.lane.b32.xlu0 %v598, 16
        %v618 = vpop.permute.xlu0 %617
        %619 = vrot.lane.b32.xlu0 %v604, 16
        %v620 = vpop.permute.xlu0 %619
        %621 = vrot.lane.b32.xlu0 %v610, 16
        %v622 = vpop.permute.xlu0 %621
        %623 = vrot.lane.b32.xlu0 %v616, 16
        %v624 = vpop.permute.xlu0 %623
        %v625 = vshrl.u32 %v580, 16
        %v627 = vshll.u32 %v580, 16
        %v629 = vrot.slane %v627, 1
        %v630 = vor.u32 %v625, %v629
        %631 = vrot.lane.b32.xlu0 %v604, 24
        %v632 = vpop.permute.xlu0 %631
        %633 = vrot.lane.b32.xlu0 %v610, 24
        %v634 = vpop.permute.xlu0 %633
        %635 = vrot.lane.b32.xlu0 %v616, 24
        %v636 = vpop.permute.xlu0 %635
        %637 = vrot.lane.b32.xlu0 %v630, 24
        %v638 = vpop.permute.xlu0 %637
        %vm639 = vcmask 64512
        %v641 = vsel %vm639, %v574, %v586
        %v643 = vsel %vm639, %v576, %v588
        %v645 = vsel %vm639, %v578, %v590
        %v647 = vsel %vm639, %v580, %v592
        %vm648 = vcmask 130048
        %v650 = vsel %vm648, %v641, %v618
        %v652 = vsel %vm648, %v643, %v620
        %v654 = vsel %vm648, %v645, %v622
        %v656 = vsel %vm648, %v647, %v624
        %vm657 = vcmask 195584
        %v659 = vsel %vm657, %v650, %v632
        %v661 = vsel %vm657, %v652, %v634
        %v663 = vsel %vm657, %v654, %v636
        %v665 = vsel %vm657, %v656, %v638
        %v666 = vld [vmem:[#allocation9] sm:$0xf]
        %v671 = vunpack.c.l.b16 %v659
        %v672 = vunpack.c.l.b16 %v661
        %v673 = vunpack.c.l.b16 %v663
        %v674 = vunpack.c.l.b16 %v665
        %v675 = vpack.c.b16 %v672, %v671
        %v676 = vpack.c.b16 %v674, %v673
        %677 = vrot.lane.b32.xlu0 %v675, 120
        %v678 = vpop.permute.xlu0 %677
        %679 = vrot.lane.b32.xlu0 %v676, 120
        %v680 = vpop.permute.xlu0 %679
        %v682 = vsel %vm639, %v678, 0
        %v685 = vsel %vm639, %v680, 0
        %v688 = vsel %vm569, %v666, 0
        %690 = vmatprep.subr.bf16.mxu0 0
        %691 = vmatpush1.bf16.msra.mxu0 %v688
        %692 = vmatprep.subr.bf16.mxu0 0
        %693 = vmatpush1.bf16.msra.mxu0 0
        %694 = vmatprep.subr.bf16.mxu0 0
        %695 = vmatpush1.bf16.msra.mxu0 0
        %696 = vmatprep.subr.bf16.mxu0 0
        %697 = vmatpush1.bf16.msra.mxu0 0
        %698 = vmatprep.subr.bf16.mxu0 0
        %699 = vmatpush1.bf16.msra.mxu0 0
        %700 = vmatprep.subr.bf16.mxu0 0
        %701 = vmatpush1.bf16.msra.mxu0 0
        %702 = vmatprep.subr.bf16.mxu0 0
        %703 = vmatpush1.bf16.msra.mxu0 0
        %704 = vmatprep.subr.bf16.mxu0 0
        %705 = vmatpush1.bf16.msra.mxu0 0
        %706 = vmatprep.subr.bf16.mxu0 0
        %707 = vmatpush1.bf16.msra.mxu0 0
        %708 = vmatprep.subr.bf16.mxu0 0
        %709 = vmatpush1.bf16.msra.mxu0 0
        %710 = vmatprep.subr.bf16.mxu0 0
        %711 = vmatpush1.bf16.msra.mxu0 0
        %712 = vmatprep.subr.bf16.mxu0 0
        %713 = vmatpush1.bf16.msra.mxu0 0
        %714 = vmatprep.subr.bf16.mxu0 0
        %715 = vmatpush1.bf16.msra.mxu0 0
        %716 = vmatprep.subr.bf16.mxu0 0
        %717 = vmatpush1.bf16.msra.mxu0 0
        %718 = vmatprep.subr.bf16.mxu0 0
        %719 = vmatpush1.bf16.msra.mxu0 0
        %720 = vmatprep.subr.bf16.mxu0 0
        %721 = vmatpush1.bf16.msra.mxu0 0
        %722 = vmatprep.mubr.bf16.mxu0 0
        %723 = vmatmul.mubr.bf16.gmra.mrb[0].mxu0 %v682
        %v724 = vpop.f32.mrb[0].mxu0
        %v725 = vadd.f32 0.0, %v724
        %v726 = vpop.f32.mrb[0].mxu0
        %v727 = vpop.f32.mrb[0].mxu0
        %v728 = vadd.f32 0.0, %v727
        %v729 = vpop.f32.mrb[0].mxu0
        %730 = vmatprep.mubr.bf16.mxu0 0
        %731 = vmatmul.mubr.bf16.gmra.mrb[0].mxu0 %v685
        %v732 = vpop.f32.mrb[0].mxu0
        %v733 = vadd.f32 0.0, %v732
        %v734 = vpop.f32.mrb[0].mxu0
        %v735 = vpop.f32.mrb[0].mxu0
        %v736 = vadd.f32 0.0, %v735
        %v737 = vpop.f32.mrb[0].mxu0
        %738 = vdwg.mxu0
        %v739 = vld [vmem:[#allocation10] sm:$0xf]
        %v740 = vld [vmem:[#allocation10 + $0x4] sm:$0xf]
        %v743 = vunpack.c.l.b16 %v739
        %v744 = vunpack.c.l.b16 %v740
        %v745 = vpack.c.b16 %v744, %v743
        %v747 = vsel %vm648, %v678, 0
        %v749 = vsel %vm648, %v680, 0
        %751 = vmatprep.subr.bf16.mxu0 0
        %752 = vmatpush1.bf16.msra.mxu0 %v745
        %753 = vmatprep.subr.bf16.mxu0 0
        %754 = vmatpush1.bf16.msra.mxu0 0
        %755 = vmatprep.subr.bf16.mxu0 0
        %756 = vmatpush1.bf16.msra.mxu0 0
        %757 = vmatprep.subr.bf16.mxu0 0
        %758 = vmatpush1.bf16.msra.mxu0 0
        %759 = vmatprep.subr.bf16.mxu0 0
        %760 = vmatpush1.bf16.msra.mxu0 0
        %761 = vmatprep.subr.bf16.mxu0 0
        %762 = vmatpush1.bf16.msra.mxu0 0
        %763 = vmatprep.subr.bf16.mxu0 0
        %764 = vmatpush1.bf16.msra.mxu0 0
        %765 = vmatprep.subr.bf16.mxu0 0
        %766 = vmatpush1.bf16.msra.mxu0 0
        %767 = vmatprep.subr.bf16.mxu0 0
        %768 = vmatpush1.bf16.msra.mxu0 0
        %769 = vmatprep.subr.bf16.mxu0 0
        %770 = vmatpush1.bf16.msra.mxu0 0
        %771 = vmatprep.subr.bf16.mxu0 0
        %772 = vmatpush1.bf16.msra.mxu0 0
        %773 = vmatprep.subr.bf16.mxu0 0
        %774 = vmatpush1.bf16.msra.mxu0 0
        %775 = vmatprep.subr.bf16.mxu0 0
        %776 = vmatpush1.bf16.msra.mxu0 0
        %777 = vmatprep.subr.bf16.mxu0 0
        %778 = vmatpush1.bf16.msra.mxu0 0
        %779 = vmatprep.subr.bf16.mxu0 0
        %780 = vmatpush1.bf16.msra.mxu0 0
        %781 = vmatprep.subr.bf16.mxu0 0
        %782 = vmatpush1.bf16.msra.mxu0 0
        %783 = vmatprep.mubr.bf16.mxu0 0
        %784 = vmatmul.mubr.bf16.gmra.mrb[0].mxu0 %v747
        %v785 = vpop.f32.mrb[0].mxu0
        %v786 = vadd.f32 0.0, %v785
        %v787 = vpop.f32.mrb[0].mxu0
        %v788 = vpop.f32.mrb[0].mxu0
        %v789 = vadd.f32 0.0, %v788
        %v790 = vpop.f32.mrb[0].mxu0
        %791 = vmatprep.mubr.bf16.mxu0 0
        %792 = vmatmul.mubr.bf16.gmra.mrb[0].mxu0 %v749
        %v793 = vpop.f32.mrb[0].mxu0
        %v794 = vadd.f32 0.0, %v793
        %v795 = vpop.f32.mrb[0].mxu0
        %v796 = vpop.f32.mrb[0].mxu0
        %v797 = vadd.f32 0.0, %v796
        %v798 = vpop.f32.mrb[0].mxu0
        %799 = vdwg.mxu0
        %v800 = vld [vmem:[#allocation12] sm:$0xf]
        %v801 = vld [vmem:[#allocation12 + $0x4] sm:$0xf]
        %v804 = vunpack.c.l.b16 %v800
        %v805 = vunpack.c.l.b16 %v801
        %v806 = vpack.c.b16 %v805, %v804
        %v809 = vsel %vm648, %v675, 0
        %v812 = vsel %vm648, %v676, 0
        %814 = vmatprep.subr.bf16.mxu0 0
        %815 = vmatpush1.bf16.msra.mxu0 %v806
        %816 = vmatprep.subr.bf16.mxu0 0
        %817 = vmatpush1.bf16.msra.mxu0 0
        %818 = vmatprep.subr.bf16.mxu0 0
        %819 = vmatpush1.bf16.msra.mxu0 0
        %820 = vmatprep.subr.bf16.mxu0 0
        %821 = vmatpush1.bf16.msra.mxu0 0
        %822 = vmatprep.subr.bf16.mxu0 0
        %823 = vmatpush1.bf16.msra.mxu0 0
        %824 = vmatprep.subr.bf16.mxu0 0
        %825 = vmatpush1.bf16.msra.mxu0 0
        %826 = vmatprep.subr.bf16.mxu0 0
        %827 = vmatpush1.bf16.msra.mxu0 0
        %828 = vmatprep.subr.bf16.mxu0 0
        %829 = vmatpush1.bf16.msra.mxu0 0
        %830 = vmatprep.subr.bf16.mxu0 0
        %831 = vmatpush1.bf16.msra.mxu0 0
        %832 = vmatprep.subr.bf16.mxu0 0
        %833 = vmatpush1.bf16.msra.mxu0 0
        %834 = vmatprep.subr.bf16.mxu0 0
        %835 = vmatpush1.bf16.msra.mxu0 0
        %836 = vmatprep.subr.bf16.mxu0 0
        %837 = vmatpush1.bf16.msra.mxu0 0
        %838 = vmatprep.subr.bf16.mxu0 0
        %839 = vmatpush1.bf16.msra.mxu0 0
        %840 = vmatprep.subr.bf16.mxu0 0
        %841 = vmatpush1.bf16.msra.mxu0 0
        %842 = vmatprep.subr.bf16.mxu0 0
        %843 = vmatpush1.bf16.msra.mxu0 0
        %844 = vmatprep.subr.bf16.mxu0 0
        %845 = vmatpush1.bf16.msra.mxu0 0
        %846 = vmatprep.mubr.bf16.mxu0 0
        %847 = vmatmul.mubr.bf16.gmra.mrb[0].mxu0 %v809
        %v848 = vpop.f32.mrb[0].mxu0
        %v849 = vadd.f32 0.0, %v848
        %v850 = vpop.f32.mrb[0].mxu0
        %v851 = vpop.f32.mrb[0].mxu0
        %v852 = vadd.f32 0.0, %v851
        %v853 = vpop.f32.mrb[0].mxu0
        %854 = vmatprep.mubr.bf16.mxu0 0
        %855 = vmatmul.mubr.bf16.gmra.mrb[0].mxu0 %v812
        %v856 = vpop.f32.mrb[0].mxu0
        %v857 = vadd.f32 0.0, %v856
        %v858 = vpop.f32.mrb[0].mxu0
        %v859 = vpop.f32.mrb[0].mxu0
        %v860 = vadd.f32 0.0, %v859
        %v861 = vpop.f32.mrb[0].mxu0
        %862 = vdwg.mxu0
        %v863 = vld [vmem:[#allocation13] sm:$0xf]
        %v864 = vld [vmem:[#allocation13 + $0x4] sm:$0xf]
        %v865 = vld [vmem:[#allocation13 + $0x8] sm:$0xf]
        %v866 = vld [vmem:[#allocation13 + $0xc] sm:$0xf]
        %v871 = vunpack.c.l.b16 %v863
        %v872 = vunpack.c.l.b16 %v864
        %v873 = vunpack.c.l.b16 %v865
        %v874 = vunpack.c.l.b16 %v866
        %v875 = vpack.c.b16 %v872, %v871
        %v876 = vpack.c.b16 %v874, %v873
        %vm879 = vcmask 261120
        %v880 = vsel %vm879, %v675, 0
        %v882 = vsel %vm879, %v676, 0
        %884 = vmatprep.subr.bf16.mxu0 0
        %885 = vmatpush1.bf16.msra.mxu0 %v875
        %886 = vmatprep.subr.bf16.mxu0 0
        %887 = vmatpush1.bf16.msra.mxu0 %v876
        %888 = vmatprep.subr.bf16.mxu0 0
        %889 = vmatpush1.bf16.msra.mxu0 0
        %890 = vmatprep.subr.bf16.mxu0 0
        %891 = vmatpush1.bf16.msra.mxu0 0
        %892 = vmatprep.subr.bf16.mxu0 0
        %893 = vmatpush1.bf16.msra.mxu0 0
        %894 = vmatprep.subr.bf16.mxu0 0
        %895 = vmatpush1.bf16.msra.mxu0 0
        %896 = vmatprep.subr.bf16.mxu0 0
        %897 = vmatpush1.bf16.msra.mxu0 0
        %898 = vmatprep.subr.bf16.mxu0 0
        %899 = vmatpush1.bf16.msra.mxu0 0
        %900 = vmatprep.subr.bf16.mxu0 0
        %901 = vmatpush1.bf16.msra.mxu0 0
        %902 = vmatprep.subr.bf16.mxu0 0
        %903 = vmatpush1.bf16.msra.mxu0 0
        %904 = vmatprep.subr.bf16.mxu0 0
        %905 = vmatpush1.bf16.msra.mxu0 0
        %906 = vmatprep.subr.bf16.mxu0 0
        %907 = vmatpush1.bf16.msra.mxu0 0
        %908 = vmatprep.subr.bf16.mxu0 0
        %909 = vmatpush1.bf16.msra.mxu0 0
        %910 = vmatprep.subr.bf16.mxu0 0
        %911 = vmatpush1.bf16.msra.mxu0 0
        %912 = vmatprep.subr.bf16.mxu0 0
        %913 = vmatpush1.bf16.msra.mxu0 0
        %914 = vmatprep.subr.bf16.mxu0 0
        %915 = vmatpush1.bf16.msra.mxu0 0
        %916 = vmatprep.mubr.bf16.mxu0 0
        %917 = vmatmul.mubr.bf16.gmra.mrb[0].mxu0 %v880
        %v918 = vpop.f32.mrb[0].mxu0
        %v919 = vadd.f32 0.0, %v918
        %v920 = vpop.f32.mrb[0].mxu0
        %v921 = vpop.f32.mrb[0].mxu0
        %v922 = vadd.f32 0.0, %v921
        %v923 = vpop.f32.mrb[0].mxu0
        %924 = vmatprep.mubr.bf16.mxu0 0
        %925 = vmatmul.mubr.bf16.gmra.mrb[0].mxu0 %v882
        %v926 = vpop.f32.mrb[0].mxu0
        %v927 = vadd.f32 0.0, %v926
        %v928 = vpop.f32.mrb[0].mxu0
        %v929 = vpop.f32.mrb[0].mxu0
        %v930 = vadd.f32 0.0, %v929
        %v931 = vpop.f32.mrb[0].mxu0
        %932 = vdwg.mxu0
        %v933 = vadd.f32 %v725, %v786
        %v934 = vadd.f32 %v728, %v789
        %v935 = vadd.f32 %v733, %v794
        %v936 = vadd.f32 %v736, %v797
        %v937 = vadd.f32 %v933, %v849
        %v938 = vadd.f32 %v934, %v852
        %v939 = vadd.f32 %v935, %v857
        %v940 = vadd.f32 %v936, %v860
        %v941 = vadd.f32 %v937, %v919
        %v942 = vadd.f32 %v938, %v922
        %v943 = vadd.f32 %v939, %v927
        %v944 = vadd.f32 %v940, %v930
        %v945 = vsel %vm639, %v941, 0.0
        %v946 = vsel %vm639, %v942, 0.0
        %v947 = vadd.f32 %v945, %v946
        %v948 = vsel %vm639, %v943, 0.0
        %v949 = vadd.f32 %v947, %v948
        %v950 = vsel %vm639, %v944, 0.0
        %v951 = vadd.f32 %v949, %v950
        %v952 = vrot.slane %v951, 4
        %v953 = vadd.f32 %v951, %v952
        %v954 = vrot.slane %v953, 2
        %v955 = vadd.f32 %v953, %v954
        %v956 = vrot.slane %v955, 1
        %v957 = vadd.f32 %v955, %v956
        %v958 = vmul.f32 %v957, 0.0078125
        %v959 = vsub.f32 %v725, %v958
        %v960 = vsub.f32 %v728, %v958
        %v961 = vsub.f32 %v733, %v958
        %v962 = vsub.f32 %v736, %v958
        %v963 = vmul.f32 %v959, %v959
        %v964 = vmul.f32 %v960, %v960
        %v965 = vmul.f32 %v961, %v961
        %v966 = vmul.f32 %v962, %v962
        %v967 = vsel %vm639, %v963, 0.0
        %v968 = vsel %vm639, %v964, 0.0
        %v969 = vadd.f32 %v967, %v968
        %v970 = vsel %vm639, %v965, 0.0
        %v971 = vadd.f32 %v969, %v970
        %v972 = vsel %vm639, %v966, 0.0
        %v973 = vadd.f32 %v971, %v972
        %v974 = vrot.slane %v973, 4
        %v975 = vadd.f32 %v973, %v974
        %v976 = vrot.slane %v975, 2
        %v977 = vadd.f32 %v975, %v976
        %v978 = vrot.slane %v977, 1
        %v979 = vadd.f32 %v977, %v978
        %v980 = vsub.f32 %v786, %v958
        %v981 = vsub.f32 %v789, %v958
        %v982 = vsub.f32 %v794, %v958
        %v983 = vsub.f32 %v797, %v958
        %v984 = vmul.f32 %v980, %v980
        %v985 = vmul.f32 %v981, %v981
        %v986 = vmul.f32 %v982, %v982
        %v987 = vmul.f32 %v983, %v983
        %v988 = vsel %vm639, %v984, 0.0
        %v989 = vsel %vm639, %v985, 0.0
        %v990 = vadd.f32 %v988, %v989
        %v991 = vsel %vm639, %v986, 0.0
        %v992 = vadd.f32 %v990, %v991
        %v993 = vsel %vm639, %v987, 0.0
        %v994 = vadd.f32 %v992, %v993
        %v995 = vrot.slane %v994, 4
        %v996 = vadd.f32 %v994, %v995
        %v997 = vrot.slane %v996, 2
        %v998 = vadd.f32 %v996, %v997
        %v999 = vrot.slane %v998, 1
        %v1000 = vadd.f32 %v998, %v999
        %v1001 = vadd.f32 %v979, %v1000
        %v1002 = vsub.f32 %v849, %v958
        %v1003 = vsub.f32 %v852, %v958
        %v1004 = vsub.f32 %v857, %v958
        %v1005 = vsub.f32 %v860, %v958
        %v1006 = vmul.f32 %v1002, %v1002
        %v1007 = vmul.f32 %v1003, %v1003
        %v1008 = vmul.f32 %v1004, %v1004
        %v1009 = vmul.f32 %v1005, %v1005
        %v1010 = vsel %vm639, %v1006, 0.0
        %v1011 = vsel %vm639, %v1007, 0.0
        %v1012 = vadd.f32 %v1010, %v1011
        %v1013 = vsel %vm639, %v1008, 0.0
        %v1014 = vadd.f32 %v1012, %v1013
        %v1015 = vsel %vm639, %v1009, 0.0
        %v1016 = vadd.f32 %v1014, %v1015
        %v1017 = vrot.slane %v1016, 4
        %v1018 = vadd.f32 %v1016, %v1017
        %v1019 = vrot.slane %v1018, 2
        %v1020 = vadd.f32 %v1018, %v1019
        %v1021 = vrot.slane %v1020, 1
        %v1022 = vadd.f32 %v1020, %v1021
        %v1023 = vadd.f32 %v1001, %v1022
        %v1024 = vsub.f32 %v919, %v958
        %v1025 = vsub.f32 %v922, %v958
        %v1026 = vsub.f32 %v927, %v958
        %v1027 = vsub.f32 %v930, %v958
        %v1028 = vmul.f32 %v1024, %v1024
        %v1029 = vmul.f32 %v1025, %v1025
        %v1030 = vmul.f32 %v1026, %v1026
        %v1031 = vmul.f32 %v1027, %v1027
        %v1032 = vsel %vm639, %v1028, 0.0
        %v1033 = vsel %vm639, %v1029, 0.0
        %v1034 = vadd.f32 %v1032, %v1033
        %v1035 = vsel %vm639, %v1030, 0.0
        %v1036 = vadd.f32 %v1034, %v1035
        %v1037 = vsel %vm639, %v1031, 0.0
        %v1038 = vadd.f32 %v1036, %v1037
        %v1039 = vrot.slane %v1038, 4
        %v1040 = vadd.f32 %v1038, %v1039
        %v1041 = vrot.slane %v1040, 2
        %v1042 = vadd.f32 %v1040, %v1041
        %v1043 = vrot.slane %v1042, 1
        %v1044 = vadd.f32 %v1042, %v1043
        %v1045 = vadd.f32 %v1023, %v1044
        %vm1046 = vcmask 1040384
        %v1047 = vsel %vm1046, %v957, %v1045
        %vm1048 = vcmask 58368
        %1049 = vst.msk [vmem:[%s510] sm:$0x3] %vm1048, %v1047
        %1054 = vrot.lane.b32.xlu0 %v786, 8
        %v1055 = vpop.permute.xlu0 %1054
        %1056 = vrot.lane.b32.xlu0 %v789, 8
        %v1057 = vpop.permute.xlu0 %1056
        %1058 = vrot.lane.b32.xlu0 %v794, 8
        %v1059 = vpop.permute.xlu0 %1058
        %1060 = vrot.lane.b32.xlu0 %v797, 8
        %v1061 = vpop.permute.xlu0 %1060
        %1070 = vrot.lane.b32.xlu0 %v849, 16
        %v1071 = vpop.permute.xlu0 %1070
        %1072 = vrot.lane.b32.xlu0 %v852, 16
        %v1073 = vpop.permute.xlu0 %1072
        %1074 = vrot.lane.b32.xlu0 %v857, 16
        %v1075 = vpop.permute.xlu0 %1074
        %1076 = vrot.lane.b32.xlu0 %v860, 16
        %v1077 = vpop.permute.xlu0 %1076
        %1086 = vrot.lane.b32.xlu0 %v919, 24
        %v1087 = vpop.permute.xlu0 %1086
        %1088 = vrot.lane.b32.xlu0 %v922, 24
        %v1089 = vpop.permute.xlu0 %1088
        %1090 = vrot.lane.b32.xlu0 %v927, 24
        %v1091 = vpop.permute.xlu0 %1090
        %1092 = vrot.lane.b32.xlu0 %v930, 24
        %v1093 = vpop.permute.xlu0 %1092
        %v1098 = vsel %vm639, %v725, %v1055
        %v1099 = vsel %vm639, %v728, %v1057
        %v1100 = vsel %vm639, %v733, %v1059
        %v1101 = vsel %vm639, %v736, %v1061
        %v1102 = vsel %vm648, %v1098, %v1071
        %v1103 = vsel %vm648, %v1099, %v1073
        %v1104 = vsel %vm648, %v1100, %v1075
        %v1105 = vsel %vm648, %v1101, %v1077
        %v1106 = vsel %vm657, %v1102, %v1087
        %v1107 = vsel %vm657, %v1103, %v1089
        %v1108 = vsel %vm657, %v1104, %v1091
        %v1109 = vsel %vm657, %v1105, %v1093
        %v1110 = vpack.c.bf16 %v1107, %v1106
        %v1111 = vpack.c.bf16 %v1109, %v1108
        %v1114 = vunpack.c.l.b16 %v1110
        %v1115 = vunpack.c.h.b16 %v1110
        %v1116 = vunpack.c.l.b16 %v1111
        %v1117 = vunpack.c.h.b16 %v1111
        %v1118 = vpack.c.b16 %v1114, %v1114
        %v1119 = vpack.c.b16 %v1115, %v1115
        %v1120 = vpack.c.b16 %v1116, %v1116
        %v1121 = vpack.c.b16 %v1117, %v1117
        %vm1126 = vcmask 257024
        %1127 = vst.msk [vmem:[%s503] sm:$0xf] %vm1126, %v1118
        %1128 = vst.msk [vmem:[%s503 + $0x4] sm:$0xf] %vm1126, %v1119
        %1129 = vst.msk [vmem:[%s503 + $0x8] sm:$0xf] %vm1126, %v1120
        %1130 = vst.msk [vmem:[%s503 + $0xc] sm:$0xf] %vm1126, %v1121
        %s1131 = sand.u32 %s243, 1
        %s1132 = scalar_lea.sflag [#allocation4], %s1131
        %s1133 = sand.u32 %s243, 1
        %s1134 = smul.addr %s1133, 16
        %s1135 = scalar_lea.vmem [#allocation15], %s1134
        %s1136 = sand.u32 %s271, 1
        %s1137 = scalar_lea.sflag [#allocation17], %s1136
        %s1138 = sand.u32 %s271, 1
        %s1139 = smul.addr %s1138, 2
        %s1140 = scalar_lea.vmem [#allocation16], %s1139
        // Predicated region
        $region85: #{decoder_block.4} parent=51 // pred_check
          %p1141 = pneg %p253
        $region86: #{decoder_block.4} parent=51 // pred_check_branch
          %1143 = sbr.rel (%p1141) target = $region88
        $region87: #{decoder_block.4} parent=51 // pred_region
          %s1144 = smul.u32 4, %s36
          %s1146 = ssub.s32 256, 256
          %1147 = vsyncadd %s1132, %s1146
          %s1148 = smul.addr %s35, 8
          %s1149 = sadd.s32 %s1144, %s1148
          %s1150 = smul.addr %s1149, 64
          %s1151 = scalar_lea.hbm %s8, %s1150
          %s1152 = sshll.u32 %s1135, 4
          %s1153 = int_to_ptr.vmem [resolvable:$true] %s1152
          %1158 = dma.vmem_to_hbm [thread:$0]  %s1153, 256, %s1151, %s1132, 64, 64, 4
        $region88: #{decoder_block.4} parent=51 // pred_fallthru
          _
        // Predicated region
        $region89: #{decoder_block.4} parent=51 // pred_check
          %p1159 = pneg %p281
        $region90: #{decoder_block.4} parent=51 // pred_check_branch
          %1161 = sbr.rel (%p1159) target = $region92
        $region91: #{decoder_block.4} parent=51 // pred_region
          %s1163 = ssub.s32 32, 32
          %1164 = vsyncadd %s1137, %s1163
          %s1165 = smul.addr %s35, 2
          %s1166 = sadd.s32 %s36, %s1165
          %s1167 = smul.addr %s1166, 32
          %s1168 = scalar_lea.hbm %s9, %s1167
          %s1170 = sshll.u32 %s1140, 4
          %s1171 = int_to_ptr.vmem [resolvable:$true] %s1170
          %1173 = dma.vmem_to_hbm [thread:$0]  %s1171, 32, %s1168, %s1137
        $region92: #{decoder_block.4} parent=51 // pred_fallthru
          _
      $region52: #{decoder_block.4} parent=5 // pred_fallthru
        _
      %p1174 = scmp.le.s32.totalorder 2, %s26
      // Predicated region
      $region93: #{decoder_block.4} parent=5 // pred_check
        %p1175 = pneg %p1174
      $region94: #{decoder_block.4} parent=5 // pred_check_branch
        %1177 = sbr.rel (%p1175) target = $region96
      $region95: #{decoder_block.4} parent=5 // pred_region
        %s1178 = ssub.s32 %s26, 2
        // Predicated region
        $region97: #{decoder_block.4} parent=95 // pred_check
          %p1179 = pneg %p259
        $region98: #{decoder_block.4} parent=95 // pred_check_branch
          %1181 = sbr.rel (%p1179) target = $region100
        $region99: #{decoder_block.4} parent=95 // pred_region
          %s1182 = sand.u32 %s244, 1
          %s1183 = scalar_lea.sflag [#allocation4], %s1182
          %s1184 = sand.u32 %s244, 1
          %s1185 = smul.addr %s1184, 16
          %s1186 = scalar_lea.vmem [#allocation15], %s1185
          %1187 = dma.done %s1183, 256
        $region100: #{decoder_block.4} parent=95 // pred_fallthru
          _
        // Predicated region
        $region101: #{decoder_block.4} parent=95 // pred_check
          %p1188 = pneg %p287
        $region102: #{decoder_block.4} parent=95 // pred_check_branch
          %1190 = sbr.rel (%p1188) target = $region104
        $region103: #{decoder_block.4} parent=95 // pred_region
          %s1191 = sand.u32 %s272, 1
          %s1192 = scalar_lea.sflag [#allocation17], %s1191
          %s1193 = sand.u32 %s272, 1
          %s1194 = smul.addr %s1193, 2
          %s1195 = scalar_lea.vmem [#allocation16], %s1194
          %1196 = dma.done %s1192, 32
        $region104: #{decoder_block.4} parent=95 // pred_fallthru
          _
      $region96: #{decoder_block.4} parent=5 // pred_fallthru
        _
    $region6: #{decoder_block.4} parent=1 // loop_footer
      %s30 = sadd.s32 1, %s26
    $region7: #{decoder_block.4} parent=1 // loop_footer_branch
      %25 = sbr.rel target = $region3
    $region8: #{decoder_block.4} parent=1 // loop_exit
      _
    %1197 = vsyncpa [#allocation3], 1
    %s1198 = scalar_lea.sflag [#allocation3], 1
    %1199 = vsyncpa %s1198, 1
    %1200 = vsyncpa [#allocation6], 1
    %1201 = vsyncpa [#allocation11], 1
    %1202 = vsyncpa [#allocation14], 1
    %1203 = vsyncpa [#allocation4], 1
    %s1204 = scalar_lea.sflag [#allocation4], 1
    %1205 = vsyncpa %s1204, 1
    %1206 = vsyncpa [#allocation17], 1
    %s1207 = scalar_lea.sflag [#allocation17], 1
    %1208 = vsyncpa %s1207, 1

</llo_original>
